<compile_context>
chip_gen: v7x
topology: tpu7x:2x2x1
jax: 0.10.0
libtpu: 0.0.40
codegen_flags: <defaults>
</compile_context>

<pallas_src>
import functools

import jax
import jax.numpy as jnp
import numpy as np
from jax.experimental import pallas as pl
from jax.experimental.pallas import tpu as pltpu

EPS = 1e-5
D_IN, D_H1, D_H2 = 4096, 2048, 512
TN1 = 512  # layer-1 output-feature tile -> grid of 4 steps


# ----------------------------------------------------------------------------
# Helpers
# ----------------------------------------------------------------------------
def _i8_to_bf16(v):
    # int8 -> f32 -> bf16: both converts lower cleanly in Mosaic on all chips.
    return v.astype(jnp.float32).astype(jnp.bfloat16)


def _bn_relu(y, gamma, beta, eps):
    # Training-mode BatchNorm1d (biased batch variance) + ReLU.
    mean = jnp.mean(y, axis=0, keepdims=True)
    var = jnp.mean((y - mean) * (y - mean), axis=0, keepdims=True)
    z = (y - mean) * jax.lax.rsqrt(var + eps) * gamma + beta
    return jnp.maximum(z, 0.0)


def _vmem_limit_bytes(B):
    """Right-sized scoped-VMEM request derived from actual buffers."""
    buf = 0
    buf += 2 * B * D_IN * 4                  # x block (double-buffered)
    buf += 2 * D_IN * TN1                    # w1 int8 tile (double-buffered)
    buf += 2 * TN1 * D_H2                    # w2 int8 row-block (double-buffered)
    buf += (D_IN * TN1 + TN1 * D_H2) * 6     # worst-case dequant temps (f32+bf16)
    buf += 16 * max(TN1, D_H2) * 4           # scale/gamma/beta/w3/b3 rows
    buf += 2 * (B * D_H2 + B) * 4            # out + emb blocks
    buf += B * D_H2 * 4                      # layer-2 accumulator scratch
    buf = int(buf * 1.25)                    # headroom
    return max(16 << 20, min(buf, 40 << 20))


# ----------------------------------------------------------------------------
# Fused kernel
# ----------------------------------------------------------------------------
def _mlp_fused_kernel(x_ref, w1_ref, s1_ref, g1_ref, bt1_ref,
                      w2_ref, s2_ref, g2_ref, bt2_ref,
                      w3_ref, b3_ref,
                      out_ref, emb_ref,
                      acc2_ref, *, eps):
    j = pl.program_id(0)

    @pl.when(j == 0)
    def _():
        acc2_ref[...] = jnp.zeros_like(acc2_ref)

    # ---- Layer 1, feature tile j: Linear(int8 w, per-col scale) + BN + ReLU.
    #      (Linear bias omitted: cancelled exactly by BN's mean subtraction.)
    y1 = jnp.dot(x_ref[...].astype(jnp.bfloat16), _i8_to_bf16(w1_ref[...]),
                 preferred_element_type=jnp.float32) * s1_ref[...]
    h1 = _bn_relu(y1, g1_ref[...], bt1_ref[...], eps)

    # ---- Layer-2 partial reduction for this tile (w2 rows j*TN1 : (j+1)*TN1).
    acc2_ref[...] += jnp.dot(h1.astype(jnp.bfloat16), _i8_to_bf16(w2_ref[...]),
                             preferred_element_type=jnp.float32)

    # ---- Last step: finish layer 2 (scale + BN + ReLU) and layer 3.
    @pl.when(j == pl.num_programs(0) - 1)
    def _():
        y2 = acc2_ref[...] * s2_ref[...]
        h2 = _bn_relu(y2, g2_ref[...], bt2_ref[...], eps)
        emb_ref[...] = h2
        # Layer 3 as a VPU/XLU lane reduction (avoids a 1-wide MXU dot).
        out_ref[...] = (jnp.sum(h2 * w3_ref[...], axis=-1, keepdims=True)
                        + b3_ref[...])


# ----------------------------------------------------------------------------
# Wrapper
# ----------------------------------------------------------------------------
def mlp_pallas(x, p):
    B = x.shape[0]
    n_tiles = D_H1 // TN1
    kernel = functools.partial(_mlp_fused_kernel, eps=EPS)
    out, emb = pl.pallas_call(
        kernel,
        out_shape=(
            jax.ShapeDtypeStruct((B, 1), jnp.float32),      # logits
            jax.ShapeDtypeStruct((B, D_H2), jnp.float32),   # embedding (h2)
        ),
        grid=(n_tiles,),
        in_specs=[
            pl.BlockSpec((B, D_IN), lambda j: (0, 0)),      # x (resident)
            pl.BlockSpec((D_IN, TN1), lambda j: (0, j)),    # w1 int8 tile (stream)
            pl.BlockSpec((1, TN1), lambda j: (0, j)),       # s1 tile
            pl.BlockSpec((1, TN1), lambda j: (0, j)),       # gamma1 tile
            pl.BlockSpec((1, TN1), lambda j: (0, j)),       # beta1 tile
            pl.BlockSpec((TN1, D_H2), lambda j: (j, 0)),    # w2 int8 row-block (stream)
            pl.BlockSpec((1, D_H2), lambda j: (0, 0)),      # s2
            pl.BlockSpec((1, D_H2), lambda j: (0, 0)),      # gamma2
            pl.BlockSpec((1, D_H2), lambda j: (0, 0)),      # beta2
            pl.BlockSpec((1, D_H2), lambda j: (0, 0)),      # w3 (row layout)
            pl.BlockSpec((1, 1), lambda j: (0, 0)),         # b3
        ],
        out_specs=(
            pl.BlockSpec((B, 1), lambda j: (0, 0)),
            pl.BlockSpec((B, D_H2), lambda j: (0, 0)),
        ),
        scratch_shapes=[pltpu.VMEM((B, D_H2), jnp.float32)],  # layer-2 accumulator
        compiler_params=pltpu.CompilerParams(
            # Accumulator carries across the grid axis -> must be sequential.
            dimension_semantics=("arbitrary",),
            vmem_limit_bytes=_vmem_limit_bytes(B),
        ),
    )(x, p["w1"], p["s1"], p["g1"], p["beta1"],
      p["w2"], p["s2"], p["g2"], p["beta2"],
      p["w3"], p["b3"])
    return out, emb


def mlp_forward(x, params, last=False, freeze=False):
    out, emb = mlp_pallas(x, params)
    if freeze:
        # torch.no_grad() over layer1/layer2 == stop-gradient on the embedding;
        # recompute the logits in f32 from the detached embedding.
        emb = jax.lax.stop_gradient(emb)
        out = jnp.sum(emb * params["w3"], axis=-1, keepdims=True) + params["b3"]
    if last:
        return out, emb
    return out


# ----------------------------------------------------------------------------
# Deterministic parameter init (torch-Linear-like uniform(-1/sqrt(fan_in), .))
# w1/w2 are quantized to int8 with per-output-column scales (HBM-bandwidth
# optimization); b1/b2 exist only so the reference can prove BN cancels them.
# ----------------------------------------------------------------------------
def _quantize_per_col(w):
    amax = jnp.max(jnp.abs(w), axis=0, keepdims=True)
    scale = jnp.maximum(amax, 1e-8) / 127.0
    w_i8 = jnp.clip(jnp.round(w / scale), -127, 127).astype(jnp.int8)
    return w_i8, scale


def init_params(key):
    def lin(key, fan_in, fan_out):
        kw, kb = jax.random.split(key)
        bound = 1.0 / np.sqrt(fan_in)
        w = jax.random.uniform(kw, (fan_in, fan_out), jnp.float32, -bound, bound)
        b = jax.random.uniform(kb, (1, fan_out), jnp.float32, -bound, bound)
        return w, b

    k1, k2, k3 = jax.random.split(key, 3)
    w1f, b1 = lin(k1, D_IN, D_H1)
    w2f, b2 = lin(k2, D_H1, D_H2)
    w3f, b3 = lin(k3, D_H2, 1)
    w1, s1 = _quantize_per_col(w1f)
    w2, s2 = _quantize_per_col(w2f)
    return {
        "w1": w1, "s1": s1, "b1": b1,
        "g1": jnp.ones((1, D_H1), jnp.float32),
        "beta1": jnp.zeros((1, D_H1), jnp.float32),
        "w2": w2, "s2": s2, "b2": b2,
        "g2": jnp.ones((1, D_H2), jnp.float32),
        "beta2": jnp.zeros((1, D_H2), jnp.float32),
        "w3": w3f.reshape(1, D_H2),   # row layout for the lane reduction
        "b3": b3,
    }


# ----------------------------------------------------------------------------
# Pure-JAX reference (same int8 weights / bf16 matmuls; keeps the Linear
# biases b1/b2, which training-mode BN cancels exactly).
# ----------------------------------------------------------------------------
def mlp_reference(x, p):
    def lbr(h, w_i8, s, b, g, beta):
        y = jnp.dot(h.astype(jnp.bfloat16),
                    w_i8.astype(jnp.float32).astype(jnp.bfloat16),
                    preferred_element_type=jnp.float32) * s + b
        mean = jnp.mean(y, axis=0, keepdims=True)
        var = jnp.mean((y - mean) ** 2, axis=0, keepdims=True)
        return jnp.maximum((y - mean) * jax.lax.rsqrt(var + EPS) * g + beta, 0.0)

    h1 = lbr(x, p["w1"], p["s1"], p["b1"], p["g1"], p["beta1"])
    h2 = lbr(h1, p["w2"], p["s2"], p["b2"], p["g2"], p["beta2"])
    out = jnp.sum(h2 * p["w3"], axis=-1, keepdims=True) + p["b3"]
    return out, h2


# ----------------------------------------------------------------------------
if __name__ == "__main__":
    key = jax.random.PRNGKey(0)
    kx, kp = jax.random.split(key)

    B = 8  # BatchNorm1d training mode needs batch > 1; 8 = one sublane tile
    x = jax.random.normal(kx, (B, D_IN), jnp.float32)
    params = init_params(kp)

    out, emb = mlp_forward(x, params, last=True)
    out = jax.block_until_ready(out)
    emb = jax.block_until_ready(emb)

    assert out.shape == (B, 1) and emb.shape == (B, D_H2)

    ref_out, ref_emb = mlp_reference(x, params)
    np.testing.assert_allclose(np.asarray(emb), np.asarray(ref_emb),
                               rtol=1e-2, atol=1e-2)
    np.testing.assert_allclose(np.asarray(out), np.asarray(ref_out),
                               rtol=1e-2, atol=1e-2)
    print("KERNEL_OK")
</pallas_src>

<mosaic_0001>
module attributes {stable_mosaic.version = 11 : i64} {
  func.func @_mlp_fused_kernel(%arg0: i32, %arg1: memref<8x4096xf32, #tpu.memory_space<vmem>>, %arg2: memref<4096x512xi8, #tpu.memory_space<vmem>>, %arg3: memref<1x512xf32, #tpu.memory_space<vmem>>, %arg4: memref<1x512xf32, #tpu.memory_space<vmem>>, %arg5: memref<1x512xf32, #tpu.memory_space<vmem>>, %arg6: memref<512x512xi8, #tpu.memory_space<vmem>>, %arg7: memref<1x512xf32, #tpu.memory_space<vmem>>, %arg8: memref<1x512xf32, #tpu.memory_space<vmem>>, %arg9: memref<1x512xf32, #tpu.memory_space<vmem>>, %arg10: memref<1x512xf32, #tpu.memory_space<vmem>>, %arg11: memref<1x1xf32, #tpu.memory_space<vmem>>, %arg12: memref<8x1xf32, #tpu.memory_space<vmem>>, %arg13: memref<8x512xf32, #tpu.memory_space<vmem>>, %arg14: memref<8x512xf32, #tpu.memory_space<vmem>>) attributes {dimension_semantics = [#tpu.dimension_semantics<arbitrary>], iteration_bounds = array<i64: 4>, scalar_prefetch = 0 : i64, scratch_operands = 1 : i64, tpu.core_type = #tpu.core_type<tc>, window_params = [{pipeline_mode = #tpu.pipeline_mode<synchronous>, transform_indices = @transform_0, window_bounds = array<i64: 8, 4096>}, {transform_indices = @transform_1, window_bounds = array<i64: 4096, 512>}, {transform_indices = @transform_2, window_bounds = array<i64: 1, 512>}, {transform_indices = @transform_3, window_bounds = array<i64: 1, 512>}, {transform_indices = @transform_4, window_bounds = array<i64: 1, 512>}, {transform_indices = @transform_5, window_bounds = array<i64: 512, 512>}, {pipeline_mode = #tpu.pipeline_mode<synchronous>, transform_indices = @transform_6, window_bounds = array<i64: 1, 512>}, {pipeline_mode = #tpu.pipeline_mode<synchronous>, transform_indices = @transform_7, window_bounds = array<i64: 1, 512>}, {pipeline_mode = #tpu.pipeline_mode<synchronous>, transform_indices = @transform_8, window_bounds = array<i64: 1, 512>}, {pipeline_mode = #tpu.pipeline_mode<synchronous>, transform_indices = @transform_9, window_bounds = array<i64: 1, 512>}, {pipeline_mode = #tpu.pipeline_mode<synchronous>, transform_indices = @transform_10, window_bounds = array<i64: 1, 1>}, {pipeline_mode = #tpu.pipeline_mode<synchronous>, transform_indices = @transform_11, window_bounds = array<i64: 8, 1>}, {pipeline_mode = #tpu.pipeline_mode<synchronous>, transform_indices = @transform_12, window_bounds = array<i64: 8, 512>}]} {
    %c0_i32 = arith.constant 0 : i32
    %0 = arith.cmpi eq, %arg0, %c0_i32 : i32
    %1 = arith.extui %0 : i1 to i32
    %c0_i32_0 = arith.constant 0 : i32
    %2 = arith.cmpi ne, %1, %c0_i32_0 : i32
    scf.if %2 {
      %cst_24 = arith.constant 0.000000e+00 : f32
      %51 = vector.broadcast %cst_24 : f32 to vector<8x512xf32>
      %c0_25 = arith.constant 0 : index
      %c0_26 = arith.constant 0 : index
      %52 = vector.load %arg14[%c0_25, %c0_26] : memref<8x512xf32, #tpu.memory_space<vmem>>, vector<8x512xf32>
      tpu.vector_store %arg14[%c0_25, %c0_26], %51 {strides = array<i32>} : memref<8x512xf32, #tpu.memory_space<vmem>>, vector<8x512xf32>,
    } else {
    }
    %c0 = arith.constant 0 : index
    %c0_1 = arith.constant 0 : index
    %3 = vector.load %arg1[%c0, %c0_1] : memref<8x4096xf32, #tpu.memory_space<vmem>>, vector<8x4096xf32>
    %4 = arith.truncf %3 : vector<8x4096xf32> to vector<8x4096xbf16>
    %c0_2 = arith.constant 0 : index
    %c0_3 = arith.constant 0 : index
    %5 = vector.load %arg2[%c0_2, %c0_3] : memref<4096x512xi8, #tpu.memory_space<vmem>>, vector<4096x512xi8>
    %6 = arith.sitofp %5 : vector<4096x512xi8> to vector<4096x512xf32>
    %7 = arith.truncf %6 : vector<4096x512xf32> to vector<4096x512xbf16>
    %cst = arith.constant dense<0.000000e+00> : vector<8x512xf32>
    %8 = tpu.matmul %4, %7, %cst {dimension_numbers = #tpu.dot_dimension_numbers<[1], [0], [0], [1], [0, 0, 1, 1], [], []>} : vector<8x4096xbf16>, vector<4096x512xbf16>, vector<8x512xf32> -> vector<8x512xf32>
    %c0_4 = arith.constant 0 : index
    %c0_5 = arith.constant 0 : index
    %9 = vector.load %arg3[%c0_4, %c0_5] : memref<1x512xf32, #tpu.memory_space<vmem>>, vector<1x512xf32>
    %10 = vector.broadcast %9 : vector<1x512xf32> to vector<8x512xf32>
    %11 = arith.mulf %8, %10 : vector<8x512xf32>
    %c0_6 = arith.constant 0 : index
    %c0_7 = arith.constant 0 : index
    %12 = vector.load %arg4[%c0_6, %c0_7] : memref<1x512xf32, #tpu.memory_space<vmem>>, vector<1x512xf32>
    %c0_8 = arith.constant 0 : index
    %c0_9 = arith.constant 0 : index
    %13 = vector.load %arg5[%c0_8, %c0_9] : memref<1x512xf32, #tpu.memory_space<vmem>>, vector<1x512xf32>
    %cst_10 = arith.constant dense<0.000000e+00> : vector<512xf32>
    %14 = vector.multi_reduction <add>, %11, %cst_10 [0] : vector<8x512xf32> to vector<512xf32>
    %15 = vector.shape_cast %14 : vector<512xf32> to vector<1x512xf32>
    %cst_11 = arith.constant 8.000000e+00 : f32
    %16 = vector.broadcast %cst_11 : f32 to vector<1x512xf32>
    %17 = arith.divf %15, %16 : vector<1x512xf32>
    %18 = vector.broadcast %17 : vector<1x512xf32> to vector<8x512xf32>
    %19 = arith.subf %11, %18 : vector<8x512xf32>
    %20 = vector.broadcast %17 : vector<1x512xf32> to vector<8x512xf32>
    %21 = arith.subf %11, %20 : vector<8x512xf32>
    %22 = arith.mulf %19, %21 : vector<8x512xf32>
    %cst_12 = arith.constant dense<0.000000e+00> : vector<512xf32>
    %23 = vector.multi_reduction <add>, %22, %cst_12 [0] : vector<8x512xf32> to vector<512xf32>
    %24 = vector.shape_cast %23 : vector<512xf32> to vector<1x512xf32>
    %cst_13 = arith.constant 8.000000e+00 : f32
    %25 = vector.broadcast %cst_13 : f32 to vector<1x512xf32>
    %26 = arith.divf %24, %25 : vector<1x512xf32>
    %27 = vector.broadcast %17 : vector<1x512xf32> to vector<8x512xf32>
    %28 = arith.subf %11, %27 : vector<8x512xf32>
    %cst_14 = arith.constant 9.99999974E-6 : f32
    %29 = vector.broadcast %cst_14 : f32 to vector<1x512xf32>
    %30 = arith.addf %26, %29 : vector<1x512xf32>
    %31 = math.rsqrt %30 : vector<1x512xf32>
    %32 = vector.broadcast %31 : vector<1x512xf32> to vector<8x512xf32>
    %33 = arith.mulf %28, %32 : vector<8x512xf32>
    %34 = vector.broadcast %12 : vector<1x512xf32> to vector<8x512xf32>
    %35 = arith.mulf %33, %34 : vector<8x512xf32>
    %36 = vector.broadcast %13 : vector<1x512xf32> to vector<8x512xf32>
    %37 = arith.addf %35, %36 : vector<8x512xf32>
    %cst_15 = arith.constant 0.000000e+00 : f32
    %38 = vector.broadcast %cst_15 : f32 to vector<8x512xf32>
    %39 = arith.maximumf %37, %38 : vector<8x512xf32>
    %c0_16 = arith.constant 0 : index
    %c0_17 = arith.constant 0 : index
    %40 = vector.load %arg14[%c0_16, %c0_17] : memref<8x512xf32, #tpu.memory_space<vmem>>, vector<8x512xf32>
    %41 = arith.truncf %39 : vector<8x512xf32> to vector<8x512xbf16>
    %c0_18 = arith.constant 0 : index
    %c0_19 = arith.constant 0 : index
    %42 = vector.load %arg6[%c0_18, %c0_19] : memref<512x512xi8, #tpu.memory_space<vmem>>, vector<512x512xi8>
    %43 = arith.sitofp %42 : vector<512x512xi8> to vector<512x512xf32>
    %44 = arith.truncf %43 : vector<512x512xf32> to vector<512x512xbf16>
    %cst_20 = arith.constant dense<0.000000e+00> : vector<8x512xf32>
    %45 = tpu.matmul %41, %44, %cst_20 {dimension_numbers = #tpu.dot_dimension_numbers<[1], [0], [0], [1], [0, 0, 1, 1], [], []>} : vector<8x512xbf16>, vector<512x512xbf16>, vector<8x512xf32> -> vector<8x512xf32>
    %46 = arith.addf %40, %45 : vector<8x512xf32>
    %c0_21 = arith.constant 0 : index
    %c0_22 = arith.constant 0 : index
    %47 = vector.load %arg14[%c0_21, %c0_22] : memref<8x512xf32, #tpu.memory_space<vmem>>, vector<8x512xf32>
    tpu.vector_store %arg14[%c0_21, %c0_22], %46 {strides = array<i32>} : memref<8x512xf32, #tpu.memory_space<vmem>>, vector<8x512xf32>,
    %c3_i32 = arith.constant 3 : i32
    %48 = arith.cmpi eq, %arg0, %c3_i32 : i32
    %49 = arith.extui %48 : i1 to i32
    %c0_i32_23 = arith.constant 0 : i32
    %50 = arith.cmpi ne, %49, %c0_i32_23 : i32
    scf.if %50 {
      %c0_24 = arith.constant 0 : index
      %c0_25 = arith.constant 0 : index
      %51 = vector.load %arg14[%c0_24, %c0_25] : memref<8x512xf32, #tpu.memory_space<vmem>>, vector<8x512xf32>
      %c0_26 = arith.constant 0 : index
      %c0_27 = arith.constant 0 : index
      %52 = vector.load %arg7[%c0_26, %c0_27] : memref<1x512xf32, #tpu.memory_space<vmem>>, vector<1x512xf32>
      %53 = vector.broadcast %52 : vector<1x512xf32> to vector<8x512xf32>
      %54 = arith.mulf %51, %53 : vector<8x512xf32>
      %c0_28 = arith.constant 0 : index
      %c0_29 = arith.constant 0 : index
      %55 = vector.load %arg8[%c0_28, %c0_29] : memref<1x512xf32, #tpu.memory_space<vmem>>, vector<1x512xf32>
      %c0_30 = arith.constant 0 : index
      %c0_31 = arith.constant 0 : index
      %56 = vector.load %arg9[%c0_30, %c0_31] : memref<1x512xf32, #tpu.memory_space<vmem>>, vector<1x512xf32>
      %cst_32 = arith.constant dense<0.000000e+00> : vector<512xf32>
      %57 = vector.multi_reduction <add>, %54, %cst_32 [0] : vector<8x512xf32> to vector<512xf32>
      %58 = vector.shape_cast %57 : vector<512xf32> to vector<1x512xf32>
      %cst_33 = arith.constant 8.000000e+00 : f32
      %59 = vector.broadcast %cst_33 : f32 to vector<1x512xf32>
      %60 = arith.divf %58, %59 : vector<1x512xf32>
      %61 = vector.broadcast %60 : vector<1x512xf32> to vector<8x512xf32>
      %62 = arith.subf %54, %61 : vector<8x512xf32>
      %63 = vector.broadcast %60 : vector<1x512xf32> to vector<8x512xf32>
      %64 = arith.subf %54, %63 : vector<8x512xf32>
      %65 = arith.mulf %62, %64 : vector<8x512xf32>
      %cst_34 = arith.constant dense<0.000000e+00> : vector<512xf32>
      %66 = vector.multi_reduction <add>, %65, %cst_34 [0] : vector<8x512xf32> to vector<512xf32>
      %67 = vector.shape_cast %66 : vector<512xf32> to vector<1x512xf32>
      %cst_35 = arith.constant 8.000000e+00 : f32
      %68 = vector.broadcast %cst_35 : f32 to vector<1x512xf32>
      %69 = arith.divf %67, %68 : vector<1x512xf32>
      %70 = vector.broadcast %60 : vector<1x512xf32> to vector<8x512xf32>
      %71 = arith.subf %54, %70 : vector<8x512xf32>
      %cst_36 = arith.constant 9.99999974E-6 : f32
      %72 = vector.broadcast %cst_36 : f32 to vector<1x512xf32>
      %73 = arith.addf %69, %72 : vector<1x512xf32>
      %74 = math.rsqrt %73 : vector<1x512xf32>
      %75 = vector.broadcast %74 : vector<1x512xf32> to vector<8x512xf32>
      %76 = arith.mulf %71, %75 : vector<8x512xf32>
      %77 = vector.broadcast %55 : vector<1x512xf32> to vector<8x512xf32>
      %78 = arith.mulf %76, %77 : vector<8x512xf32>
      %79 = vector.broadcast %56 : vector<1x512xf32> to vector<8x512xf32>
      %80 = arith.addf %78, %79 : vector<8x512xf32>
      %cst_37 = arith.constant 0.000000e+00 : f32
      %81 = vector.broadcast %cst_37 : f32 to vector<8x512xf32>
      %82 = arith.maximumf %80, %81 : vector<8x512xf32>
      %c0_38 = arith.constant 0 : index
      %c0_39 = arith.constant 0 : index
      %83 = vector.load %arg13[%c0_38, %c0_39] : memref<8x512xf32, #tpu.memory_space<vmem>>, vector<8x512xf32>
      tpu.vector_store %arg13[%c0_38, %c0_39], %82 {strides = array<i32>} : memref<8x512xf32, #tpu.memory_space<vmem>>, vector<8x512xf32>,
      %c0_40 = arith.constant 0 : index
      %c0_41 = arith.constant 0 : index
      %84 = vector.load %arg10[%c0_40, %c0_41] : memref<1x512xf32, #tpu.memory_space<vmem>>, vector<1x512xf32>
      %85 = vector.broadcast %84 : vector<1x512xf32> to vector<8x512xf32>
      %86 = arith.mulf %82, %85 : vector<8x512xf32>
      %cst_42 = arith.constant dense<0.000000e+00> : vector<8xf32>
      %87 = vector.multi_reduction <add>, %86, %cst_42 [1] : vector<8x512xf32> to vector<8xf32>
      %88 = vector.shape_cast %87 : vector<8xf32> to vector<8x1xf32>
      %c0_43 = arith.constant 0 : index
      %c0_44 = arith.constant 0 : index
      %89 = vector.load %arg11[%c0_43, %c0_44] : memref<1x1xf32, #tpu.memory_space<vmem>>, vector<1x1xf32>
      %90 = vector.broadcast %89 : vector<1x1xf32> to vector<8x1xf32>
      %91 = arith.addf %88, %90 : vector<8x1xf32>
      %c0_45 = arith.constant 0 : index
      %c0_46 = arith.constant 0 : index
      %92 = vector.load %arg12[%c0_45, %c0_46] : memref<8x1xf32, #tpu.memory_space<vmem>>, vector<8x1xf32>
      tpu.vector_store %arg12[%c0_45, %c0_46], %91 {strides = array<i32>} : memref<8x1xf32, #tpu.memory_space<vmem>>, vector<8x1xf32>,
    } else {
    }
    return
  }
  func.func @transform_0(%arg0: i32) -> (i32, i32) {
    %c0_i32 = arith.constant 0 : i32
    %c0_i32_0 = arith.constant 0 : i32
    %c0_i32_1 = arith.constant 0 : i32
    return %c0_i32, %c0_i32_0 : i32, i32
  }
  func.func @transform_1(%arg0: i32) -> (i32, i32) {
    %c0_i32 = arith.constant 0 : i32
    %c0_i32_0 = arith.constant 0 : i32
    return %c0_i32, %arg0 : i32, i32
  }
  func.func @transform_2(%arg0: i32) -> (i32, i32) {
    %c0_i32 = arith.constant 0 : i32
    %c0_i32_0 = arith.constant 0 : i32
    return %c0_i32, %arg0 : i32, i32
  }
  func.func @transform_3(%arg0: i32) -> (i32, i32) {
    %c0_i32 = arith.constant 0 : i32
    %c0_i32_0 = arith.constant 0 : i32
    return %c0_i32, %arg0 : i32, i32
  }
  func.func @transform_4(%arg0: i32) -> (i32, i32) {
    %c0_i32 = arith.constant 0 : i32
    %c0_i32_0 = arith.constant 0 : i32
    return %c0_i32, %arg0 : i32, i32
  }
  func.func @transform_5(%arg0: i32) -> (i32, i32) {
    %c0_i32 = arith.constant 0 : i32
    %c0_i32_0 = arith.constant 0 : i32
    return %arg0, %c0_i32 : i32, i32
  }
  func.func @transform_6(%arg0: i32) -> (i32, i32) {
    %c0_i32 = arith.constant 0 : i32
    %c0_i32_0 = arith.constant 0 : i32
    %c0_i32_1 = arith.constant 0 : i32
    return %c0_i32, %c0_i32_0 : i32, i32
  }
  func.func @transform_7(%arg0: i32) -> (i32, i32) {
    %c0_i32 = arith.constant 0 : i32
    %c0_i32_0 = arith.constant 0 : i32
    %c0_i32_1 = arith.constant 0 : i32
    return %c0_i32, %c0_i32_0 : i32, i32
  }
  func.func @transform_8(%arg0: i32) -> (i32, i32) {
    %c0_i32 = arith.constant 0 : i32
    %c0_i32_0 = arith.constant 0 : i32
    %c0_i32_1 = arith.constant 0 : i32
    return %c0_i32, %c0_i32_0 : i32, i32
  }
  func.func @transform_9(%arg0: i32) -> (i32, i32) {
    %c0_i32 = arith.constant 0 : i32
    %c0_i32_0 = arith.constant 0 : i32
    %c0_i32_1 = arith.constant 0 : i32
    return %c0_i32, %c0_i32_0 : i32, i32
  }
  func.func @transform_10(%arg0: i32) -> (i32, i32) {
    %c0_i32 = arith.constant 0 : i32
    %c0_i32_0 = arith.constant 0 : i32
    %c0_i32_1 = arith.constant 0 : i32
    return %c0_i32, %c0_i32_0 : i32, i32
  }
  func.func @transform_11(%arg0: i32) -> (i32, i32) {
    %c0_i32 = arith.constant 0 : i32
    %c0_i32_0 = arith.constant 0 : i32
    %c0_i32_1 = arith.constant 0 : i32
    return %c0_i32, %c0_i32_0 : i32, i32
  }
  func.func @transform_12(%arg0: i32) -> (i32, i32) {
    %c0_i32 = arith.constant 0 : i32
    %c0_i32_0 = arith.constant 0 : i32
    %c0_i32_1 = arith.constant 0 : i32
    return %c0_i32, %c0_i32_0 : i32, i32
  }
}

</mosaic_0001>

<llo_original>
// kernel: tpu_custom_call.1
$region0: #{tpu_custom_call.1}
  #allocation0 [shape = 'u32[]', space=smem, size = 0x4, offset = 0x4, fixed_abs, tag = 'smem constant byte address 0x4 - core index']
  #allocation1 [shape = 'u32[144,128]{1,0:T(1,128)}', space=vmem, size = 0x12000, scoped, tag = 'internal scratch']
  #allocation2 [shape = 'f32[8,512]{1,0:T(8,128)}', space=vmem, size = 0x4000, scoped, tag = 'scratch operand']
  #allocation3 [shape = 'f32[1,1]{1,0:T(1,128)S(1)}', space=vmem, size = 0x200, scoped, tag = 'scoped memory for tpu_custom_call.1']
  %s0 = inlined_call_operand.hbm [shape: f32[8,4096], index: 0, kind: input, shape index: {}]
  %s1 = inlined_call_operand.hbm [shape: s8[4096,2048], index: 1, kind: input, shape index: {}]
  %s2 = inlined_call_operand.hbm [shape: f32[1,2048], index: 2, kind: input, shape index: {}]
  %s3 = inlined_call_operand.hbm [shape: f32[1,2048], index: 3, kind: input, shape index: {}]
  %s4 = inlined_call_operand.hbm [shape: f32[1,2048], index: 4, kind: input, shape index: {}]
  %s5 = inlined_call_operand.hbm [shape: s8[2048,512], index: 5, kind: input, shape index: {}]
  %s6 = inlined_call_operand.hbm [shape: f32[1,512], index: 6, kind: input, shape index: {}]
  %s7 = inlined_call_operand.hbm [shape: f32[1,512], index: 7, kind: input, shape index: {}]
  %s8 = inlined_call_operand.hbm [shape: f32[1,512], index: 8, kind: input, shape index: {}]
  %s9 = inlined_call_operand.hbm [shape: f32[1,512], index: 9, kind: input, shape index: {}]
  %s10 = inlined_call_operand.<no memory space> [shape: f32[1,1], index: 10, kind: input, shape index: {}]
  %s11 = inlined_call_operand.vmem [shape: f32[8,1], index: 11, kind: output, shape index: {0}]
  %s12 = inlined_call_operand.hbm [shape: f32[8,512], index: 12, kind: output, shape index: {1}]
  %13 = xla_tuple %s11, %s12
  %s14 = sld [smem:[#allocation0]]
  $region133: #{tpu_custom_call.1} parent=0
    _
  %s16 = ssub.s32 1, %s14
  %s17 = scalar_select 0, %s16, %s14
  %v18 = vstv %s10
  %19 = vst [vmem:[#allocation3] sm:$0x1] %v18
  $region1: #{tpu_custom_call.1} parent=0
    #allocation4 [shape = 'u8[131072]{0}', space=vmem, size = 0x20000, scoped, tag = 'input window, operand 0, single buffered']
    #allocation5 [shape = 's32[2]{0}', space=sflag, size = 0x8, scoped, tag = 'scoped memory for tpu_custom_call.1']
    #allocation6 [shape = 's32[2]{0}', space=sflag, size = 0x8, scoped, tag = 'scoped memory for tpu_custom_call.1']
    #allocation7 [shape = 'u8[4194304]{0}', space=vmem, size = 0x400000, scoped, tag = 'input window, operand 1']
    #allocation8 [shape = 's32[2]{0}', space=sflag, size = 0x8, scoped, tag = 'scoped memory for tpu_custom_call.1']
    #allocation9 [shape = 'u8[4096]{0}', space=vmem, size = 0x1000, scoped, tag = 'input window, operand 2']
    #allocation10 [shape = 'u8[4096]{0}', space=vmem, size = 0x1000, scoped, tag = 'input window, operand 3']
    #allocation11 [shape = 's32[2]{0}', space=sflag, size = 0x8, scoped, tag = 'scoped memory for tpu_custom_call.1']
    #allocation12 [shape = 'u8[4096]{0}', space=vmem, size = 0x1000, scoped, tag = 'input window, operand 4']
    #allocation13 [shape = 'u8[524288]{0}', space=vmem, size = 0x80000, scoped, tag = 'input window, operand 5']
    #allocation14 [shape = 's32[2]{0}', space=sflag, size = 0x8, scoped, tag = 'scoped memory for tpu_custom_call.1']
    #allocation15 [shape = 'u8[2048]{0}', space=vmem, size = 0x800, scoped, tag = 'input window, operand 6, single buffered']
    #allocation16 [shape = 'u8[2048]{0}', space=vmem, size = 0x800, scoped, tag = 'input window, operand 7, single buffered']
    #allocation17 [shape = 's32[1]{0}', space=sflag, size = 0x4, scoped, tag = 'scoped memory for tpu_custom_call.1']
    #allocation18 [shape = 'u8[2048]{0}', space=vmem, size = 0x800, scoped, tag = 'input window, operand 8, single buffered']
    #allocation19 [shape = 'u8[2048]{0}', space=vmem, size = 0x800, scoped, tag = 'input window, operand 9, single buffered']
    #allocation20 [shape = 's32[1]{0}', space=sflag, size = 0x4, scoped, tag = 'scoped memory for tpu_custom_call.1']
    #allocation21 [shape = 'u8[16384]{0}', space=vmem, size = 0x4000, scoped, tag = 'output window, operand 1, single buffered']
    %20 = vsyncpa [#allocation5], 0
    %21 = vsyncpa [#allocation8], 0
    %s22 = scalar_lea.sflag [#allocation8], 1
    %23 = vsyncpa %s22, 0
    %24 = vsyncpa [#allocation11], 0
    %s25 = scalar_lea.sflag [#allocation11], 1
    %26 = vsyncpa %s25, 0
    %27 = vsyncpa [#allocation14], 0
    %s28 = scalar_lea.sflag [#allocation14], 1
    %29 = vsyncpa %s28, 0
    %30 = vsyncpa [#allocation17], 0
    %31 = vsyncpa [#allocation20], 0
    %32 = vsyncpa [#allocation6], 0
    loop: start=0, step=1, limit=6
    $region2: #{tpu_custom_call.1} parent=1 // loop_pre_header
      _
    $region3: #{tpu_custom_call.1} parent=1 // loop_header
      %s34 = sphi 0, %s38
      %p35 = scmp.ge.s32.totalorder %s34, 6
      %s42 = sphi 0, %s42
      %s44 = sphi 0, %s42
      %s45 = sphi 0, %s44
      %s59 = sphi 0, %s45
      %s65 = sphi 0, %s67
      %s68 = sphi 0, %s65
      %s69 = sphi 0, %s68
      %s85 = sphi 0, %s69
      %s91 = sphi 0, %s93
      %s94 = sphi 0, %s91
      %s95 = sphi 0, %s94
      %s111 = sphi 0, %s95
      %s117 = sphi 0, %s119
      %s120 = sphi 0, %s117
      %s121 = sphi 0, %s120
      %s137 = sphi 0, %s121
      %s143 = sphi 0, %s145
      %s146 = sphi 0, %s143
      %s147 = sphi 0, %s146
      %s163 = sphi 0, %s147
      %s169 = sphi 0, %s171
      %s172 = sphi 0, %s169
      %s173 = sphi 0, %s172
      %s189 = sphi 0, %s173
      %s193 = sphi 0, %s193
      %s195 = sphi 0, %s193
      %s196 = sphi 0, %s195
      %s210 = sphi 0, %s196
      %s214 = sphi 0, %s214
      %s216 = sphi 0, %s214
      %s217 = sphi 0, %s216
      %s231 = sphi 0, %s217
      %s235 = sphi 0, %s235
      %s237 = sphi 0, %s235
      %s238 = sphi 0, %s237
      %s252 = sphi 0, %s238
      %s256 = sphi 0, %s256
      %s258 = sphi 0, %s256
      %s259 = sphi 0, %s258
      %s273 = sphi 0, %s259
      %s277 = sphi 0, %s277
      %s279 = sphi 0, %s277
      %s280 = sphi 0, %s279
      %s294 = sphi 0, %s280
      %s298 = sphi 0, %s298
      %s300 = sphi 0, %s298
      %s301 = sphi 0, %s300
      %s315 = sphi 0, %s301
      %s319 = sphi 0, %s319
      %s321 = sphi 0, %s319
      %s322 = sphi 0, %s321
      %s336 = sphi 0, %s322
    $region4: #{tpu_custom_call.1} parent=1 // loop_header_branch
      %37 = sbr.rel (%p35) target = $region8
    $region5: #{tpu_custom_call.1} parent=1 // loop_body
      %s39 = ssub.s32 %s34, 1
      %s40 = ssub.s32 %s34, 2
      %s41 = sadd.s32 %s34, 1
      %s43 = sadd.s32 %s42, 1
      %p46 = scmp.eq.s32.totalorder %s34, 3
      %p47 = scmp.ne.s32.totalorder %s42, %s44
      %p48 = scmp.eq.s32.totalorder %s34, 0
      %p49 = por %p47, %p48
      %p50 = scmp.ne.s32.totalorder %s42, %s44
      %p51 = scmp.eq.s32.totalorder %s39, 3
      %p52 = por %p50, %p51
      %p53 = scmp.ne.s32.totalorder %s44, %s45
      %p54 = scmp.eq.s32.totalorder %s39, 0
      %p55 = por %p53, %p54
      %p56 = scmp.ne.s32.totalorder %s44, %s45
      %p57 = scmp.eq.s32.totalorder %s40, 3
      %p58 = por %p56, %p57
      %p60 = scmp.ne.s32.totalorder %s45, %s59
      %p61 = scmp.eq.s32.totalorder %s40, 0
      %p62 = por %p60, %p61
      %s63 = ssub.s32 %s34, %s41
      %p64 = scmp.eq.s32.totalorder %s63, 0
      %s66 = sadd.s32 %s65, 1
      %s67 = scalar_select %p64, %s65, %s66
      %p70 = pneg %p64
      %p71 = scmp.eq.s32.totalorder %s34, 3
      %p72 = por %p70, %p71
      %p73 = scmp.ne.s32.totalorder %s65, %s68
      %p74 = scmp.eq.s32.totalorder %s34, 0
      %p75 = por %p73, %p74
      %p76 = scmp.ne.s32.totalorder %s65, %s68
      %p77 = scmp.eq.s32.totalorder %s39, 3
      %p78 = por %p76, %p77
      %p79 = scmp.ne.s32.totalorder %s68, %s69
      %p80 = scmp.eq.s32.totalorder %s39, 0
      %p81 = por %p79, %p80
      %p82 = scmp.ne.s32.totalorder %s68, %s69
      %p83 = scmp.eq.s32.totalorder %s40, 3
      %p84 = por %p82, %p83
      %p86 = scmp.ne.s32.totalorder %s69, %s85
      %p87 = scmp.eq.s32.totalorder %s40, 0
      %p88 = por %p86, %p87
      %s89 = ssub.s32 %s34, %s41
      %p90 = scmp.eq.s32.totalorder %s89, 0
      %s92 = sadd.s32 %s91, 1
      %s93 = scalar_select %p90, %s91, %s92
      %p96 = pneg %p90
      %p97 = scmp.eq.s32.totalorder %s34, 3
      %p98 = por %p96, %p97
      %p99 = scmp.ne.s32.totalorder %s91, %s94
      %p100 = scmp.eq.s32.totalorder %s34, 0
      %p101 = por %p99, %p100
      %p102 = scmp.ne.s32.totalorder %s91, %s94
      %p103 = scmp.eq.s32.totalorder %s39, 3
      %p104 = por %p102, %p103
      %p105 = scmp.ne.s32.totalorder %s94, %s95
      %p106 = scmp.eq.s32.totalorder %s39, 0
      %p107 = por %p105, %p106
      %p108 = scmp.ne.s32.totalorder %s94, %s95
      %p109 = scmp.eq.s32.totalorder %s40, 3
      %p110 = por %p108, %p109
      %p112 = scmp.ne.s32.totalorder %s95, %s111
      %p113 = scmp.eq.s32.totalorder %s40, 0
      %p114 = por %p112, %p113
      %s115 = ssub.s32 %s34, %s41
      %p116 = scmp.eq.s32.totalorder %s115, 0
      %s118 = sadd.s32 %s117, 1
      %s119 = scalar_select %p116, %s117, %s118
      %p122 = pneg %p116
      %p123 = scmp.eq.s32.totalorder %s34, 3
      %p124 = por %p122, %p123
      %p125 = scmp.ne.s32.totalorder %s117, %s120
      %p126 = scmp.eq.s32.totalorder %s34, 0
      %p127 = por %p125, %p126
      %p128 = scmp.ne.s32.totalorder %s117, %s120
      %p129 = scmp.eq.s32.totalorder %s39, 3
      %p130 = por %p128, %p129
      %p131 = scmp.ne.s32.totalorder %s120, %s121
      %p132 = scmp.eq.s32.totalorder %s39, 0
      %p133 = por %p131, %p132
      %p134 = scmp.ne.s32.totalorder %s120, %s121
      %p135 = scmp.eq.s32.totalorder %s40, 3
      %p136 = por %p134, %p135
      %p138 = scmp.ne.s32.totalorder %s121, %s137
      %p139 = scmp.eq.s32.totalorder %s40, 0
      %p140 = por %p138, %p139
      %s141 = ssub.s32 %s34, %s41
      %p142 = scmp.eq.s32.totalorder %s141, 0
      %s144 = sadd.s32 %s143, 1
      %s145 = scalar_select %p142, %s143, %s144
      %p148 = pneg %p142
      %p149 = scmp.eq.s32.totalorder %s34, 3
      %p150 = por %p148, %p149
      %p151 = scmp.ne.s32.totalorder %s143, %s146
      %p152 = scmp.eq.s32.totalorder %s34, 0
      %p153 = por %p151, %p152
      %p154 = scmp.ne.s32.totalorder %s143, %s146
      %p155 = scmp.eq.s32.totalorder %s39, 3
      %p156 = por %p154, %p155
      %p157 = scmp.ne.s32.totalorder %s146, %s147
      %p158 = scmp.eq.s32.totalorder %s39, 0
      %p159 = por %p157, %p158
      %p160 = scmp.ne.s32.totalorder %s146, %s147
      %p161 = scmp.eq.s32.totalorder %s40, 3
      %p162 = por %p160, %p161
      %p164 = scmp.ne.s32.totalorder %s147, %s163
      %p165 = scmp.eq.s32.totalorder %s40, 0
      %p166 = por %p164, %p165
      %s167 = ssub.s32 %s34, %s41
      %p168 = scmp.eq.s32.totalorder %s167, 0
      %s170 = sadd.s32 %s169, 1
      %s171 = scalar_select %p168, %s169, %s170
      %p174 = pneg %p168
      %p175 = scmp.eq.s32.totalorder %s34, 3
      %p176 = por %p174, %p175
      %p177 = scmp.ne.s32.totalorder %s169, %s172
      %p178 = scmp.eq.s32.totalorder %s34, 0
      %p179 = por %p177, %p178
      %p180 = scmp.ne.s32.totalorder %s169, %s172
      %p181 = scmp.eq.s32.totalorder %s39, 3
      %p182 = por %p180, %p181
      %p183 = scmp.ne.s32.totalorder %s172, %s173
      %p184 = scmp.eq.s32.totalorder %s39, 0
      %p185 = por %p183, %p184
      %p186 = scmp.ne.s32.totalorder %s172, %s173
      %p187 = scmp.eq.s32.totalorder %s40, 3
      %p188 = por %p186, %p187
      %p190 = scmp.ne.s32.totalorder %s173, %s189
      %p191 = scmp.eq.s32.totalorder %s40, 0
      %p192 = por %p190, %p191
      %s194 = sadd.s32 %s193, 1
      %p197 = scmp.eq.s32.totalorder %s34, 3
      %p198 = scmp.ne.s32.totalorder %s193, %s195
      %p199 = scmp.eq.s32.totalorder %s34, 0
      %p200 = por %p198, %p199
      %p201 = scmp.ne.s32.totalorder %s193, %s195
      %p202 = scmp.eq.s32.totalorder %s39, 3
      %p203 = por %p201, %p202
      %p204 = scmp.ne.s32.totalorder %s195, %s196
      %p205 = scmp.eq.s32.totalorder %s39, 0
      %p206 = por %p204, %p205
      %p207 = scmp.ne.s32.totalorder %s195, %s196
      %p208 = scmp.eq.s32.totalorder %s40, 3
      %p209 = por %p207, %p208
      %p211 = scmp.ne.s32.totalorder %s196, %s210
      %p212 = scmp.eq.s32.totalorder %s40, 0
      %p213 = por %p211, %p212
      %s215 = sadd.s32 %s214, 1
      %p218 = scmp.eq.s32.totalorder %s34, 3
      %p219 = scmp.ne.s32.totalorder %s214, %s216
      %p220 = scmp.eq.s32.totalorder %s34, 0
      %p221 = por %p219, %p220
      %p222 = scmp.ne.s32.totalorder %s214, %s216
      %p223 = scmp.eq.s32.totalorder %s39, 3
      %p224 = por %p222, %p223
      %p225 = scmp.ne.s32.totalorder %s216, %s217
      %p226 = scmp.eq.s32.totalorder %s39, 0
      %p227 = por %p225, %p226
      %p228 = scmp.ne.s32.totalorder %s216, %s217
      %p229 = scmp.eq.s32.totalorder %s40, 3
      %p230 = por %p228, %p229
      %p232 = scmp.ne.s32.totalorder %s217, %s231
      %p233 = scmp.eq.s32.totalorder %s40, 0
      %p234 = por %p232, %p233
      %s236 = sadd.s32 %s235, 1
      %p239 = scmp.eq.s32.totalorder %s34, 3
      %p240 = scmp.ne.s32.totalorder %s235, %s237
      %p241 = scmp.eq.s32.totalorder %s34, 0
      %p242 = por %p240, %p241
      %p243 = scmp.ne.s32.totalorder %s235, %s237
      %p244 = scmp.eq.s32.totalorder %s39, 3
      %p245 = por %p243, %p244
      %p246 = scmp.ne.s32.totalorder %s237, %s238
      %p247 = scmp.eq.s32.totalorder %s39, 0
      %p248 = por %p246, %p247
      %p249 = scmp.ne.s32.totalorder %s237, %s238
      %p250 = scmp.eq.s32.totalorder %s40, 3
      %p251 = por %p249, %p250
      %p253 = scmp.ne.s32.totalorder %s238, %s252
      %p254 = scmp.eq.s32.totalorder %s40, 0
      %p255 = por %p253, %p254
      %s257 = sadd.s32 %s256, 1
      %p260 = scmp.eq.s32.totalorder %s34, 3
      %p261 = scmp.ne.s32.totalorder %s256, %s258
      %p262 = scmp.eq.s32.totalorder %s34, 0
      %p263 = por %p261, %p262
      %p264 = scmp.ne.s32.totalorder %s256, %s258
      %p265 = scmp.eq.s32.totalorder %s39, 3
      %p266 = por %p264, %p265
      %p267 = scmp.ne.s32.totalorder %s258, %s259
      %p268 = scmp.eq.s32.totalorder %s39, 0
      %p269 = por %p267, %p268
      %p270 = scmp.ne.s32.totalorder %s258, %s259
      %p271 = scmp.eq.s32.totalorder %s40, 3
      %p272 = por %p270, %p271
      %p274 = scmp.ne.s32.totalorder %s259, %s273
      %p275 = scmp.eq.s32.totalorder %s40, 0
      %p276 = por %p274, %p275
      %s278 = sadd.s32 %s277, 1
      %p281 = scmp.eq.s32.totalorder %s34, 3
      %p282 = scmp.ne.s32.totalorder %s277, %s279
      %p283 = scmp.eq.s32.totalorder %s34, 0
      %p284 = por %p282, %p283
      %p285 = scmp.ne.s32.totalorder %s277, %s279
      %p286 = scmp.eq.s32.totalorder %s39, 3
      %p287 = por %p285, %p286
      %p288 = scmp.ne.s32.totalorder %s279, %s280
      %p289 = scmp.eq.s32.totalorder %s39, 0
      %p290 = por %p288, %p289
      %p291 = scmp.ne.s32.totalorder %s279, %s280
      %p292 = scmp.eq.s32.totalorder %s40, 3
      %p293 = por %p291, %p292
      %p295 = scmp.ne.s32.totalorder %s280, %s294
      %p296 = scmp.eq.s32.totalorder %s40, 0
      %p297 = por %p295, %p296
      %s299 = sadd.s32 %s298, 1
      %p302 = scmp.eq.s32.totalorder %s34, 3
      %p303 = scmp.ne.s32.totalorder %s298, %s300
      %p304 = scmp.eq.s32.totalorder %s34, 0
      %p305 = por %p303, %p304
      %p306 = scmp.ne.s32.totalorder %s298, %s300
      %p307 = scmp.eq.s32.totalorder %s39, 3
      %p308 = por %p306, %p307
      %p309 = scmp.ne.s32.totalorder %s300, %s301
      %p310 = scmp.eq.s32.totalorder %s39, 0
      %p311 = por %p309, %p310
      %p312 = scmp.ne.s32.totalorder %s300, %s301
      %p313 = scmp.eq.s32.totalorder %s40, 3
      %p314 = por %p312, %p313
      %p316 = scmp.ne.s32.totalorder %s301, %s315
      %p317 = scmp.eq.s32.totalorder %s40, 0
      %p318 = por %p316, %p317
      %s320 = sadd.s32 %s319, 1
      %p323 = scmp.eq.s32.totalorder %s34, 3
      %p324 = scmp.ne.s32.totalorder %s319, %s321
      %p325 = scmp.eq.s32.totalorder %s34, 0
      %p326 = por %p324, %p325
      %p327 = scmp.ne.s32.totalorder %s319, %s321
      %p328 = scmp.eq.s32.totalorder %s39, 3
      %p329 = por %p327, %p328
      %p330 = scmp.ne.s32.totalorder %s321, %s322
      %p331 = scmp.eq.s32.totalorder %s39, 0
      %p332 = por %p330, %p331
      %p333 = scmp.ne.s32.totalorder %s321, %s322
      %p334 = scmp.eq.s32.totalorder %s40, 3
      %p335 = por %p333, %p334
      %p337 = scmp.ne.s32.totalorder %s322, %s336
      %p338 = scmp.eq.s32.totalorder %s40, 0
      %p339 = por %p337, %p338
      %p340 = scmp.le.s32.totalorder 1, %s34
      %p341 = scmp.lt.s32.totalorder %s34, 5
      %p342 = pnand %p340, %p341
      %p343 = pneg %p342
      // Predicated region
      $region9: #{tpu_custom_call.1} parent=5 // pred_check
        _
      $region10: #{tpu_custom_call.1} parent=5 // pred_check_branch
        %345 = sbr.rel (%p342) target = $region12
      $region11: #{tpu_custom_call.1} parent=5 // pred_region
        %s346 = ssub.s32 %s34, 1
        // Predicated region
        $region13: #{tpu_custom_call.1} parent=11 // pred_check
          %p347 = pneg %p55
        $region14: #{tpu_custom_call.1} parent=11 // pred_check_branch
          %349 = sbr.rel (%p347) target = $region16
        $region15: #{tpu_custom_call.1} parent=11 // pred_region
          %s351 = ssub.s32 4096, 4096
          %352 = vsyncadd [#allocation5], %s351
          %s354 = sshll.u32 [#allocation4], 4
          %s355 = int_to_ptr.vmem [resolvable:$true] %s354
          %357 = dma.hbm_to_vmem [thread:$0]  %s0, 4096, %s355, [#allocation5]
        $region16: #{tpu_custom_call.1} parent=11 // pred_fallthru
          _
        // Predicated region
        $region17: #{tpu_custom_call.1} parent=11 // pred_check
          %p358 = pneg %p206
        $region18: #{tpu_custom_call.1} parent=11 // pred_check_branch
          %360 = sbr.rel (%p358) target = $region20
        $region19: #{tpu_custom_call.1} parent=11 // pred_region
          %s362 = ssub.s32 64, 64
          %363 = vsyncadd [#allocation14], %s362
          %s365 = sshll.u32 [#allocation15], 4
          %s366 = int_to_ptr.vmem [resolvable:$true] %s365
          %368 = dma.hbm_to_vmem [thread:$0]  %s6, 64, %s366, [#allocation14]
        $region20: #{tpu_custom_call.1} parent=11 // pred_fallthru
          _
        // Predicated region
        $region21: #{tpu_custom_call.1} parent=11 // pred_check
          %p369 = pneg %p227
        $region22: #{tpu_custom_call.1} parent=11 // pred_check_branch
          %371 = sbr.rel (%p369) target = $region24
        $region23: #{tpu_custom_call.1} parent=11 // pred_region
          %s373 = ssub.s32 64, 64
          %374 = vsyncadd [#allocation17], %s373
          %s376 = sshll.u32 [#allocation16], 4
          %s377 = int_to_ptr.vmem [resolvable:$true] %s376
          %379 = dma.hbm_to_vmem [thread:$0]  %s7, 64, %s377, [#allocation17]
        $region24: #{tpu_custom_call.1} parent=11 // pred_fallthru
          _
        // Predicated region
        $region25: #{tpu_custom_call.1} parent=11 // pred_check
          %p380 = pneg %p248
        $region26: #{tpu_custom_call.1} parent=11 // pred_check_branch
          %382 = sbr.rel (%p380) target = $region28
        $region27: #{tpu_custom_call.1} parent=11 // pred_region
          %s384 = ssub.s32 64, 64
          %385 = vsyncadd [#allocation17], %s384
          %s387 = sshll.u32 [#allocation18], 4
          %s388 = int_to_ptr.vmem [resolvable:$true] %s387
          %390 = dma.hbm_to_vmem [thread:$0]  %s8, 64, %s388, [#allocation17]
        $region28: #{tpu_custom_call.1} parent=11 // pred_fallthru
          _
        // Predicated region
        $region29: #{tpu_custom_call.1} parent=11 // pred_check
          %p391 = pneg %p269
        $region30: #{tpu_custom_call.1} parent=11 // pred_check_branch
          %393 = sbr.rel (%p391) target = $region32
        $region31: #{tpu_custom_call.1} parent=11 // pred_region
          %s395 = ssub.s32 64, 64
          %396 = vsyncadd [#allocation20], %s395
          %s398 = sshll.u32 [#allocation19], 4
          %s399 = int_to_ptr.vmem [resolvable:$true] %s398
          %401 = dma.hbm_to_vmem [thread:$0]  %s9, 64, %s399, [#allocation20]
        $region32: #{tpu_custom_call.1} parent=11 // pred_fallthru
          _
        // Predicated region
        $region33: #{tpu_custom_call.1} parent=11 // pred_check
          %p402 = pneg %p290
        $region34: #{tpu_custom_call.1} parent=11 // pred_check_branch
          %404 = sbr.rel (%p402) target = $region36
        $region35: #{tpu_custom_call.1} parent=11 // pred_region
          _
        $region36: #{tpu_custom_call.1} parent=11 // pred_fallthru
          _
      $region12: #{tpu_custom_call.1} parent=5 // pred_fallthru
        _
      %p405 = scmp.lt.s32.totalorder %s34, 4
      // Predicated region
      $region37: #{tpu_custom_call.1} parent=5 // pred_check
        %p406 = pneg %p405
      $region38: #{tpu_custom_call.1} parent=5 // pred_check_branch
        %408 = sbr.rel (%p406) target = $region40
      $region39: #{tpu_custom_call.1} parent=5 // pred_region
        // Predicated region
        $region41: #{tpu_custom_call.1} parent=39 // pred_check
          %p409 = pneg %p75
        $region42: #{tpu_custom_call.1} parent=39 // pred_check_branch
          %411 = sbr.rel (%p409) target = $region44
        $region43: #{tpu_custom_call.1} parent=39 // pred_region
          %s412 = sand.u32 %s34, 1
          %s413 = scalar_lea.sflag [#allocation8], %s412
          %s414 = sand.u32 %s65, 1
          %s415 = smul.addr %s414, 4096
          %s416 = scalar_lea.vmem [#allocation7], %s415
          %s417 = smul.u32 4, %s34
          %s419 = ssub.s32 65536, 65536
          %420 = vsyncadd %s413, %s419
          %s421 = smul.addr %s417, 128
          %s422 = scalar_lea.hbm %s1, %s421
          %s423 = sshll.u32 %s416, 4
          %s424 = int_to_ptr.vmem [resolvable:$true] %s423
          %429 = dma.hbm_to_vmem [thread:$0]  %s422, 65536, %s424, %s413, 2048, 512, 32
        $region44: #{tpu_custom_call.1} parent=39 // pred_fallthru
          _
        // Predicated region
        $region45: #{tpu_custom_call.1} parent=39 // pred_check
          %p430 = pneg %p101
        $region46: #{tpu_custom_call.1} parent=39 // pred_check_branch
          %432 = sbr.rel (%p430) target = $region48
        $region47: #{tpu_custom_call.1} parent=39 // pred_region
          %s433 = sand.u32 %s34, 1
          %s434 = scalar_lea.sflag [#allocation8], %s433
          %s435 = sand.u32 %s91, 1
          %s436 = smul.addr %s435, 4
          %s437 = scalar_lea.vmem [#allocation9], %s436
          %s438 = smul.u32 4, %s34
          %s440 = ssub.s32 64, 64
          %441 = vsyncadd %s434, %s440
          %s442 = smul.addr %s438, 16
          %s443 = scalar_lea.hbm %s2, %s442
          %s445 = sshll.u32 %s437, 4
          %s446 = int_to_ptr.vmem [resolvable:$true] %s445
          %448 = dma.hbm_to_vmem [thread:$0]  %s443, 64, %s446, %s434
        $region48: #{tpu_custom_call.1} parent=39 // pred_fallthru
          _
        // Predicated region
        $region49: #{tpu_custom_call.1} parent=39 // pred_check
          %p449 = pneg %p127
        $region50: #{tpu_custom_call.1} parent=39 // pred_check_branch
          %451 = sbr.rel (%p449) target = $region52
        $region51: #{tpu_custom_call.1} parent=39 // pred_region
          %s452 = sand.u32 %s34, 1
          %s453 = scalar_lea.sflag [#allocation11], %s452
          %s454 = sand.u32 %s117, 1
          %s455 = smul.addr %s454, 4
          %s456 = scalar_lea.vmem [#allocation10], %s455
          %s457 = smul.u32 4, %s34
          %s459 = ssub.s32 64, 64
          %460 = vsyncadd %s453, %s459
          %s461 = smul.addr %s457, 16
          %s462 = scalar_lea.hbm %s3, %s461
          %s464 = sshll.u32 %s456, 4
          %s465 = int_to_ptr.vmem [resolvable:$true] %s464
          %467 = dma.hbm_to_vmem [thread:$0]  %s462, 64, %s465, %s453
        $region52: #{tpu_custom_call.1} parent=39 // pred_fallthru
          _
        // Predicated region
        $region53: #{tpu_custom_call.1} parent=39 // pred_check
          %p468 = pneg %p153
        $region54: #{tpu_custom_call.1} parent=39 // pred_check_branch
          %470 = sbr.rel (%p468) target = $region56
        $region55: #{tpu_custom_call.1} parent=39 // pred_region
          %s471 = sand.u32 %s34, 1
          %s472 = scalar_lea.sflag [#allocation11], %s471
          %s473 = sand.u32 %s143, 1
          %s474 = smul.addr %s473, 4
          %s475 = scalar_lea.vmem [#allocation12], %s474
          %s476 = smul.u32 4, %s34
          %s478 = ssub.s32 64, 64
          %479 = vsyncadd %s472, %s478
          %s480 = smul.addr %s476, 16
          %s481 = scalar_lea.hbm %s4, %s480
          %s483 = sshll.u32 %s475, 4
          %s484 = int_to_ptr.vmem [resolvable:$true] %s483
          %486 = dma.hbm_to_vmem [thread:$0]  %s481, 64, %s484, %s472
        $region56: #{tpu_custom_call.1} parent=39 // pred_fallthru
          _
        // Predicated region
        $region57: #{tpu_custom_call.1} parent=39 // pred_check
          %p487 = pneg %p179
        $region58: #{tpu_custom_call.1} parent=39 // pred_check_branch
          %489 = sbr.rel (%p487) target = $region60
        $region59: #{tpu_custom_call.1} parent=39 // pred_region
          %s490 = sand.u32 %s34, 1
          %s491 = scalar_lea.sflag [#allocation14], %s490
          %s492 = sand.u32 %s169, 1
          %s493 = smul.addr %s492, 512
          %s494 = scalar_lea.vmem [#allocation13], %s493
          %s495 = smul.u32 16, %s34
          %s497 = ssub.s32 8192, 8192
          %498 = vsyncadd %s491, %s497
          %s499 = smul.addr %s495, 4
          %s500 = smul.addr %s499, 128
          %s501 = scalar_lea.hbm %s5, %s500
          %s502 = sshll.u32 %s494, 4
          %s503 = int_to_ptr.vmem [resolvable:$true] %s502
          %508 = dma.hbm_to_vmem [thread:$0]  %s501, 8192, %s503, %s491, 512, 512, 32
        $region60: #{tpu_custom_call.1} parent=39 // pred_fallthru
          _
      $region40: #{tpu_custom_call.1} parent=5 // pred_fallthru
        _
      %p509 = scmp.le.s32.totalorder 1, %s34
      %p510 = scmp.lt.s32.totalorder %s34, 5
      %p511 = pnand %p509, %p510
      %p512 = pneg %p511
      // Predicated region
      $region61: #{tpu_custom_call.1} parent=5 // pred_check
        _
      $region62: #{tpu_custom_call.1} parent=5 // pred_check_branch
        %514 = sbr.rel (%p511) target = $region64
      $region63: #{tpu_custom_call.1} parent=5 // pred_region
        %s515 = ssub.s32 %s34, 1
        // Predicated region
        $region65: #{tpu_custom_call.1} parent=63 // pred_check
          %p516 = pneg %p55
        $region66: #{tpu_custom_call.1} parent=63 // pred_check_branch
          %518 = sbr.rel (%p516) target = $region68
        $region67: #{tpu_custom_call.1} parent=63 // pred_region
          %519 = dma.done [#allocation5], 4096
        $region68: #{tpu_custom_call.1} parent=63 // pred_fallthru
          _
        %s520 = sand.u32 %s39, 1
        %s521 = scalar_lea.sflag [#allocation8], %s520
        %s522 = sand.u32 %s68, 1
        %s523 = smul.addr %s522, 4096
        %s524 = scalar_lea.vmem [#allocation7], %s523
        // Predicated region
        $region69: #{tpu_custom_call.1} parent=63 // pred_check
          %p525 = pneg %p81
        $region70: #{tpu_custom_call.1} parent=63 // pred_check_branch
          %527 = sbr.rel (%p525) target = $region72
        $region71: #{tpu_custom_call.1} parent=63 // pred_region
          %528 = dma.done %s521, 65536
        $region72: #{tpu_custom_call.1} parent=63 // pred_fallthru
          _
        %s529 = sand.u32 %s39, 1
        %s530 = scalar_lea.sflag [#allocation8], %s529
        %s531 = sand.u32 %s94, 1
        %s532 = smul.addr %s531, 4
        %s533 = scalar_lea.vmem [#allocation9], %s532
        // Predicated region
        $region73: #{tpu_custom_call.1} parent=63 // pred_check
          %p534 = pneg %p107
        $region74: #{tpu_custom_call.1} parent=63 // pred_check_branch
          %536 = sbr.rel (%p534) target = $region76
        $region75: #{tpu_custom_call.1} parent=63 // pred_region
          %537 = dma.done %s530, 64
        $region76: #{tpu_custom_call.1} parent=63 // pred_fallthru
          _
        %s538 = sand.u32 %s39, 1
        %s539 = scalar_lea.sflag [#allocation11], %s538
        %s540 = sand.u32 %s120, 1
        %s541 = smul.addr %s540, 4
        %s542 = scalar_lea.vmem [#allocation10], %s541
        // Predicated region
        $region77: #{tpu_custom_call.1} parent=63 // pred_check
          %p543 = pneg %p133
        $region78: #{tpu_custom_call.1} parent=63 // pred_check_branch
          %545 = sbr.rel (%p543) target = $region80
        $region79: #{tpu_custom_call.1} parent=63 // pred_region
          %546 = dma.done %s539, 64
        $region80: #{tpu_custom_call.1} parent=63 // pred_fallthru
          _
        %s547 = sand.u32 %s39, 1
        %s548 = scalar_lea.sflag [#allocation11], %s547
        %s549 = sand.u32 %s146, 1
        %s550 = smul.addr %s549, 4
        %s551 = scalar_lea.vmem [#allocation12], %s550
        // Predicated region
        $region81: #{tpu_custom_call.1} parent=63 // pred_check
          %p552 = pneg %p159
        $region82: #{tpu_custom_call.1} parent=63 // pred_check_branch
          %554 = sbr.rel (%p552) target = $region84
        $region83: #{tpu_custom_call.1} parent=63 // pred_region
          %555 = dma.done %s548, 64
        $region84: #{tpu_custom_call.1} parent=63 // pred_fallthru
          _
        %s556 = sand.u32 %s39, 1
        %s557 = scalar_lea.sflag [#allocation14], %s556
        %s558 = sand.u32 %s172, 1
        %s559 = smul.addr %s558, 512
        %s560 = scalar_lea.vmem [#allocation13], %s559
        // Predicated region
        $region85: #{tpu_custom_call.1} parent=63 // pred_check
          %p561 = pneg %p185
        $region86: #{tpu_custom_call.1} parent=63 // pred_check_branch
          %563 = sbr.rel (%p561) target = $region88
        $region87: #{tpu_custom_call.1} parent=63 // pred_region
          %564 = dma.done %s557, 8192
        $region88: #{tpu_custom_call.1} parent=63 // pred_fallthru
          _
        // Predicated region
        $region89: #{tpu_custom_call.1} parent=63 // pred_check
          %p565 = pneg %p206
        $region90: #{tpu_custom_call.1} parent=63 // pred_check_branch
          %567 = sbr.rel (%p565) target = $region92
        $region91: #{tpu_custom_call.1} parent=63 // pred_region
          %568 = dma.done [#allocation14], 64
        $region92: #{tpu_custom_call.1} parent=63 // pred_fallthru
          _
        // Predicated region
        $region93: #{tpu_custom_call.1} parent=63 // pred_check
          %p569 = pneg %p227
        $region94: #{tpu_custom_call.1} parent=63 // pred_check_branch
          %571 = sbr.rel (%p569) target = $region96
        $region95: #{tpu_custom_call.1} parent=63 // pred_region
          %572 = dma.done [#allocation17], 64
        $region96: #{tpu_custom_call.1} parent=63 // pred_fallthru
          _
        // Predicated region
        $region97: #{tpu_custom_call.1} parent=63 // pred_check
          %p573 = pneg %p248
        $region98: #{tpu_custom_call.1} parent=63 // pred_check_branch
          %575 = sbr.rel (%p573) target = $region100
        $region99: #{tpu_custom_call.1} parent=63 // pred_region
          %576 = dma.done [#allocation17], 64
        $region100: #{tpu_custom_call.1} parent=63 // pred_fallthru
          _
        // Predicated region
        $region101: #{tpu_custom_call.1} parent=63 // pred_check
          %p577 = pneg %p269
        $region102: #{tpu_custom_call.1} parent=63 // pred_check_branch
          %579 = sbr.rel (%p577) target = $region104
        $region103: #{tpu_custom_call.1} parent=63 // pred_region
          %580 = dma.done [#allocation20], 64
        $region104: #{tpu_custom_call.1} parent=63 // pred_fallthru
          _
        %p581 = pneg %p55
        %p582 = pneg %p52
        %s583 = sand.u32 %s39, 1
        %s584 = scalar_lea.sflag [#allocation8], %s583
        %s585 = sand.u32 %s68, 1
        %s586 = smul.addr %s585, 4096
        %s587 = scalar_lea.vmem [#allocation7], %s586
        %p588 = pneg %p81
        %p589 = pneg %p78
        %s590 = sand.u32 %s39, 1
        %s591 = scalar_lea.sflag [#allocation8], %s590
        %s592 = sand.u32 %s94, 1
        %s593 = smul.addr %s592, 4
        %s594 = scalar_lea.vmem [#allocation9], %s593
        %p595 = pneg %p107
        %p596 = pneg %p104
        %s597 = sand.u32 %s39, 1
        %s598 = scalar_lea.sflag [#allocation11], %s597
        %s599 = sand.u32 %s120, 1
        %s600 = smul.addr %s599, 4
        %s601 = scalar_lea.vmem [#allocation10], %s600
        %p602 = pneg %p133
        %p603 = pneg %p130
        %s604 = sand.u32 %s39, 1
        %s605 = scalar_lea.sflag [#allocation11], %s604
        %s606 = sand.u32 %s146, 1
        %s607 = smul.addr %s606, 4
        %s608 = scalar_lea.vmem [#allocation12], %s607
        %p609 = pneg %p159
        %p610 = pneg %p156
        %s611 = sand.u32 %s39, 1
        %s612 = scalar_lea.sflag [#allocation14], %s611
        %s613 = sand.u32 %s172, 1
        %s614 = smul.addr %s613, 512
        %s615 = scalar_lea.vmem [#allocation13], %s614
        %p616 = pneg %p185
        %p617 = pneg %p182
        %p618 = pneg %p206
        %p619 = pneg %p203
        %p620 = pneg %p227
        %p621 = pneg %p224
        %p622 = pneg %p248
        %p623 = pneg %p245
        %p624 = pneg %p269
        %p625 = pneg %p266
        %p626 = pneg %p290
        %p627 = pneg %p287
        %p628 = pneg %p311
        %p629 = pneg %p308
        %p630 = pneg %p332
        %p631 = pneg %p329
        %s632 = smul.u32 4, %s39
        %s633 = smul.u32 4, %s39
        %s634 = smul.u32 4, %s39
        %s635 = smul.u32 4, %s39
        %s636 = smul.u32 16, %s39
        %p637 = scmp.eq.s32.totalorder %s39, 0
        // Predicated region
        $region105: #{tpu_custom_call.1} parent=63 // pred_check
          %p638 = pneg %p637
        $region106: #{tpu_custom_call.1} parent=63 // pred_check_branch
          %640 = sbr.rel (%p638) target = $region108
        $region107: #{tpu_custom_call.1} parent=63 // pred_region
          %641 = vst [vmem:[#allocation2] sm:$0xff] 0.0
          %642 = vst [vmem:[#allocation2 + $0x8] sm:$0xff] 0.0
          %643 = vst [vmem:[#allocation2 + $0x10] sm:$0xff] 0.0
          %644 = vst [vmem:[#allocation2 + $0x18] sm:$0xff] 0.0
        $region108: #{tpu_custom_call.1} parent=63 // pred_fallthru
          _
        %v645 = vld [vmem:[#allocation4] sm:$0xff]
        %v646 = vld [vmem:[#allocation4 + $0x8] sm:$0xff]
        %v647 = vld [vmem:[#allocation4 + $0x10] sm:$0xff]
        %v648 = vld [vmem:[#allocation4 + $0x18] sm:$0xff]
        %v649 = vld [vmem:[#allocation4 + $0x20] sm:$0xff]
        %v650 = vld [vmem:[#allocation4 + $0x28] sm:$0xff]
        %v651 = vld [vmem:[#allocation4 + $0x30] sm:$0xff]
        %v652 = vld [vmem:[#allocation4 + $0x38] sm:$0xff]
        %v653 = vld [vmem:[#allocation4 + $0x40] sm:$0xff]
        %v654 = vld [vmem:[#allocation4 + $0x48] sm:$0xff]
        %v655 = vld [vmem:[#allocation4 + $0x50] sm:$0xff]
        %v656 = vld [vmem:[#allocation4 + $0x58] sm:$0xff]
        %v657 = vld [vmem:[#allocation4 + $0x60] sm:$0xff]
        %v658 = vld [vmem:[#allocation4 + $0x68] sm:$0xff]
        %v659 = vld [vmem:[#allocation4 + $0x70] sm:$0xff]
        %v660 = vld [vmem:[#allocation4 + $0x78] sm:$0xff]
        %v661 = vld [vmem:[#allocation4 + $0x80] sm:$0xff]
        %v662 = vld [vmem:[#allocation4 + $0x88] sm:$0xff]
        %v663 = vld [vmem:[#allocation4 + $0x90] sm:$0xff]
        %v664 = vld [vmem:[#allocation4 + $0x98] sm:$0xff]
        %v665 = vld [vmem:[#allocation4 + $0xa0] sm:$0xff]
        %v666 = vld [vmem:[#allocation4 + $0xa8] sm:$0xff]
        %v667 = vld [vmem:[#allocation4 + $0xb0] sm:$0xff]
        %v668 = vld [vmem:[#allocation4 + $0xb8] sm:$0xff]
        %v669 = vld [vmem:[#allocation4 + $0xc0] sm:$0xff]
        %v670 = vld [vmem:[#allocation4 + $0xc8] sm:$0xff]
        %v671 = vld [vmem:[#allocation4 + $0xd0] sm:$0xff]
        %v672 = vld [vmem:[#allocation4 + $0xd8] sm:$0xff]
        %v673 = vld [vmem:[#allocation4 + $0xe0] sm:$0xff]
        %v674 = vld [vmem:[#allocation4 + $0xe8] sm:$0xff]
        %v675 = vld [vmem:[#allocation4 + $0xf0] sm:$0xff]
        %v676 = vld [vmem:[#allocation4 + $0xf8] sm:$0xff]
        %v677 = vpack.c.bf16 %v645, %v645
        %v678 = vpack.c.bf16 %v646, %v646
        %v679 = vpack.c.bf16 %v647, %v647
        %v680 = vpack.c.bf16 %v648, %v648
        %v681 = vpack.c.bf16 %v649, %v649
        %v682 = vpack.c.bf16 %v650, %v650
        %v683 = vpack.c.bf16 %v651, %v651
        %v684 = vpack.c.bf16 %v652, %v652
        %v685 = vpack.c.bf16 %v653, %v653
        %v686 = vpack.c.bf16 %v654, %v654
        %v687 = vpack.c.bf16 %v655, %v655
        %v688 = vpack.c.bf16 %v656, %v656
        %v689 = vpack.c.bf16 %v657, %v657
        %v690 = vpack.c.bf16 %v658, %v658
        %v691 = vpack.c.bf16 %v659, %v659
        %v692 = vpack.c.bf16 %v660, %v660
        %v693 = vpack.c.bf16 %v661, %v661
        %v694 = vpack.c.bf16 %v662, %v662
        %v695 = vpack.c.bf16 %v663, %v663
        %v696 = vpack.c.bf16 %v664, %v664
        %v697 = vpack.c.bf16 %v665, %v665
        %v698 = vpack.c.bf16 %v666, %v666
        %v699 = vpack.c.bf16 %v667, %v667
        %v700 = vpack.c.bf16 %v668, %v668
        %v701 = vpack.c.bf16 %v669, %v669
        %v702 = vpack.c.bf16 %v670, %v670
        %v703 = vpack.c.bf16 %v671, %v671
        %v704 = vpack.c.bf16 %v672, %v672
        %v705 = vpack.c.bf16 %v673, %v673
        %v706 = vpack.c.bf16 %v674, %v674
        %v707 = vpack.c.bf16 %v675, %v675
        %v708 = vpack.c.bf16 %v676, %v676
        %v709 = vld [vmem:[%s524] sm:$0xff]
        %v710 = vld [vmem:[%s524 + $0x8] sm:$0xff]
        %v711 = vld [vmem:[%s524 + $0x10] sm:$0xff]
        %v712 = vld [vmem:[%s524 + $0x18] sm:$0xff]
        %v713 = vld [vmem:[%s524 + $0x20] sm:$0xff]
        %v714 = vld [vmem:[%s524 + $0x28] sm:$0xff]
        %v715 = vld [vmem:[%s524 + $0x30] sm:$0xff]
        %v716 = vld [vmem:[%s524 + $0x38] sm:$0xff]
        %v717 = vld [vmem:[%s524 + $0x40] sm:$0xff]
        %v718 = vld [vmem:[%s524 + $0x48] sm:$0xff]
        %v719 = vld [vmem:[%s524 + $0x50] sm:$0xff]
        %v720 = vld [vmem:[%s524 + $0x58] sm:$0xff]
        %v721 = vld [vmem:[%s524 + $0x60] sm:$0xff]
        %v722 = vld [vmem:[%s524 + $0x68] sm:$0xff]
        %v723 = vld [vmem:[%s524 + $0x70] sm:$0xff]
        %v724 = vld [vmem:[%s524 + $0x78] sm:$0xff]
        %v725 = vld [vmem:[%s524 + $0x80] sm:$0xff]
        %v726 = vld [vmem:[%s524 + $0x88] sm:$0xff]
        %v727 = vld [vmem:[%s524 + $0x90] sm:$0xff]
        %v728 = vld [vmem:[%s524 + $0x98] sm:$0xff]
        %v729 = vld [vmem:[%s524 + $0xa0] sm:$0xff]
        %v730 = vld [vmem:[%s524 + $0xa8] sm:$0xff]
        %v731 = vld [vmem:[%s524 + $0xb0] sm:$0xff]
        %v732 = vld [vmem:[%s524 + $0xb8] sm:$0xff]
        %v733 = vld [vmem:[%s524 + $0xc0] sm:$0xff]
        %v734 = vld [vmem:[%s524 + $0xc8] sm:$0xff]
        %v735 = vld [vmem:[%s524 + $0xd0] sm:$0xff]
        %v736 = vld [vmem:[%s524 + $0xd8] sm:$0xff]
        %v737 = vld [vmem:[%s524 + $0xe0] sm:$0xff]
        %v738 = vld [vmem:[%s524 + $0xe8] sm:$0xff]
        %v739 = vld [vmem:[%s524 + $0xf0] sm:$0xff]
        %v740 = vld [vmem:[%s524 + $0xf8] sm:$0xff]
        %v741 = vld [vmem:[%s524 + $0x100] sm:$0xff]
        %v742 = vld [vmem:[%s524 + $0x108] sm:$0xff]
        %v743 = vld [vmem:[%s524 + $0x110] sm:$0xff]
        %v744 = vld [vmem:[%s524 + $0x118] sm:$0xff]
        %v745 = vld [vmem:[%s524 + $0x120] sm:$0xff]
        %v746 = vld [vmem:[%s524 + $0x128] sm:$0xff]
        %v747 = vld [vmem:[%s524 + $0x130] sm:$0xff]
        %v748 = vld [vmem:[%s524 + $0x138] sm:$0xff]
        %v749 = vld [vmem:[%s524 + $0x140] sm:$0xff]
        %v750 = vld [vmem:[%s524 + $0x148] sm:$0xff]
        %v751 = vld [vmem:[%s524 + $0x150] sm:$0xff]
        %v752 = vld [vmem:[%s524 + $0x158] sm:$0xff]
        %v753 = vld [vmem:[%s524 + $0x160] sm:$0xff]
        %v754 = vld [vmem:[%s524 + $0x168] sm:$0xff]
        %v755 = vld [vmem:[%s524 + $0x170] sm:$0xff]
        %v756 = vld [vmem:[%s524 + $0x178] sm:$0xff]
        %v757 = vld [vmem:[%s524 + $0x180] sm:$0xff]
        %v758 = vld [vmem:[%s524 + $0x188] sm:$0xff]
        %v759 = vld [vmem:[%s524 + $0x190] sm:$0xff]
        %v760 = vld [vmem:[%s524 + $0x198] sm:$0xff]
        %v761 = vld [vmem:[%s524 + $0x1a0] sm:$0xff]
        %v762 = vld [vmem:[%s524 + $0x1a8] sm:$0xff]
        %v763 = vld [vmem:[%s524 + $0x1b0] sm:$0xff]
        %v764 = vld [vmem:[%s524 + $0x1b8] sm:$0xff]
        %v765 = vld [vmem:[%s524 + $0x1c0] sm:$0xff]
        %v766 = vld [vmem:[%s524 + $0x1c8] sm:$0xff]
        %v767 = vld [vmem:[%s524 + $0x1d0] sm:$0xff]
        %v768 = vld [vmem:[%s524 + $0x1d8] sm:$0xff]
        %v769 = vld [vmem:[%s524 + $0x1e0] sm:$0xff]
        %v770 = vld [vmem:[%s524 + $0x1e8] sm:$0xff]
        %v771 = vld [vmem:[%s524 + $0x1f0] sm:$0xff]
        %v772 = vld [vmem:[%s524 + $0x1f8] sm:$0xff]
        %v773 = vld [vmem:[%s524 + $0x200] sm:$0xff]
        %v774 = vld [vmem:[%s524 + $0x208] sm:$0xff]
        %v775 = vld [vmem:[%s524 + $0x210] sm:$0xff]
        %v776 = vld [vmem:[%s524 + $0x218] sm:$0xff]
        %v777 = vld [vmem:[%s524 + $0x220] sm:$0xff]
        %v778 = vld [vmem:[%s524 + $0x228] sm:$0xff]
        %v779 = vld [vmem:[%s524 + $0x230] sm:$0xff]
        %v780 = vld [vmem:[%s524 + $0x238] sm:$0xff]
        %v781 = vld [vmem:[%s524 + $0x240] sm:$0xff]
        %v782 = vld [vmem:[%s524 + $0x248] sm:$0xff]
        %v783 = vld [vmem:[%s524 + $0x250] sm:$0xff]
        %v784 = vld [vmem:[%s524 + $0x258] sm:$0xff]
        %v785 = vld [vmem:[%s524 + $0x260] sm:$0xff]
        %v786 = vld [vmem:[%s524 + $0x268] sm:$0xff]
        %v787 = vld [vmem:[%s524 + $0x270] sm:$0xff]
        %v788 = vld [vmem:[%s524 + $0x278] sm:$0xff]
        %v789 = vld [vmem:[%s524 + $0x280] sm:$0xff]
        %v790 = vld [vmem:[%s524 + $0x288] sm:$0xff]
        %v791 = vld [vmem:[%s524 + $0x290] sm:$0xff]
        %v792 = vld [vmem:[%s524 + $0x298] sm:$0xff]
        %v793 = vld [vmem:[%s524 + $0x2a0] sm:$0xff]
        %v794 = vld [vmem:[%s524 + $0x2a8] sm:$0xff]
        %v795 = vld [vmem:[%s524 + $0x2b0] sm:$0xff]
        %v796 = vld [vmem:[%s524 + $0x2b8] sm:$0xff]
        %v797 = vld [vmem:[%s524 + $0x2c0] sm:$0xff]
        %v798 = vld [vmem:[%s524 + $0x2c8] sm:$0xff]
        %v799 = vld [vmem:[%s524 + $0x2d0] sm:$0xff]
        %v800 = vld [vmem:[%s524 + $0x2d8] sm:$0xff]
        %v801 = vld [vmem:[%s524 + $0x2e0] sm:$0xff]
        %v802 = vld [vmem:[%s524 + $0x2e8] sm:$0xff]
        %v803 = vld [vmem:[%s524 + $0x2f0] sm:$0xff]
        %v804 = vld [vmem:[%s524 + $0x2f8] sm:$0xff]
        %v805 = vld [vmem:[%s524 + $0x300] sm:$0xff]
        %v806 = vld [vmem:[%s524 + $0x308] sm:$0xff]
        %v807 = vld [vmem:[%s524 + $0x310] sm:$0xff]
        %v808 = vld [vmem:[%s524 + $0x318] sm:$0xff]
        %v809 = vld [vmem:[%s524 + $0x320] sm:$0xff]
        %v810 = vld [vmem:[%s524 + $0x328] sm:$0xff]
        %v811 = vld [vmem:[%s524 + $0x330] sm:$0xff]
        %v812 = vld [vmem:[%s524 + $0x338] sm:$0xff]
        %v813 = vld [vmem:[%s524 + $0x340] sm:$0xff]
        %v814 = vld [vmem:[%s524 + $0x348] sm:$0xff]
        %v815 = vld [vmem:[%s524 + $0x350] sm:$0xff]
        %v816 = vld [vmem:[%s524 + $0x358] sm:$0xff]
        %v817 = vld [vmem:[%s524 + $0x360] sm:$0xff]
        %v818 = vld [vmem:[%s524 + $0x368] sm:$0xff]
        %v819 = vld [vmem:[%s524 + $0x370] sm:$0xff]
        %v820 = vld [vmem:[%s524 + $0x378] sm:$0xff]
        %v821 = vld [vmem:[%s524 + $0x380] sm:$0xff]
        %v822 = vld [vmem:[%s524 + $0x388] sm:$0xff]
        %v823 = vld [vmem:[%s524 + $0x390] sm:$0xff]
        %v824 = vld [vmem:[%s524 + $0x398] sm:$0xff]
        %v825 = vld [vmem:[%s524 + $0x3a0] sm:$0xff]
        %v826 = vld [vmem:[%s524 + $0x3a8] sm:$0xff]
        %v827 = vld [vmem:[%s524 + $0x3b0] sm:$0xff]
        %v828 = vld [vmem:[%s524 + $0x3b8] sm:$0xff]
        %v829 = vld [vmem:[%s524 + $0x3c0] sm:$0xff]
        %v830 = vld [vmem:[%s524 + $0x3c8] sm:$0xff]
        %v831 = vld [vmem:[%s524 + $0x3d0] sm:$0xff]
        %v832 = vld [vmem:[%s524 + $0x3d8] sm:$0xff]
        %v833 = vld [vmem:[%s524 + $0x3e0] sm:$0xff]
        %v834 = vld [vmem:[%s524 + $0x3e8] sm:$0xff]
        %v835 = vld [vmem:[%s524 + $0x3f0] sm:$0xff]
        %v836 = vld [vmem:[%s524 + $0x3f8] sm:$0xff]
        %v837 = vld [vmem:[%s524 + $0x400] sm:$0xff]
        %v838 = vld [vmem:[%s524 + $0x408] sm:$0xff]
        %v839 = vld [vmem:[%s524 + $0x410] sm:$0xff]
        %v840 = vld [vmem:[%s524 + $0x418] sm:$0xff]
        %v841 = vld [vmem:[%s524 + $0x420] sm:$0xff]
        %v842 = vld [vmem:[%s524 + $0x428] sm:$0xff]
        %v843 = vld [vmem:[%s524 + $0x430] sm:$0xff]
        %v844 = vld [vmem:[%s524 + $0x438] sm:$0xff]
        %v845 = vld [vmem:[%s524 + $0x440] sm:$0xff]
        %v846 = vld [vmem:[%s524 + $0x448] sm:$0xff]
        %v847 = vld [vmem:[%s524 + $0x450] sm:$0xff]
        %v848 = vld [vmem:[%s524 + $0x458] sm:$0xff]
        %v849 = vld [vmem:[%s524 + $0x460] sm:$0xff]
        %v850 = vld [vmem:[%s524 + $0x468] sm:$0xff]
        %v851 = vld [vmem:[%s524 + $0x470] sm:$0xff]
        %v852 = vld [vmem:[%s524 + $0x478] sm:$0xff]
        %v853 = vld [vmem:[%s524 + $0x480] sm:$0xff]
        %v854 = vld [vmem:[%s524 + $0x488] sm:$0xff]
        %v855 = vld [vmem:[%s524 + $0x490] sm:$0xff]
        %v856 = vld [vmem:[%s524 + $0x498] sm:$0xff]
        %v857 = vld [vmem:[%s524 + $0x4a0] sm:$0xff]
        %v858 = vld [vmem:[%s524 + $0x4a8] sm:$0xff]
        %v859 = vld [vmem:[%s524 + $0x4b0] sm:$0xff]
        %v860 = vld [vmem:[%s524 + $0x4b8] sm:$0xff]
        %v861 = vld [vmem:[%s524 + $0x4c0] sm:$0xff]
        %v862 = vld [vmem:[%s524 + $0x4c8] sm:$0xff]
        %v863 = vld [vmem:[%s524 + $0x4d0] sm:$0xff]
        %v864 = vld [vmem:[%s524 + $0x4d8] sm:$0xff]
        %v865 = vld [vmem:[%s524 + $0x4e0] sm:$0xff]
        %v866 = vld [vmem:[%s524 + $0x4e8] sm:$0xff]
        %v867 = vld [vmem:[%s524 + $0x4f0] sm:$0xff]
        %v868 = vld [vmem:[%s524 + $0x4f8] sm:$0xff]
        %v869 = vld [vmem:[%s524 + $0x500] sm:$0xff]
        %v870 = vld [vmem:[%s524 + $0x508] sm:$0xff]
        %v871 = vld [vmem:[%s524 + $0x510] sm:$0xff]
        %v872 = vld [vmem:[%s524 + $0x518] sm:$0xff]
        %v873 = vld [vmem:[%s524 + $0x520] sm:$0xff]
        %v874 = vld [vmem:[%s524 + $0x528] sm:$0xff]
        %v875 = vld [vmem:[%s524 + $0x530] sm:$0xff]
        %v876 = vld [vmem:[%s524 + $0x538] sm:$0xff]
        %v877 = vld [vmem:[%s524 + $0x540] sm:$0xff]
        %v878 = vld [vmem:[%s524 + $0x548] sm:$0xff]
        %v879 = vld [vmem:[%s524 + $0x550] sm:$0xff]
        %v880 = vld [vmem:[%s524 + $0x558] sm:$0xff]
        %v881 = vld [vmem:[%s524 + $0x560] sm:$0xff]
        %v882 = vld [vmem:[%s524 + $0x568] sm:$0xff]
        %v883 = vld [vmem:[%s524 + $0x570] sm:$0xff]
        %v884 = vld [vmem:[%s524 + $0x578] sm:$0xff]
        %v885 = vld [vmem:[%s524 + $0x580] sm:$0xff]
        %v886 = vld [vmem:[%s524 + $0x588] sm:$0xff]
        %v887 = vld [vmem:[%s524 + $0x590] sm:$0xff]
        %v888 = vld [vmem:[%s524 + $0x598] sm:$0xff]
        %v889 = vld [vmem:[%s524 + $0x5a0] sm:$0xff]
        %v890 = vld [vmem:[%s524 + $0x5a8] sm:$0xff]
        %v891 = vld [vmem:[%s524 + $0x5b0] sm:$0xff]
        %v892 = vld [vmem:[%s524 + $0x5b8] sm:$0xff]
        %v893 = vld [vmem:[%s524 + $0x5c0] sm:$0xff]
        %v894 = vld [vmem:[%s524 + $0x5c8] sm:$0xff]
        %v895 = vld [vmem:[%s524 + $0x5d0] sm:$0xff]
        %v896 = vld [vmem:[%s524 + $0x5d8] sm:$0xff]
        %v897 = vld [vmem:[%s524 + $0x5e0] sm:$0xff]
        %v898 = vld [vmem:[%s524 + $0x5e8] sm:$0xff]
        %v899 = vld [vmem:[%s524 + $0x5f0] sm:$0xff]
        %v900 = vld [vmem:[%s524 + $0x5f8] sm:$0xff]
        %v901 = vld [vmem:[%s524 + $0x600] sm:$0xff]
        %v902 = vld [vmem:[%s524 + $0x608] sm:$0xff]
        %v903 = vld [vmem:[%s524 + $0x610] sm:$0xff]
        %v904 = vld [vmem:[%s524 + $0x618] sm:$0xff]
        %v905 = vld [vmem:[%s524 + $0x620] sm:$0xff]
        %v906 = vld [vmem:[%s524 + $0x628] sm:$0xff]
        %v907 = vld [vmem:[%s524 + $0x630] sm:$0xff]
        %v908 = vld [vmem:[%s524 + $0x638] sm:$0xff]
        %v909 = vld [vmem:[%s524 + $0x640] sm:$0xff]
        %v910 = vld [vmem:[%s524 + $0x648] sm:$0xff]
        %v911 = vld [vmem:[%s524 + $0x650] sm:$0xff]
        %v912 = vld [vmem:[%s524 + $0x658] sm:$0xff]
        %v913 = vld [vmem:[%s524 + $0x660] sm:$0xff]
        %v914 = vld [vmem:[%s524 + $0x668] sm:$0xff]
        %v915 = vld [vmem:[%s524 + $0x670] sm:$0xff]
        %v916 = vld [vmem:[%s524 + $0x678] sm:$0xff]
        %v917 = vld [vmem:[%s524 + $0x680] sm:$0xff]
        %v918 = vld [vmem:[%s524 + $0x688] sm:$0xff]
        %v919 = vld [vmem:[%s524 + $0x690] sm:$0xff]
        %v920 = vld [vmem:[%s524 + $0x698] sm:$0xff]
        %v921 = vld [vmem:[%s524 + $0x6a0] sm:$0xff]
        %v922 = vld [vmem:[%s524 + $0x6a8] sm:$0xff]
        %v923 = vld [vmem:[%s524 + $0x6b0] sm:$0xff]
        %v924 = vld [vmem:[%s524 + $0x6b8] sm:$0xff]
        %v925 = vld [vmem:[%s524 + $0x6c0] sm:$0xff]
        %v926 = vld [vmem:[%s524 + $0x6c8] sm:$0xff]
        %v927 = vld [vmem:[%s524 + $0x6d0] sm:$0xff]
        %v928 = vld [vmem:[%s524 + $0x6d8] sm:$0xff]
        %v929 = vld [vmem:[%s524 + $0x6e0] sm:$0xff]
        %v930 = vld [vmem:[%s524 + $0x6e8] sm:$0xff]
        %v931 = vld [vmem:[%s524 + $0x6f0] sm:$0xff]
        %v932 = vld [vmem:[%s524 + $0x6f8] sm:$0xff]
        %v933 = vld [vmem:[%s524 + $0x700] sm:$0xff]
        %v934 = vld [vmem:[%s524 + $0x708] sm:$0xff]
        %v935 = vld [vmem:[%s524 + $0x710] sm:$0xff]
        %v936 = vld [vmem:[%s524 + $0x718] sm:$0xff]
        %v937 = vld [vmem:[%s524 + $0x720] sm:$0xff]
        %v938 = vld [vmem:[%s524 + $0x728] sm:$0xff]
        %v939 = vld [vmem:[%s524 + $0x730] sm:$0xff]
        %v940 = vld [vmem:[%s524 + $0x738] sm:$0xff]
        %v941 = vld [vmem:[%s524 + $0x740] sm:$0xff]
        %v942 = vld [vmem:[%s524 + $0x748] sm:$0xff]
        %v943 = vld [vmem:[%s524 + $0x750] sm:$0xff]
        %v944 = vld [vmem:[%s524 + $0x758] sm:$0xff]
        %v945 = vld [vmem:[%s524 + $0x760] sm:$0xff]
        %v946 = vld [vmem:[%s524 + $0x768] sm:$0xff]
        %v947 = vld [vmem:[%s524 + $0x770] sm:$0xff]
        %v948 = vld [vmem:[%s524 + $0x778] sm:$0xff]
        %v949 = vld [vmem:[%s524 + $0x780] sm:$0xff]
        %v950 = vld [vmem:[%s524 + $0x788] sm:$0xff]
        %v951 = vld [vmem:[%s524 + $0x790] sm:$0xff]
        %v952 = vld [vmem:[%s524 + $0x798] sm:$0xff]
        %v953 = vld [vmem:[%s524 + $0x7a0] sm:$0xff]
        %v954 = vld [vmem:[%s524 + $0x7a8] sm:$0xff]
        %v955 = vld [vmem:[%s524 + $0x7b0] sm:$0xff]
        %v956 = vld [vmem:[%s524 + $0x7b8] sm:$0xff]
        %v957 = vld [vmem:[%s524 + $0x7c0] sm:$0xff]
        %v958 = vld [vmem:[%s524 + $0x7c8] sm:$0xff]
        %v959 = vld [vmem:[%s524 + $0x7d0] sm:$0xff]
        %v960 = vld [vmem:[%s524 + $0x7d8] sm:$0xff]
        %v961 = vld [vmem:[%s524 + $0x7e0] sm:$0xff]
        %v962 = vld [vmem:[%s524 + $0x7e8] sm:$0xff]
        %v963 = vld [vmem:[%s524 + $0x7f0] sm:$0xff]
        %v964 = vld [vmem:[%s524 + $0x7f8] sm:$0xff]
        %v965 = vld [vmem:[%s524 + $0x800] sm:$0xff]
        %v966 = vld [vmem:[%s524 + $0x808] sm:$0xff]
        %v967 = vld [vmem:[%s524 + $0x810] sm:$0xff]
        %v968 = vld [vmem:[%s524 + $0x818] sm:$0xff]
        %v969 = vld [vmem:[%s524 + $0x820] sm:$0xff]
        %v970 = vld [vmem:[%s524 + $0x828] sm:$0xff]
        %v971 = vld [vmem:[%s524 + $0x830] sm:$0xff]
        %v972 = vld [vmem:[%s524 + $0x838] sm:$0xff]
        %v973 = vld [vmem:[%s524 + $0x840] sm:$0xff]
        %v974 = vld [vmem:[%s524 + $0x848] sm:$0xff]
        %v975 = vld [vmem:[%s524 + $0x850] sm:$0xff]
        %v976 = vld [vmem:[%s524 + $0x858] sm:$0xff]
        %v977 = vld [vmem:[%s524 + $0x860] sm:$0xff]
        %v978 = vld [vmem:[%s524 + $0x868] sm:$0xff]
        %v979 = vld [vmem:[%s524 + $0x870] sm:$0xff]
        %v980 = vld [vmem:[%s524 + $0x878] sm:$0xff]
        %v981 = vld [vmem:[%s524 + $0x880] sm:$0xff]
        %v982 = vld [vmem:[%s524 + $0x888] sm:$0xff]
        %v983 = vld [vmem:[%s524 + $0x890] sm:$0xff]
        %v984 = vld [vmem:[%s524 + $0x898] sm:$0xff]
        %v985 = vld [vmem:[%s524 + $0x8a0] sm:$0xff]
        %v986 = vld [vmem:[%s524 + $0x8a8] sm:$0xff]
        %v987 = vld [vmem:[%s524 + $0x8b0] sm:$0xff]
        %v988 = vld [vmem:[%s524 + $0x8b8] sm:$0xff]
        %v989 = vld [vmem:[%s524 + $0x8c0] sm:$0xff]
        %v990 = vld [vmem:[%s524 + $0x8c8] sm:$0xff]
        %v991 = vld [vmem:[%s524 + $0x8d0] sm:$0xff]
        %v992 = vld [vmem:[%s524 + $0x8d8] sm:$0xff]
        %v993 = vld [vmem:[%s524 + $0x8e0] sm:$0xff]
        %v994 = vld [vmem:[%s524 + $0x8e8] sm:$0xff]
        %v995 = vld [vmem:[%s524 + $0x8f0] sm:$0xff]
        %v996 = vld [vmem:[%s524 + $0x8f8] sm:$0xff]
        %v997 = vld [vmem:[%s524 + $0x900] sm:$0xff]
        %v998 = vld [vmem:[%s524 + $0x908] sm:$0xff]
        %v999 = vld [vmem:[%s524 + $0x910] sm:$0xff]
        %v1000 = vld [vmem:[%s524 + $0x918] sm:$0xff]
        %v1001 = vld [vmem:[%s524 + $0x920] sm:$0xff]
        %v1002 = vld [vmem:[%s524 + $0x928] sm:$0xff]
        %v1003 = vld [vmem:[%s524 + $0x930] sm:$0xff]
        %v1004 = vld [vmem:[%s524 + $0x938] sm:$0xff]
        %v1005 = vld [vmem:[%s524 + $0x940] sm:$0xff]
        %v1006 = vld [vmem:[%s524 + $0x948] sm:$0xff]
        %v1007 = vld [vmem:[%s524 + $0x950] sm:$0xff]
        %v1008 = vld [vmem:[%s524 + $0x958] sm:$0xff]
        %v1009 = vld [vmem:[%s524 + $0x960] sm:$0xff]
        %v1010 = vld [vmem:[%s524 + $0x968] sm:$0xff]
        %v1011 = vld [vmem:[%s524 + $0x970] sm:$0xff]
        %v1012 = vld [vmem:[%s524 + $0x978] sm:$0xff]
        %v1013 = vld [vmem:[%s524 + $0x980] sm:$0xff]
        %v1014 = vld [vmem:[%s524 + $0x988] sm:$0xff]
        %v1015 = vld [vmem:[%s524 + $0x990] sm:$0xff]
        %v1016 = vld [vmem:[%s524 + $0x998] sm:$0xff]
        %v1017 = vld [vmem:[%s524 + $0x9a0] sm:$0xff]
        %v1018 = vld [vmem:[%s524 + $0x9a8] sm:$0xff]
        %v1019 = vld [vmem:[%s524 + $0x9b0] sm:$0xff]
        %v1020 = vld [vmem:[%s524 + $0x9b8] sm:$0xff]
        %v1021 = vld [vmem:[%s524 + $0x9c0] sm:$0xff]
        %v1022 = vld [vmem:[%s524 + $0x9c8] sm:$0xff]
        %v1023 = vld [vmem:[%s524 + $0x9d0] sm:$0xff]
        %v1024 = vld [vmem:[%s524 + $0x9d8] sm:$0xff]
        %v1025 = vld [vmem:[%s524 + $0x9e0] sm:$0xff]
        %v1026 = vld [vmem:[%s524 + $0x9e8] sm:$0xff]
        %v1027 = vld [vmem:[%s524 + $0x9f0] sm:$0xff]
        %v1028 = vld [vmem:[%s524 + $0x9f8] sm:$0xff]
        %v1029 = vld [vmem:[%s524 + $0xa00] sm:$0xff]
        %v1030 = vld [vmem:[%s524 + $0xa08] sm:$0xff]
        %v1031 = vld [vmem:[%s524 + $0xa10] sm:$0xff]
        %v1032 = vld [vmem:[%s524 + $0xa18] sm:$0xff]
        %v1033 = vld [vmem:[%s524 + $0xa20] sm:$0xff]
        %v1034 = vld [vmem:[%s524 + $0xa28] sm:$0xff]
        %v1035 = vld [vmem:[%s524 + $0xa30] sm:$0xff]
        %v1036 = vld [vmem:[%s524 + $0xa38] sm:$0xff]
        %v1037 = vld [vmem:[%s524 + $0xa40] sm:$0xff]
        %v1038 = vld [vmem:[%s524 + $0xa48] sm:$0xff]
        %v1039 = vld [vmem:[%s524 + $0xa50] sm:$0xff]
        %v1040 = vld [vmem:[%s524 + $0xa58] sm:$0xff]
        %v1041 = vld [vmem:[%s524 + $0xa60] sm:$0xff]
        %v1042 = vld [vmem:[%s524 + $0xa68] sm:$0xff]
        %v1043 = vld [vmem:[%s524 + $0xa70] sm:$0xff]
        %v1044 = vld [vmem:[%s524 + $0xa78] sm:$0xff]
        %v1045 = vld [vmem:[%s524 + $0xa80] sm:$0xff]
        %v1046 = vld [vmem:[%s524 + $0xa88] sm:$0xff]
        %v1047 = vld [vmem:[%s524 + $0xa90] sm:$0xff]
        %v1048 = vld [vmem:[%s524 + $0xa98] sm:$0xff]
        %v1049 = vld [vmem:[%s524 + $0xaa0] sm:$0xff]
        %v1050 = vld [vmem:[%s524 + $0xaa8] sm:$0xff]
        %v1051 = vld [vmem:[%s524 + $0xab0] sm:$0xff]
        %v1052 = vld [vmem:[%s524 + $0xab8] sm:$0xff]
        %v1053 = vld [vmem:[%s524 + $0xac0] sm:$0xff]
        %v1054 = vld [vmem:[%s524 + $0xac8] sm:$0xff]
        %v1055 = vld [vmem:[%s524 + $0xad0] sm:$0xff]
        %v1056 = vld [vmem:[%s524 + $0xad8] sm:$0xff]
        %v1057 = vld [vmem:[%s524 + $0xae0] sm:$0xff]
        %v1058 = vld [vmem:[%s524 + $0xae8] sm:$0xff]
        %v1059 = vld [vmem:[%s524 + $0xaf0] sm:$0xff]
        %v1060 = vld [vmem:[%s524 + $0xaf8] sm:$0xff]
        %v1061 = vld [vmem:[%s524 + $0xb00] sm:$0xff]
        %v1062 = vld [vmem:[%s524 + $0xb08] sm:$0xff]
        %v1063 = vld [vmem:[%s524 + $0xb10] sm:$0xff]
        %v1064 = vld [vmem:[%s524 + $0xb18] sm:$0xff]
        %v1065 = vld [vmem:[%s524 + $0xb20] sm:$0xff]
        %v1066 = vld [vmem:[%s524 + $0xb28] sm:$0xff]
        %v1067 = vld [vmem:[%s524 + $0xb30] sm:$0xff]
        %v1068 = vld [vmem:[%s524 + $0xb38] sm:$0xff]
        %v1069 = vld [vmem:[%s524 + $0xb40] sm:$0xff]
        %v1070 = vld [vmem:[%s524 + $0xb48] sm:$0xff]
        %v1071 = vld [vmem:[%s524 + $0xb50] sm:$0xff]
        %v1072 = vld [vmem:[%s524 + $0xb58] sm:$0xff]
        %v1073 = vld [vmem:[%s524 + $0xb60] sm:$0xff]
        %v1074 = vld [vmem:[%s524 + $0xb68] sm:$0xff]
        %v1075 = vld [vmem:[%s524 + $0xb70] sm:$0xff]
        %v1076 = vld [vmem:[%s524 + $0xb78] sm:$0xff]
        %v1077 = vld [vmem:[%s524 + $0xb80] sm:$0xff]
        %v1078 = vld [vmem:[%s524 + $0xb88] sm:$0xff]
        %v1079 = vld [vmem:[%s524 + $0xb90] sm:$0xff]
        %v1080 = vld [vmem:[%s524 + $0xb98] sm:$0xff]
        %v1081 = vld [vmem:[%s524 + $0xba0] sm:$0xff]
        %v1082 = vld [vmem:[%s524 + $0xba8] sm:$0xff]
        %v1083 = vld [vmem:[%s524 + $0xbb0] sm:$0xff]
        %v1084 = vld [vmem:[%s524 + $0xbb8] sm:$0xff]
        %v1085 = vld [vmem:[%s524 + $0xbc0] sm:$0xff]
        %v1086 = vld [vmem:[%s524 + $0xbc8] sm:$0xff]
        %v1087 = vld [vmem:[%s524 + $0xbd0] sm:$0xff]
        %v1088 = vld [vmem:[%s524 + $0xbd8] sm:$0xff]
        %v1089 = vld [vmem:[%s524 + $0xbe0] sm:$0xff]
        %v1090 = vld [vmem:[%s524 + $0xbe8] sm:$0xff]
        %v1091 = vld [vmem:[%s524 + $0xbf0] sm:$0xff]
        %v1092 = vld [vmem:[%s524 + $0xbf8] sm:$0xff]
        %v1093 = vld [vmem:[%s524 + $0xc00] sm:$0xff]
        %v1094 = vld [vmem:[%s524 + $0xc08] sm:$0xff]
        %v1095 = vld [vmem:[%s524 + $0xc10] sm:$0xff]
        %v1096 = vld [vmem:[%s524 + $0xc18] sm:$0xff]
        %v1097 = vld [vmem:[%s524 + $0xc20] sm:$0xff]
        %v1098 = vld [vmem:[%s524 + $0xc28] sm:$0xff]
        %v1099 = vld [vmem:[%s524 + $0xc30] sm:$0xff]
        %v1100 = vld [vmem:[%s524 + $0xc38] sm:$0xff]
        %v1101 = vld [vmem:[%s524 + $0xc40] sm:$0xff]
        %v1102 = vld [vmem:[%s524 + $0xc48] sm:$0xff]
        %v1103 = vld [vmem:[%s524 + $0xc50] sm:$0xff]
        %v1104 = vld [vmem:[%s524 + $0xc58] sm:$0xff]
        %v1105 = vld [vmem:[%s524 + $0xc60] sm:$0xff]
        %v1106 = vld [vmem:[%s524 + $0xc68] sm:$0xff]
        %v1107 = vld [vmem:[%s524 + $0xc70] sm:$0xff]
        %v1108 = vld [vmem:[%s524 + $0xc78] sm:$0xff]
        %v1109 = vld [vmem:[%s524 + $0xc80] sm:$0xff]
        %v1110 = vld [vmem:[%s524 + $0xc88] sm:$0xff]
        %v1111 = vld [vmem:[%s524 + $0xc90] sm:$0xff]
        %v1112 = vld [vmem:[%s524 + $0xc98] sm:$0xff]
        %v1113 = vld [vmem:[%s524 + $0xca0] sm:$0xff]
        %v1114 = vld [vmem:[%s524 + $0xca8] sm:$0xff]
        %v1115 = vld [vmem:[%s524 + $0xcb0] sm:$0xff]
        %v1116 = vld [vmem:[%s524 + $0xcb8] sm:$0xff]
        %v1117 = vld [vmem:[%s524 + $0xcc0] sm:$0xff]
        %v1118 = vld [vmem:[%s524 + $0xcc8] sm:$0xff]
        %v1119 = vld [vmem:[%s524 + $0xcd0] sm:$0xff]
        %v1120 = vld [vmem:[%s524 + $0xcd8] sm:$0xff]
        %v1121 = vld [vmem:[%s524 + $0xce0] sm:$0xff]
        %v1122 = vld [vmem:[%s524 + $0xce8] sm:$0xff]
        %v1123 = vld [vmem:[%s524 + $0xcf0] sm:$0xff]
        %v1124 = vld [vmem:[%s524 + $0xcf8] sm:$0xff]
        %v1125 = vld [vmem:[%s524 + $0xd00] sm:$0xff]
        %v1126 = vld [vmem:[%s524 + $0xd08] sm:$0xff]
        %v1127 = vld [vmem:[%s524 + $0xd10] sm:$0xff]
        %v1128 = vld [vmem:[%s524 + $0xd18] sm:$0xff]
        %v1129 = vld [vmem:[%s524 + $0xd20] sm:$0xff]
        %v1130 = vld [vmem:[%s524 + $0xd28] sm:$0xff]
        %v1131 = vld [vmem:[%s524 + $0xd30] sm:$0xff]
        %v1132 = vld [vmem:[%s524 + $0xd38] sm:$0xff]
        %v1133 = vld [vmem:[%s524 + $0xd40] sm:$0xff]
        %v1134 = vld [vmem:[%s524 + $0xd48] sm:$0xff]
        %v1135 = vld [vmem:[%s524 + $0xd50] sm:$0xff]
        %v1136 = vld [vmem:[%s524 + $0xd58] sm:$0xff]
        %v1137 = vld [vmem:[%s524 + $0xd60] sm:$0xff]
        %v1138 = vld [vmem:[%s524 + $0xd68] sm:$0xff]
        %v1139 = vld [vmem:[%s524 + $0xd70] sm:$0xff]
        %v1140 = vld [vmem:[%s524 + $0xd78] sm:$0xff]
        %v1141 = vld [vmem:[%s524 + $0xd80] sm:$0xff]
        %v1142 = vld [vmem:[%s524 + $0xd88] sm:$0xff]
        %v1143 = vld [vmem:[%s524 + $0xd90] sm:$0xff]
        %v1144 = vld [vmem:[%s524 + $0xd98] sm:$0xff]
        %v1145 = vld [vmem:[%s524 + $0xda0] sm:$0xff]
        %v1146 = vld [vmem:[%s524 + $0xda8] sm:$0xff]
        %v1147 = vld [vmem:[%s524 + $0xdb0] sm:$0xff]
        %v1148 = vld [vmem:[%s524 + $0xdb8] sm:$0xff]
        %v1149 = vld [vmem:[%s524 + $0xdc0] sm:$0xff]
        %v1150 = vld [vmem:[%s524 + $0xdc8] sm:$0xff]
        %v1151 = vld [vmem:[%s524 + $0xdd0] sm:$0xff]
        %v1152 = vld [vmem:[%s524 + $0xdd8] sm:$0xff]
        %v1153 = vld [vmem:[%s524 + $0xde0] sm:$0xff]
        %v1154 = vld [vmem:[%s524 + $0xde8] sm:$0xff]
        %v1155 = vld [vmem:[%s524 + $0xdf0] sm:$0xff]
        %v1156 = vld [vmem:[%s524 + $0xdf8] sm:$0xff]
        %v1157 = vld [vmem:[%s524 + $0xe00] sm:$0xff]
        %v1158 = vld [vmem:[%s524 + $0xe08] sm:$0xff]
        %v1159 = vld [vmem:[%s524 + $0xe10] sm:$0xff]
        %v1160 = vld [vmem:[%s524 + $0xe18] sm:$0xff]
        %v1161 = vld [vmem:[%s524 + $0xe20] sm:$0xff]
        %v1162 = vld [vmem:[%s524 + $0xe28] sm:$0xff]
        %v1163 = vld [vmem:[%s524 + $0xe30] sm:$0xff]
        %v1164 = vld [vmem:[%s524 + $0xe38] sm:$0xff]
        %v1165 = vld [vmem:[%s524 + $0xe40] sm:$0xff]
        %v1166 = vld [vmem:[%s524 + $0xe48] sm:$0xff]
        %v1167 = vld [vmem:[%s524 + $0xe50] sm:$0xff]
        %v1168 = vld [vmem:[%s524 + $0xe58] sm:$0xff]
        %v1169 = vld [vmem:[%s524 + $0xe60] sm:$0xff]
        %v1170 = vld [vmem:[%s524 + $0xe68] sm:$0xff]
        %v1171 = vld [vmem:[%s524 + $0xe70] sm:$0xff]
        %v1172 = vld [vmem:[%s524 + $0xe78] sm:$0xff]
        %v1173 = vld [vmem:[%s524 + $0xe80] sm:$0xff]
        %v1174 = vld [vmem:[%s524 + $0xe88] sm:$0xff]
        %v1175 = vld [vmem:[%s524 + $0xe90] sm:$0xff]
        %v1176 = vld [vmem:[%s524 + $0xe98] sm:$0xff]
        %v1177 = vld [vmem:[%s524 + $0xea0] sm:$0xff]
        %v1178 = vld [vmem:[%s524 + $0xea8] sm:$0xff]
        %v1179 = vld [vmem:[%s524 + $0xeb0] sm:$0xff]
        %v1180 = vld [vmem:[%s524 + $0xeb8] sm:$0xff]
        %v1181 = vld [vmem:[%s524 + $0xec0] sm:$0xff]
        %v1182 = vld [vmem:[%s524 + $0xec8] sm:$0xff]
        %v1183 = vld [vmem:[%s524 + $0xed0] sm:$0xff]
        %v1184 = vld [vmem:[%s524 + $0xed8] sm:$0xff]
        %v1185 = vld [vmem:[%s524 + $0xee0] sm:$0xff]
        %v1186 = vld [vmem:[%s524 + $0xee8] sm:$0xff]
        %v1187 = vld [vmem:[%s524 + $0xef0] sm:$0xff]
        %v1188 = vld [vmem:[%s524 + $0xef8] sm:$0xff]
        %v1189 = vld [vmem:[%s524 + $0xf00] sm:$0xff]
        %v1190 = vld [vmem:[%s524 + $0xf08] sm:$0xff]
        %v1191 = vld [vmem:[%s524 + $0xf10] sm:$0xff]
        %v1192 = vld [vmem:[%s524 + $0xf18] sm:$0xff]
        %v1193 = vld [vmem:[%s524 + $0xf20] sm:$0xff]
        %v1194 = vld [vmem:[%s524 + $0xf28] sm:$0xff]
        %v1195 = vld [vmem:[%s524 + $0xf30] sm:$0xff]
        %v1196 = vld [vmem:[%s524 + $0xf38] sm:$0xff]
        %v1197 = vld [vmem:[%s524 + $0xf40] sm:$0xff]
        %v1198 = vld [vmem:[%s524 + $0xf48] sm:$0xff]
        %v1199 = vld [vmem:[%s524 + $0xf50] sm:$0xff]
        %v1200 = vld [vmem:[%s524 + $0xf58] sm:$0xff]
        %v1201 = vld [vmem:[%s524 + $0xf60] sm:$0xff]
        %v1202 = vld [vmem:[%s524 + $0xf68] sm:$0xff]
        %v1203 = vld [vmem:[%s524 + $0xf70] sm:$0xff]
        %v1204 = vld [vmem:[%s524 + $0xf78] sm:$0xff]
        %v1205 = vld [vmem:[%s524 + $0xf80] sm:$0xff]
        %v1206 = vld [vmem:[%s524 + $0xf88] sm:$0xff]
        %v1207 = vld [vmem:[%s524 + $0xf90] sm:$0xff]
        %v1208 = vld [vmem:[%s524 + $0xf98] sm:$0xff]
        %v1209 = vld [vmem:[%s524 + $0xfa0] sm:$0xff]
        %v1210 = vld [vmem:[%s524 + $0xfa8] sm:$0xff]
        %v1211 = vld [vmem:[%s524 + $0xfb0] sm:$0xff]
        %v1212 = vld [vmem:[%s524 + $0xfb8] sm:$0xff]
        %v1213 = vld [vmem:[%s524 + $0xfc0] sm:$0xff]
        %v1214 = vld [vmem:[%s524 + $0xfc8] sm:$0xff]
        %v1215 = vld [vmem:[%s524 + $0xfd0] sm:$0xff]
        %v1216 = vld [vmem:[%s524 + $0xfd8] sm:$0xff]
        %v1217 = vld [vmem:[%s524 + $0xfe0] sm:$0xff]
        %v1218 = vld [vmem:[%s524 + $0xfe8] sm:$0xff]
        %v1219 = vld [vmem:[%s524 + $0xff0] sm:$0xff]
        %v1220 = vld [vmem:[%s524 + $0xff8] sm:$0xff]
        %v1221 = vunpack.c.l.s8.bf16 %v709
        %v1222 = vunpack.c.l.s8.bf16 %v710
        %v1223 = vunpack.c.l.s8.bf16 %v711
        %v1224 = vunpack.c.l.s8.bf16 %v712
        %v1225 = vunpack.c.h.s8.bf16 %v709
        %v1226 = vunpack.c.h.s8.bf16 %v710
        %v1227 = vunpack.c.h.s8.bf16 %v711
        %v1228 = vunpack.c.h.s8.bf16 %v712
        %v1229 = vunpack.c.l.s8.bf16 %v713
        %v1230 = vunpack.c.l.s8.bf16 %v714
        %v1231 = vunpack.c.l.s8.bf16 %v715
        %v1232 = vunpack.c.l.s8.bf16 %v716
        %v1233 = vunpack.c.h.s8.bf16 %v713
        %v1234 = vunpack.c.h.s8.bf16 %v714
        %v1235 = vunpack.c.h.s8.bf16 %v715
        %v1236 = vunpack.c.h.s8.bf16 %v716
        %v1237 = vunpack.c.l.s8.bf16 %v717
        %v1238 = vunpack.c.l.s8.bf16 %v718
        %v1239 = vunpack.c.l.s8.bf16 %v719
        %v1240 = vunpack.c.l.s8.bf16 %v720
        %v1241 = vunpack.c.h.s8.bf16 %v717
        %v1242 = vunpack.c.h.s8.bf16 %v718
        %v1243 = vunpack.c.h.s8.bf16 %v719
        %v1244 = vunpack.c.h.s8.bf16 %v720
        %v1245 = vunpack.c.l.s8.bf16 %v721
        %v1246 = vunpack.c.l.s8.bf16 %v722
        %v1247 = vunpack.c.l.s8.bf16 %v723
        %v1248 = vunpack.c.l.s8.bf16 %v724
        %v1249 = vunpack.c.h.s8.bf16 %v721
        %v1250 = vunpack.c.h.s8.bf16 %v722
        %v1251 = vunpack.c.h.s8.bf16 %v723
        %v1252 = vunpack.c.h.s8.bf16 %v724
        %v1253 = vunpack.c.l.s8.bf16 %v725
        %v1254 = vunpack.c.l.s8.bf16 %v726
        %v1255 = vunpack.c.l.s8.bf16 %v727
        %v1256 = vunpack.c.l.s8.bf16 %v728
        %v1257 = vunpack.c.h.s8.bf16 %v725
        %v1258 = vunpack.c.h.s8.bf16 %v726
        %v1259 = vunpack.c.h.s8.bf16 %v727
        %v1260 = vunpack.c.h.s8.bf16 %v728
        %v1261 = vunpack.c.l.s8.bf16 %v729
        %v1262 = vunpack.c.l.s8.bf16 %v730
        %v1263 = vunpack.c.l.s8.bf16 %v731
        %v1264 = vunpack.c.l.s8.bf16 %v732
        %v1265 = vunpack.c.h.s8.bf16 %v729
        %v1266 = vunpack.c.h.s8.bf16 %v730
        %v1267 = vunpack.c.h.s8.bf16 %v731
        %v1268 = vunpack.c.h.s8.bf16 %v732
        %v1269 = vunpack.c.l.s8.bf16 %v733
        %v1270 = vunpack.c.l.s8.bf16 %v734
        %v1271 = vunpack.c.l.s8.bf16 %v735
        %v1272 = vunpack.c.l.s8.bf16 %v736
        %v1273 = vunpack.c.h.s8.bf16 %v733
        %v1274 = vunpack.c.h.s8.bf16 %v734
        %v1275 = vunpack.c.h.s8.bf16 %v735
        %v1276 = vunpack.c.h.s8.bf16 %v736
        %v1277 = vunpack.c.l.s8.bf16 %v737
        %v1278 = vunpack.c.l.s8.bf16 %v738
        %v1279 = vunpack.c.l.s8.bf16 %v739
        %v1280 = vunpack.c.l.s8.bf16 %v740
        %v1281 = vunpack.c.h.s8.bf16 %v737
        %v1282 = vunpack.c.h.s8.bf16 %v738
        %v1283 = vunpack.c.h.s8.bf16 %v739
        %v1284 = vunpack.c.h.s8.bf16 %v740
        %v1285 = vunpack.c.l.s8.bf16 %v741
        %v1286 = vunpack.c.l.s8.bf16 %v742
        %v1287 = vunpack.c.l.s8.bf16 %v743
        %v1288 = vunpack.c.l.s8.bf16 %v744
        %v1289 = vunpack.c.h.s8.bf16 %v741
        %v1290 = vunpack.c.h.s8.bf16 %v742
        %v1291 = vunpack.c.h.s8.bf16 %v743
        %v1292 = vunpack.c.h.s8.bf16 %v744
        %v1293 = vunpack.c.l.s8.bf16 %v745
        %v1294 = vunpack.c.l.s8.bf16 %v746
        %v1295 = vunpack.c.l.s8.bf16 %v747
        %v1296 = vunpack.c.l.s8.bf16 %v748
        %v1297 = vunpack.c.h.s8.bf16 %v745
        %v1298 = vunpack.c.h.s8.bf16 %v746
        %v1299 = vunpack.c.h.s8.bf16 %v747
        %v1300 = vunpack.c.h.s8.bf16 %v748
        %v1301 = vunpack.c.l.s8.bf16 %v749
        %v1302 = vunpack.c.l.s8.bf16 %v750
        %v1303 = vunpack.c.l.s8.bf16 %v751
        %v1304 = vunpack.c.l.s8.bf16 %v752
        %v1305 = vunpack.c.h.s8.bf16 %v749
        %v1306 = vunpack.c.h.s8.bf16 %v750
        %v1307 = vunpack.c.h.s8.bf16 %v751
        %v1308 = vunpack.c.h.s8.bf16 %v752
        %v1309 = vunpack.c.l.s8.bf16 %v753
        %v1310 = vunpack.c.l.s8.bf16 %v754
        %v1311 = vunpack.c.l.s8.bf16 %v755
        %v1312 = vunpack.c.l.s8.bf16 %v756
        %v1313 = vunpack.c.h.s8.bf16 %v753
        %v1314 = vunpack.c.h.s8.bf16 %v754
        %v1315 = vunpack.c.h.s8.bf16 %v755
        %v1316 = vunpack.c.h.s8.bf16 %v756
        %v1317 = vunpack.c.l.s8.bf16 %v757
        %v1318 = vunpack.c.l.s8.bf16 %v758
        %v1319 = vunpack.c.l.s8.bf16 %v759
        %v1320 = vunpack.c.l.s8.bf16 %v760
        %v1321 = vunpack.c.h.s8.bf16 %v757
        %v1322 = vunpack.c.h.s8.bf16 %v758
        %v1323 = vunpack.c.h.s8.bf16 %v759
        %v1324 = vunpack.c.h.s8.bf16 %v760
        %v1325 = vunpack.c.l.s8.bf16 %v761
        %v1326 = vunpack.c.l.s8.bf16 %v762
        %v1327 = vunpack.c.l.s8.bf16 %v763
        %v1328 = vunpack.c.l.s8.bf16 %v764
        %v1329 = vunpack.c.h.s8.bf16 %v761
        %v1330 = vunpack.c.h.s8.bf16 %v762
        %v1331 = vunpack.c.h.s8.bf16 %v763
        %v1332 = vunpack.c.h.s8.bf16 %v764
        %v1333 = vunpack.c.l.s8.bf16 %v765
        %v1334 = vunpack.c.l.s8.bf16 %v766
        %v1335 = vunpack.c.l.s8.bf16 %v767
        %v1336 = vunpack.c.l.s8.bf16 %v768
        %v1337 = vunpack.c.h.s8.bf16 %v765
        %v1338 = vunpack.c.h.s8.bf16 %v766
        %v1339 = vunpack.c.h.s8.bf16 %v767
        %v1340 = vunpack.c.h.s8.bf16 %v768
        %v1341 = vunpack.c.l.s8.bf16 %v769
        %v1342 = vunpack.c.l.s8.bf16 %v770
        %v1343 = vunpack.c.l.s8.bf16 %v771
        %v1344 = vunpack.c.l.s8.bf16 %v772
        %v1345 = vunpack.c.h.s8.bf16 %v769
        %v1346 = vunpack.c.h.s8.bf16 %v770
        %v1347 = vunpack.c.h.s8.bf16 %v771
        %v1348 = vunpack.c.h.s8.bf16 %v772
        %v1349 = vunpack.c.l.s8.bf16 %v773
        %v1350 = vunpack.c.l.s8.bf16 %v774
        %v1351 = vunpack.c.l.s8.bf16 %v775
        %v1352 = vunpack.c.l.s8.bf16 %v776
        %v1353 = vunpack.c.h.s8.bf16 %v773
        %v1354 = vunpack.c.h.s8.bf16 %v774
        %v1355 = vunpack.c.h.s8.bf16 %v775
        %v1356 = vunpack.c.h.s8.bf16 %v776
        %v1357 = vunpack.c.l.s8.bf16 %v777
        %v1358 = vunpack.c.l.s8.bf16 %v778
        %v1359 = vunpack.c.l.s8.bf16 %v779
        %v1360 = vunpack.c.l.s8.bf16 %v780
        %v1361 = vunpack.c.h.s8.bf16 %v777
        %v1362 = vunpack.c.h.s8.bf16 %v778
        %v1363 = vunpack.c.h.s8.bf16 %v779
        %v1364 = vunpack.c.h.s8.bf16 %v780
        %v1365 = vunpack.c.l.s8.bf16 %v781
        %v1366 = vunpack.c.l.s8.bf16 %v782
        %v1367 = vunpack.c.l.s8.bf16 %v783
        %v1368 = vunpack.c.l.s8.bf16 %v784
        %v1369 = vunpack.c.h.s8.bf16 %v781
        %v1370 = vunpack.c.h.s8.bf16 %v782
        %v1371 = vunpack.c.h.s8.bf16 %v783
        %v1372 = vunpack.c.h.s8.bf16 %v784
        %v1373 = vunpack.c.l.s8.bf16 %v785
        %v1374 = vunpack.c.l.s8.bf16 %v786
        %v1375 = vunpack.c.l.s8.bf16 %v787
        %v1376 = vunpack.c.l.s8.bf16 %v788
        %v1377 = vunpack.c.h.s8.bf16 %v785
        %v1378 = vunpack.c.h.s8.bf16 %v786
        %v1379 = vunpack.c.h.s8.bf16 %v787
        %v1380 = vunpack.c.h.s8.bf16 %v788
        %v1381 = vunpack.c.l.s8.bf16 %v789
        %v1382 = vunpack.c.l.s8.bf16 %v790
        %v1383 = vunpack.c.l.s8.bf16 %v791
        %v1384 = vunpack.c.l.s8.bf16 %v792
        %v1385 = vunpack.c.h.s8.bf16 %v789
        %v1386 = vunpack.c.h.s8.bf16 %v790
        %v1387 = vunpack.c.h.s8.bf16 %v791
        %v1388 = vunpack.c.h.s8.bf16 %v792
        %v1389 = vunpack.c.l.s8.bf16 %v793
        %v1390 = vunpack.c.l.s8.bf16 %v794
        %v1391 = vunpack.c.l.s8.bf16 %v795
        %v1392 = vunpack.c.l.s8.bf16 %v796
        %v1393 = vunpack.c.h.s8.bf16 %v793
        %v1394 = vunpack.c.h.s8.bf16 %v794
        %v1395 = vunpack.c.h.s8.bf16 %v795
        %v1396 = vunpack.c.h.s8.bf16 %v796
        %v1397 = vunpack.c.l.s8.bf16 %v797
        %v1398 = vunpack.c.l.s8.bf16 %v798
        %v1399 = vunpack.c.l.s8.bf16 %v799
        %v1400 = vunpack.c.l.s8.bf16 %v800
        %v1401 = vunpack.c.h.s8.bf16 %v797
        %v1402 = vunpack.c.h.s8.bf16 %v798
        %v1403 = vunpack.c.h.s8.bf16 %v799
        %v1404 = vunpack.c.h.s8.bf16 %v800
        %v1405 = vunpack.c.l.s8.bf16 %v801
        %v1406 = vunpack.c.l.s8.bf16 %v802
        %v1407 = vunpack.c.l.s8.bf16 %v803
        %v1408 = vunpack.c.l.s8.bf16 %v804
        %v1409 = vunpack.c.h.s8.bf16 %v801
        %v1410 = vunpack.c.h.s8.bf16 %v802
        %v1411 = vunpack.c.h.s8.bf16 %v803
        %v1412 = vunpack.c.h.s8.bf16 %v804
        %v1413 = vunpack.c.l.s8.bf16 %v805
        %v1414 = vunpack.c.l.s8.bf16 %v806
        %v1415 = vunpack.c.l.s8.bf16 %v807
        %v1416 = vunpack.c.l.s8.bf16 %v808
        %v1417 = vunpack.c.h.s8.bf16 %v805
        %v1418 = vunpack.c.h.s8.bf16 %v806
        %v1419 = vunpack.c.h.s8.bf16 %v807
        %v1420 = vunpack.c.h.s8.bf16 %v808
        %v1421 = vunpack.c.l.s8.bf16 %v809
        %v1422 = vunpack.c.l.s8.bf16 %v810
        %v1423 = vunpack.c.l.s8.bf16 %v811
        %v1424 = vunpack.c.l.s8.bf16 %v812
        %v1425 = vunpack.c.h.s8.bf16 %v809
        %v1426 = vunpack.c.h.s8.bf16 %v810
        %v1427 = vunpack.c.h.s8.bf16 %v811
        %v1428 = vunpack.c.h.s8.bf16 %v812
        %v1429 = vunpack.c.l.s8.bf16 %v813
        %v1430 = vunpack.c.l.s8.bf16 %v814
        %v1431 = vunpack.c.l.s8.bf16 %v815
        %v1432 = vunpack.c.l.s8.bf16 %v816
        %v1433 = vunpack.c.h.s8.bf16 %v813
        %v1434 = vunpack.c.h.s8.bf16 %v814
        %v1435 = vunpack.c.h.s8.bf16 %v815
        %v1436 = vunpack.c.h.s8.bf16 %v816
        %v1437 = vunpack.c.l.s8.bf16 %v817
        %v1438 = vunpack.c.l.s8.bf16 %v818
        %v1439 = vunpack.c.l.s8.bf16 %v819
        %v1440 = vunpack.c.l.s8.bf16 %v820
        %v1441 = vunpack.c.h.s8.bf16 %v817
        %v1442 = vunpack.c.h.s8.bf16 %v818
        %v1443 = vunpack.c.h.s8.bf16 %v819
        %v1444 = vunpack.c.h.s8.bf16 %v820
        %v1445 = vunpack.c.l.s8.bf16 %v821
        %v1446 = vunpack.c.l.s8.bf16 %v822
        %v1447 = vunpack.c.l.s8.bf16 %v823
        %v1448 = vunpack.c.l.s8.bf16 %v824
        %v1449 = vunpack.c.h.s8.bf16 %v821
        %v1450 = vunpack.c.h.s8.bf16 %v822
        %v1451 = vunpack.c.h.s8.bf16 %v823
        %v1452 = vunpack.c.h.s8.bf16 %v824
        %v1453 = vunpack.c.l.s8.bf16 %v825
        %v1454 = vunpack.c.l.s8.bf16 %v826
        %v1455 = vunpack.c.l.s8.bf16 %v827
        %v1456 = vunpack.c.l.s8.bf16 %v828
        %v1457 = vunpack.c.h.s8.bf16 %v825
        %v1458 = vunpack.c.h.s8.bf16 %v826
        %v1459 = vunpack.c.h.s8.bf16 %v827
        %v1460 = vunpack.c.h.s8.bf16 %v828
        %v1461 = vunpack.c.l.s8.bf16 %v829
        %v1462 = vunpack.c.l.s8.bf16 %v830
        %v1463 = vunpack.c.l.s8.bf16 %v831
        %v1464 = vunpack.c.l.s8.bf16 %v832
        %v1465 = vunpack.c.h.s8.bf16 %v829
        %v1466 = vunpack.c.h.s8.bf16 %v830
        %v1467 = vunpack.c.h.s8.bf16 %v831
        %v1468 = vunpack.c.h.s8.bf16 %v832
        %v1469 = vunpack.c.l.s8.bf16 %v833
        %v1470 = vunpack.c.l.s8.bf16 %v834
        %v1471 = vunpack.c.l.s8.bf16 %v835
        %v1472 = vunpack.c.l.s8.bf16 %v836
        %v1473 = vunpack.c.h.s8.bf16 %v833
        %v1474 = vunpack.c.h.s8.bf16 %v834
        %v1475 = vunpack.c.h.s8.bf16 %v835
        %v1476 = vunpack.c.h.s8.bf16 %v836
        %v1477 = vunpack.c.l.s8.bf16 %v837
        %v1478 = vunpack.c.l.s8.bf16 %v838
        %v1479 = vunpack.c.l.s8.bf16 %v839
        %v1480 = vunpack.c.l.s8.bf16 %v840
        %v1481 = vunpack.c.h.s8.bf16 %v837
        %v1482 = vunpack.c.h.s8.bf16 %v838
        %v1483 = vunpack.c.h.s8.bf16 %v839
        %v1484 = vunpack.c.h.s8.bf16 %v840
        %v1485 = vunpack.c.l.s8.bf16 %v841
        %v1486 = vunpack.c.l.s8.bf16 %v842
        %v1487 = vunpack.c.l.s8.bf16 %v843
        %v1488 = vunpack.c.l.s8.bf16 %v844
        %v1489 = vunpack.c.h.s8.bf16 %v841
        %v1490 = vunpack.c.h.s8.bf16 %v842
        %v1491 = vunpack.c.h.s8.bf16 %v843
        %v1492 = vunpack.c.h.s8.bf16 %v844
        %v1493 = vunpack.c.l.s8.bf16 %v845
        %v1494 = vunpack.c.l.s8.bf16 %v846
        %v1495 = vunpack.c.l.s8.bf16 %v847
        %v1496 = vunpack.c.l.s8.bf16 %v848
        %v1497 = vunpack.c.h.s8.bf16 %v845
        %v1498 = vunpack.c.h.s8.bf16 %v846
        %v1499 = vunpack.c.h.s8.bf16 %v847
        %v1500 = vunpack.c.h.s8.bf16 %v848
        %v1501 = vunpack.c.l.s8.bf16 %v849
        %v1502 = vunpack.c.l.s8.bf16 %v850
        %v1503 = vunpack.c.l.s8.bf16 %v851
        %v1504 = vunpack.c.l.s8.bf16 %v852
        %v1505 = vunpack.c.h.s8.bf16 %v849
        %v1506 = vunpack.c.h.s8.bf16 %v850
        %v1507 = vunpack.c.h.s8.bf16 %v851
        %v1508 = vunpack.c.h.s8.bf16 %v852
        %v1509 = vunpack.c.l.s8.bf16 %v853
        %v1510 = vunpack.c.l.s8.bf16 %v854
        %v1511 = vunpack.c.l.s8.bf16 %v855
        %v1512 = vunpack.c.l.s8.bf16 %v856
        %v1513 = vunpack.c.h.s8.bf16 %v853
        %v1514 = vunpack.c.h.s8.bf16 %v854
        %v1515 = vunpack.c.h.s8.bf16 %v855
        %v1516 = vunpack.c.h.s8.bf16 %v856
        %v1517 = vunpack.c.l.s8.bf16 %v857
        %v1518 = vunpack.c.l.s8.bf16 %v858
        %v1519 = vunpack.c.l.s8.bf16 %v859
        %v1520 = vunpack.c.l.s8.bf16 %v860
        %v1521 = vunpack.c.h.s8.bf16 %v857
        %v1522 = vunpack.c.h.s8.bf16 %v858
        %v1523 = vunpack.c.h.s8.bf16 %v859
        %v1524 = vunpack.c.h.s8.bf16 %v860
        %v1525 = vunpack.c.l.s8.bf16 %v861
        %v1526 = vunpack.c.l.s8.bf16 %v862
        %v1527 = vunpack.c.l.s8.bf16 %v863
        %v1528 = vunpack.c.l.s8.bf16 %v864
        %v1529 = vunpack.c.h.s8.bf16 %v861
        %v1530 = vunpack.c.h.s8.bf16 %v862
        %v1531 = vunpack.c.h.s8.bf16 %v863
        %v1532 = vunpack.c.h.s8.bf16 %v864
        %v1533 = vunpack.c.l.s8.bf16 %v865
        %v1534 = vunpack.c.l.s8.bf16 %v866
        %v1535 = vunpack.c.l.s8.bf16 %v867
        %v1536 = vunpack.c.l.s8.bf16 %v868
        %v1537 = vunpack.c.h.s8.bf16 %v865
        %v1538 = vunpack.c.h.s8.bf16 %v866
        %v1539 = vunpack.c.h.s8.bf16 %v867
        %v1540 = vunpack.c.h.s8.bf16 %v868
        %v1541 = vunpack.c.l.s8.bf16 %v869
        %v1542 = vunpack.c.l.s8.bf16 %v870
        %v1543 = vunpack.c.l.s8.bf16 %v871
        %v1544 = vunpack.c.l.s8.bf16 %v872
        %v1545 = vunpack.c.h.s8.bf16 %v869
        %v1546 = vunpack.c.h.s8.bf16 %v870
        %v1547 = vunpack.c.h.s8.bf16 %v871
        %v1548 = vunpack.c.h.s8.bf16 %v872
        %v1549 = vunpack.c.l.s8.bf16 %v873
        %v1550 = vunpack.c.l.s8.bf16 %v874
        %v1551 = vunpack.c.l.s8.bf16 %v875
        %v1552 = vunpack.c.l.s8.bf16 %v876
        %v1553 = vunpack.c.h.s8.bf16 %v873
        %v1554 = vunpack.c.h.s8.bf16 %v874
        %v1555 = vunpack.c.h.s8.bf16 %v875
        %v1556 = vunpack.c.h.s8.bf16 %v876
        %v1557 = vunpack.c.l.s8.bf16 %v877
        %v1558 = vunpack.c.l.s8.bf16 %v878
        %v1559 = vunpack.c.l.s8.bf16 %v879
        %v1560 = vunpack.c.l.s8.bf16 %v880
        %v1561 = vunpack.c.h.s8.bf16 %v877
        %v1562 = vunpack.c.h.s8.bf16 %v878
        %v1563 = vunpack.c.h.s8.bf16 %v879
        %v1564 = vunpack.c.h.s8.bf16 %v880
        %v1565 = vunpack.c.l.s8.bf16 %v881
        %v1566 = vunpack.c.l.s8.bf16 %v882
        %v1567 = vunpack.c.l.s8.bf16 %v883
        %v1568 = vunpack.c.l.s8.bf16 %v884
        %v1569 = vunpack.c.h.s8.bf16 %v881
        %v1570 = vunpack.c.h.s8.bf16 %v882
        %v1571 = vunpack.c.h.s8.bf16 %v883
        %v1572 = vunpack.c.h.s8.bf16 %v884
        %v1573 = vunpack.c.l.s8.bf16 %v885
        %v1574 = vunpack.c.l.s8.bf16 %v886
        %v1575 = vunpack.c.l.s8.bf16 %v887
        %v1576 = vunpack.c.l.s8.bf16 %v888
        %v1577 = vunpack.c.h.s8.bf16 %v885
        %v1578 = vunpack.c.h.s8.bf16 %v886
        %v1579 = vunpack.c.h.s8.bf16 %v887
        %v1580 = vunpack.c.h.s8.bf16 %v888
        %v1581 = vunpack.c.l.s8.bf16 %v889
        %v1582 = vunpack.c.l.s8.bf16 %v890
        %v1583 = vunpack.c.l.s8.bf16 %v891
        %v1584 = vunpack.c.l.s8.bf16 %v892
        %v1585 = vunpack.c.h.s8.bf16 %v889
        %v1586 = vunpack.c.h.s8.bf16 %v890
        %v1587 = vunpack.c.h.s8.bf16 %v891
        %v1588 = vunpack.c.h.s8.bf16 %v892
        %v1589 = vunpack.c.l.s8.bf16 %v893
        %v1590 = vunpack.c.l.s8.bf16 %v894
        %v1591 = vunpack.c.l.s8.bf16 %v895
        %v1592 = vunpack.c.l.s8.bf16 %v896
        %v1593 = vunpack.c.h.s8.bf16 %v893
        %v1594 = vunpack.c.h.s8.bf16 %v894
        %v1595 = vunpack.c.h.s8.bf16 %v895
        %v1596 = vunpack.c.h.s8.bf16 %v896
        %v1597 = vunpack.c.l.s8.bf16 %v897
        %v1598 = vunpack.c.l.s8.bf16 %v898
        %v1599 = vunpack.c.l.s8.bf16 %v899
        %v1600 = vunpack.c.l.s8.bf16 %v900
        %v1601 = vunpack.c.h.s8.bf16 %v897
        %v1602 = vunpack.c.h.s8.bf16 %v898
        %v1603 = vunpack.c.h.s8.bf16 %v899
        %v1604 = vunpack.c.h.s8.bf16 %v900
        %v1605 = vunpack.c.l.s8.bf16 %v901
        %v1606 = vunpack.c.l.s8.bf16 %v902
        %v1607 = vunpack.c.l.s8.bf16 %v903
        %v1608 = vunpack.c.l.s8.bf16 %v904
        %v1609 = vunpack.c.h.s8.bf16 %v901
        %v1610 = vunpack.c.h.s8.bf16 %v902
        %v1611 = vunpack.c.h.s8.bf16 %v903
        %v1612 = vunpack.c.h.s8.bf16 %v904
        %v1613 = vunpack.c.l.s8.bf16 %v905
        %v1614 = vunpack.c.l.s8.bf16 %v906
        %v1615 = vunpack.c.l.s8.bf16 %v907
        %v1616 = vunpack.c.l.s8.bf16 %v908
        %v1617 = vunpack.c.h.s8.bf16 %v905
        %v1618 = vunpack.c.h.s8.bf16 %v906
        %v1619 = vunpack.c.h.s8.bf16 %v907
        %v1620 = vunpack.c.h.s8.bf16 %v908
        %v1621 = vunpack.c.l.s8.bf16 %v909
        %v1622 = vunpack.c.l.s8.bf16 %v910
        %v1623 = vunpack.c.l.s8.bf16 %v911
        %v1624 = vunpack.c.l.s8.bf16 %v912
        %v1625 = vunpack.c.h.s8.bf16 %v909
        %v1626 = vunpack.c.h.s8.bf16 %v910
        %v1627 = vunpack.c.h.s8.bf16 %v911
        %v1628 = vunpack.c.h.s8.bf16 %v912
        %v1629 = vunpack.c.l.s8.bf16 %v913
        %v1630 = vunpack.c.l.s8.bf16 %v914
        %v1631 = vunpack.c.l.s8.bf16 %v915
        %v1632 = vunpack.c.l.s8.bf16 %v916
        %v1633 = vunpack.c.h.s8.bf16 %v913
        %v1634 = vunpack.c.h.s8.bf16 %v914
        %v1635 = vunpack.c.h.s8.bf16 %v915
        %v1636 = vunpack.c.h.s8.bf16 %v916
        %v1637 = vunpack.c.l.s8.bf16 %v917
        %v1638 = vunpack.c.l.s8.bf16 %v918
        %v1639 = vunpack.c.l.s8.bf16 %v919
        %v1640 = vunpack.c.l.s8.bf16 %v920
        %v1641 = vunpack.c.h.s8.bf16 %v917
        %v1642 = vunpack.c.h.s8.bf16 %v918
        %v1643 = vunpack.c.h.s8.bf16 %v919
        %v1644 = vunpack.c.h.s8.bf16 %v920
        %v1645 = vunpack.c.l.s8.bf16 %v921
        %v1646 = vunpack.c.l.s8.bf16 %v922
        %v1647 = vunpack.c.l.s8.bf16 %v923
        %v1648 = vunpack.c.l.s8.bf16 %v924
        %v1649 = vunpack.c.h.s8.bf16 %v921
        %v1650 = vunpack.c.h.s8.bf16 %v922
        %v1651 = vunpack.c.h.s8.bf16 %v923
        %v1652 = vunpack.c.h.s8.bf16 %v924
        %v1653 = vunpack.c.l.s8.bf16 %v925
        %v1654 = vunpack.c.l.s8.bf16 %v926
        %v1655 = vunpack.c.l.s8.bf16 %v927
        %v1656 = vunpack.c.l.s8.bf16 %v928
        %v1657 = vunpack.c.h.s8.bf16 %v925
        %v1658 = vunpack.c.h.s8.bf16 %v926
        %v1659 = vunpack.c.h.s8.bf16 %v927
        %v1660 = vunpack.c.h.s8.bf16 %v928
        %v1661 = vunpack.c.l.s8.bf16 %v929
        %v1662 = vunpack.c.l.s8.bf16 %v930
        %v1663 = vunpack.c.l.s8.bf16 %v931
        %v1664 = vunpack.c.l.s8.bf16 %v932
        %v1665 = vunpack.c.h.s8.bf16 %v929
        %v1666 = vunpack.c.h.s8.bf16 %v930
        %v1667 = vunpack.c.h.s8.bf16 %v931
        %v1668 = vunpack.c.h.s8.bf16 %v932
        %v1669 = vunpack.c.l.s8.bf16 %v933
        %v1670 = vunpack.c.l.s8.bf16 %v934
        %v1671 = vunpack.c.l.s8.bf16 %v935
        %v1672 = vunpack.c.l.s8.bf16 %v936
        %v1673 = vunpack.c.h.s8.bf16 %v933
        %v1674 = vunpack.c.h.s8.bf16 %v934
        %v1675 = vunpack.c.h.s8.bf16 %v935
        %v1676 = vunpack.c.h.s8.bf16 %v936
        %v1677 = vunpack.c.l.s8.bf16 %v937
        %v1678 = vunpack.c.l.s8.bf16 %v938
        %v1679 = vunpack.c.l.s8.bf16 %v939
        %v1680 = vunpack.c.l.s8.bf16 %v940
        %v1681 = vunpack.c.h.s8.bf16 %v937
        %v1682 = vunpack.c.h.s8.bf16 %v938
        %v1683 = vunpack.c.h.s8.bf16 %v939
        %v1684 = vunpack.c.h.s8.bf16 %v940
        %v1685 = vunpack.c.l.s8.bf16 %v941
        %v1686 = vunpack.c.l.s8.bf16 %v942
        %v1687 = vunpack.c.l.s8.bf16 %v943
        %v1688 = vunpack.c.l.s8.bf16 %v944
        %v1689 = vunpack.c.h.s8.bf16 %v941
        %v1690 = vunpack.c.h.s8.bf16 %v942
        %v1691 = vunpack.c.h.s8.bf16 %v943
        %v1692 = vunpack.c.h.s8.bf16 %v944
        %v1693 = vunpack.c.l.s8.bf16 %v945
        %v1694 = vunpack.c.l.s8.bf16 %v946
        %v1695 = vunpack.c.l.s8.bf16 %v947
        %v1696 = vunpack.c.l.s8.bf16 %v948
        %v1697 = vunpack.c.h.s8.bf16 %v945
        %v1698 = vunpack.c.h.s8.bf16 %v946
        %v1699 = vunpack.c.h.s8.bf16 %v947
        %v1700 = vunpack.c.h.s8.bf16 %v948
        %v1701 = vunpack.c.l.s8.bf16 %v949
        %v1702 = vunpack.c.l.s8.bf16 %v950
        %v1703 = vunpack.c.l.s8.bf16 %v951
        %v1704 = vunpack.c.l.s8.bf16 %v952
        %v1705 = vunpack.c.h.s8.bf16 %v949
        %v1706 = vunpack.c.h.s8.bf16 %v950
        %v1707 = vunpack.c.h.s8.bf16 %v951
        %v1708 = vunpack.c.h.s8.bf16 %v952
        %v1709 = vunpack.c.l.s8.bf16 %v953
        %v1710 = vunpack.c.l.s8.bf16 %v954
        %v1711 = vunpack.c.l.s8.bf16 %v955
        %v1712 = vunpack.c.l.s8.bf16 %v956
        %v1713 = vunpack.c.h.s8.bf16 %v953
        %v1714 = vunpack.c.h.s8.bf16 %v954
        %v1715 = vunpack.c.h.s8.bf16 %v955
        %v1716 = vunpack.c.h.s8.bf16 %v956
        %v1717 = vunpack.c.l.s8.bf16 %v957
        %v1718 = vunpack.c.l.s8.bf16 %v958
        %v1719 = vunpack.c.l.s8.bf16 %v959
        %v1720 = vunpack.c.l.s8.bf16 %v960
        %v1721 = vunpack.c.h.s8.bf16 %v957
        %v1722 = vunpack.c.h.s8.bf16 %v958
        %v1723 = vunpack.c.h.s8.bf16 %v959
        %v1724 = vunpack.c.h.s8.bf16 %v960
        %v1725 = vunpack.c.l.s8.bf16 %v961
        %v1726 = vunpack.c.l.s8.bf16 %v962
        %v1727 = vunpack.c.l.s8.bf16 %v963
        %v1728 = vunpack.c.l.s8.bf16 %v964
        %v1729 = vunpack.c.h.s8.bf16 %v961
        %v1730 = vunpack.c.h.s8.bf16 %v962
        %v1731 = vunpack.c.h.s8.bf16 %v963
        %v1732 = vunpack.c.h.s8.bf16 %v964
        %v1733 = vunpack.c.l.s8.bf16 %v965
        %v1734 = vunpack.c.l.s8.bf16 %v966
        %v1735 = vunpack.c.l.s8.bf16 %v967
        %v1736 = vunpack.c.l.s8.bf16 %v968
        %v1737 = vunpack.c.h.s8.bf16 %v965
        %v1738 = vunpack.c.h.s8.bf16 %v966
        %v1739 = vunpack.c.h.s8.bf16 %v967
        %v1740 = vunpack.c.h.s8.bf16 %v968
        %v1741 = vunpack.c.l.s8.bf16 %v969
        %v1742 = vunpack.c.l.s8.bf16 %v970
        %v1743 = vunpack.c.l.s8.bf16 %v971
        %v1744 = vunpack.c.l.s8.bf16 %v972
        %v1745 = vunpack.c.h.s8.bf16 %v969
        %v1746 = vunpack.c.h.s8.bf16 %v970
        %v1747 = vunpack.c.h.s8.bf16 %v971
        %v1748 = vunpack.c.h.s8.bf16 %v972
        %v1749 = vunpack.c.l.s8.bf16 %v973
        %v1750 = vunpack.c.l.s8.bf16 %v974
        %v1751 = vunpack.c.l.s8.bf16 %v975
        %v1752 = vunpack.c.l.s8.bf16 %v976
        %v1753 = vunpack.c.h.s8.bf16 %v973
        %v1754 = vunpack.c.h.s8.bf16 %v974
        %v1755 = vunpack.c.h.s8.bf16 %v975
        %v1756 = vunpack.c.h.s8.bf16 %v976
        %v1757 = vunpack.c.l.s8.bf16 %v977
        %v1758 = vunpack.c.l.s8.bf16 %v978
        %v1759 = vunpack.c.l.s8.bf16 %v979
        %v1760 = vunpack.c.l.s8.bf16 %v980
        %v1761 = vunpack.c.h.s8.bf16 %v977
        %v1762 = vunpack.c.h.s8.bf16 %v978
        %v1763 = vunpack.c.h.s8.bf16 %v979
        %v1764 = vunpack.c.h.s8.bf16 %v980
        %v1765 = vunpack.c.l.s8.bf16 %v981
        %v1766 = vunpack.c.l.s8.bf16 %v982
        %v1767 = vunpack.c.l.s8.bf16 %v983
        %v1768 = vunpack.c.l.s8.bf16 %v984
        %v1769 = vunpack.c.h.s8.bf16 %v981
        %v1770 = vunpack.c.h.s8.bf16 %v982
        %v1771 = vunpack.c.h.s8.bf16 %v983
        %v1772 = vunpack.c.h.s8.bf16 %v984
        %v1773 = vunpack.c.l.s8.bf16 %v985
        %v1774 = vunpack.c.l.s8.bf16 %v986
        %v1775 = vunpack.c.l.s8.bf16 %v987
        %v1776 = vunpack.c.l.s8.bf16 %v988
        %v1777 = vunpack.c.h.s8.bf16 %v985
        %v1778 = vunpack.c.h.s8.bf16 %v986
        %v1779 = vunpack.c.h.s8.bf16 %v987
        %v1780 = vunpack.c.h.s8.bf16 %v988
        %v1781 = vunpack.c.l.s8.bf16 %v989
        %v1782 = vunpack.c.l.s8.bf16 %v990
        %v1783 = vunpack.c.l.s8.bf16 %v991
        %v1784 = vunpack.c.l.s8.bf16 %v992
        %v1785 = vunpack.c.h.s8.bf16 %v989
        %v1786 = vunpack.c.h.s8.bf16 %v990
        %v1787 = vunpack.c.h.s8.bf16 %v991
        %v1788 = vunpack.c.h.s8.bf16 %v992
        %v1789 = vunpack.c.l.s8.bf16 %v993
        %v1790 = vunpack.c.l.s8.bf16 %v994
        %v1791 = vunpack.c.l.s8.bf16 %v995
        %v1792 = vunpack.c.l.s8.bf16 %v996
        %v1793 = vunpack.c.h.s8.bf16 %v993
        %v1794 = vunpack.c.h.s8.bf16 %v994
        %v1795 = vunpack.c.h.s8.bf16 %v995
        %v1796 = vunpack.c.h.s8.bf16 %v996
        %v1797 = vunpack.c.l.s8.bf16 %v997
        %v1798 = vunpack.c.l.s8.bf16 %v998
        %v1799 = vunpack.c.l.s8.bf16 %v999
        %v1800 = vunpack.c.l.s8.bf16 %v1000
        %v1801 = vunpack.c.h.s8.bf16 %v997
        %v1802 = vunpack.c.h.s8.bf16 %v998
        %v1803 = vunpack.c.h.s8.bf16 %v999
        %v1804 = vunpack.c.h.s8.bf16 %v1000
        %v1805 = vunpack.c.l.s8.bf16 %v1001
        %v1806 = vunpack.c.l.s8.bf16 %v1002
        %v1807 = vunpack.c.l.s8.bf16 %v1003
        %v1808 = vunpack.c.l.s8.bf16 %v1004
        %v1809 = vunpack.c.h.s8.bf16 %v1001
        %v1810 = vunpack.c.h.s8.bf16 %v1002
        %v1811 = vunpack.c.h.s8.bf16 %v1003
        %v1812 = vunpack.c.h.s8.bf16 %v1004
        %v1813 = vunpack.c.l.s8.bf16 %v1005
        %v1814 = vunpack.c.l.s8.bf16 %v1006
        %v1815 = vunpack.c.l.s8.bf16 %v1007
        %v1816 = vunpack.c.l.s8.bf16 %v1008
        %v1817 = vunpack.c.h.s8.bf16 %v1005
        %v1818 = vunpack.c.h.s8.bf16 %v1006
        %v1819 = vunpack.c.h.s8.bf16 %v1007
        %v1820 = vunpack.c.h.s8.bf16 %v1008
        %v1821 = vunpack.c.l.s8.bf16 %v1009
        %v1822 = vunpack.c.l.s8.bf16 %v1010
        %v1823 = vunpack.c.l.s8.bf16 %v1011
        %v1824 = vunpack.c.l.s8.bf16 %v1012
        %v1825 = vunpack.c.h.s8.bf16 %v1009
        %v1826 = vunpack.c.h.s8.bf16 %v1010
        %v1827 = vunpack.c.h.s8.bf16 %v1011
        %v1828 = vunpack.c.h.s8.bf16 %v1012
        %v1829 = vunpack.c.l.s8.bf16 %v1013
        %v1830 = vunpack.c.l.s8.bf16 %v1014
        %v1831 = vunpack.c.l.s8.bf16 %v1015
        %v1832 = vunpack.c.l.s8.bf16 %v1016
        %v1833 = vunpack.c.h.s8.bf16 %v1013
        %v1834 = vunpack.c.h.s8.bf16 %v1014
        %v1835 = vunpack.c.h.s8.bf16 %v1015
        %v1836 = vunpack.c.h.s8.bf16 %v1016
        %v1837 = vunpack.c.l.s8.bf16 %v1017
        %v1838 = vunpack.c.l.s8.bf16 %v1018
        %v1839 = vunpack.c.l.s8.bf16 %v1019
        %v1840 = vunpack.c.l.s8.bf16 %v1020
        %v1841 = vunpack.c.h.s8.bf16 %v1017
        %v1842 = vunpack.c.h.s8.bf16 %v1018
        %v1843 = vunpack.c.h.s8.bf16 %v1019
        %v1844 = vunpack.c.h.s8.bf16 %v1020
        %v1845 = vunpack.c.l.s8.bf16 %v1021
        %v1846 = vunpack.c.l.s8.bf16 %v1022
        %v1847 = vunpack.c.l.s8.bf16 %v1023
        %v1848 = vunpack.c.l.s8.bf16 %v1024
        %v1849 = vunpack.c.h.s8.bf16 %v1021
        %v1850 = vunpack.c.h.s8.bf16 %v1022
        %v1851 = vunpack.c.h.s8.bf16 %v1023
        %v1852 = vunpack.c.h.s8.bf16 %v1024
        %v1853 = vunpack.c.l.s8.bf16 %v1025
        %v1854 = vunpack.c.l.s8.bf16 %v1026
        %v1855 = vunpack.c.l.s8.bf16 %v1027
        %v1856 = vunpack.c.l.s8.bf16 %v1028
        %v1857 = vunpack.c.h.s8.bf16 %v1025
        %v1858 = vunpack.c.h.s8.bf16 %v1026
        %v1859 = vunpack.c.h.s8.bf16 %v1027
        %v1860 = vunpack.c.h.s8.bf16 %v1028
        %v1861 = vunpack.c.l.s8.bf16 %v1029
        %v1862 = vunpack.c.l.s8.bf16 %v1030
        %v1863 = vunpack.c.l.s8.bf16 %v1031
        %v1864 = vunpack.c.l.s8.bf16 %v1032
        %v1865 = vunpack.c.h.s8.bf16 %v1029
        %v1866 = vunpack.c.h.s8.bf16 %v1030
        %v1867 = vunpack.c.h.s8.bf16 %v1031
        %v1868 = vunpack.c.h.s8.bf16 %v1032
        %v1869 = vunpack.c.l.s8.bf16 %v1033
        %v1870 = vunpack.c.l.s8.bf16 %v1034
        %v1871 = vunpack.c.l.s8.bf16 %v1035
        %v1872 = vunpack.c.l.s8.bf16 %v1036
        %v1873 = vunpack.c.h.s8.bf16 %v1033
        %v1874 = vunpack.c.h.s8.bf16 %v1034
        %v1875 = vunpack.c.h.s8.bf16 %v1035
        %v1876 = vunpack.c.h.s8.bf16 %v1036
        %v1877 = vunpack.c.l.s8.bf16 %v1037
        %v1878 = vunpack.c.l.s8.bf16 %v1038
        %v1879 = vunpack.c.l.s8.bf16 %v1039
        %v1880 = vunpack.c.l.s8.bf16 %v1040
        %v1881 = vunpack.c.h.s8.bf16 %v1037
        %v1882 = vunpack.c.h.s8.bf16 %v1038
        %v1883 = vunpack.c.h.s8.bf16 %v1039
        %v1884 = vunpack.c.h.s8.bf16 %v1040
        %v1885 = vunpack.c.l.s8.bf16 %v1041
        %v1886 = vunpack.c.l.s8.bf16 %v1042
        %v1887 = vunpack.c.l.s8.bf16 %v1043
        %v1888 = vunpack.c.l.s8.bf16 %v1044
        %v1889 = vunpack.c.h.s8.bf16 %v1041
        %v1890 = vunpack.c.h.s8.bf16 %v1042
        %v1891 = vunpack.c.h.s8.bf16 %v1043
        %v1892 = vunpack.c.h.s8.bf16 %v1044
        %v1893 = vunpack.c.l.s8.bf16 %v1045
        %v1894 = vunpack.c.l.s8.bf16 %v1046
        %v1895 = vunpack.c.l.s8.bf16 %v1047
        %v1896 = vunpack.c.l.s8.bf16 %v1048
        %v1897 = vunpack.c.h.s8.bf16 %v1045
        %v1898 = vunpack.c.h.s8.bf16 %v1046
        %v1899 = vunpack.c.h.s8.bf16 %v1047
        %v1900 = vunpack.c.h.s8.bf16 %v1048
        %v1901 = vunpack.c.l.s8.bf16 %v1049
        %v1902 = vunpack.c.l.s8.bf16 %v1050
        %v1903 = vunpack.c.l.s8.bf16 %v1051
        %v1904 = vunpack.c.l.s8.bf16 %v1052
        %v1905 = vunpack.c.h.s8.bf16 %v1049
        %v1906 = vunpack.c.h.s8.bf16 %v1050
        %v1907 = vunpack.c.h.s8.bf16 %v1051
        %v1908 = vunpack.c.h.s8.bf16 %v1052
        %v1909 = vunpack.c.l.s8.bf16 %v1053
        %v1910 = vunpack.c.l.s8.bf16 %v1054
        %v1911 = vunpack.c.l.s8.bf16 %v1055
        %v1912 = vunpack.c.l.s8.bf16 %v1056
        %v1913 = vunpack.c.h.s8.bf16 %v1053
        %v1914 = vunpack.c.h.s8.bf16 %v1054
        %v1915 = vunpack.c.h.s8.bf16 %v1055
        %v1916 = vunpack.c.h.s8.bf16 %v1056
        %v1917 = vunpack.c.l.s8.bf16 %v1057
        %v1918 = vunpack.c.l.s8.bf16 %v1058
        %v1919 = vunpack.c.l.s8.bf16 %v1059
        %v1920 = vunpack.c.l.s8.bf16 %v1060
        %v1921 = vunpack.c.h.s8.bf16 %v1057
        %v1922 = vunpack.c.h.s8.bf16 %v1058
        %v1923 = vunpack.c.h.s8.bf16 %v1059
        %v1924 = vunpack.c.h.s8.bf16 %v1060
        %v1925 = vunpack.c.l.s8.bf16 %v1061
        %v1926 = vunpack.c.l.s8.bf16 %v1062
        %v1927 = vunpack.c.l.s8.bf16 %v1063
        %v1928 = vunpack.c.l.s8.bf16 %v1064
        %v1929 = vunpack.c.h.s8.bf16 %v1061
        %v1930 = vunpack.c.h.s8.bf16 %v1062
        %v1931 = vunpack.c.h.s8.bf16 %v1063
        %v1932 = vunpack.c.h.s8.bf16 %v1064
        %v1933 = vunpack.c.l.s8.bf16 %v1065
        %v1934 = vunpack.c.l.s8.bf16 %v1066
        %v1935 = vunpack.c.l.s8.bf16 %v1067
        %v1936 = vunpack.c.l.s8.bf16 %v1068
        %v1937 = vunpack.c.h.s8.bf16 %v1065
        %v1938 = vunpack.c.h.s8.bf16 %v1066
        %v1939 = vunpack.c.h.s8.bf16 %v1067
        %v1940 = vunpack.c.h.s8.bf16 %v1068
        %v1941 = vunpack.c.l.s8.bf16 %v1069
        %v1942 = vunpack.c.l.s8.bf16 %v1070
        %v1943 = vunpack.c.l.s8.bf16 %v1071
        %v1944 = vunpack.c.l.s8.bf16 %v1072
        %v1945 = vunpack.c.h.s8.bf16 %v1069
        %v1946 = vunpack.c.h.s8.bf16 %v1070
        %v1947 = vunpack.c.h.s8.bf16 %v1071
        %v1948 = vunpack.c.h.s8.bf16 %v1072
        %v1949 = vunpack.c.l.s8.bf16 %v1073
        %v1950 = vunpack.c.l.s8.bf16 %v1074
        %v1951 = vunpack.c.l.s8.bf16 %v1075
        %v1952 = vunpack.c.l.s8.bf16 %v1076
        %v1953 = vunpack.c.h.s8.bf16 %v1073
        %v1954 = vunpack.c.h.s8.bf16 %v1074
        %v1955 = vunpack.c.h.s8.bf16 %v1075
        %v1956 = vunpack.c.h.s8.bf16 %v1076
        %v1957 = vunpack.c.l.s8.bf16 %v1077
        %v1958 = vunpack.c.l.s8.bf16 %v1078
        %v1959 = vunpack.c.l.s8.bf16 %v1079
        %v1960 = vunpack.c.l.s8.bf16 %v1080
        %v1961 = vunpack.c.h.s8.bf16 %v1077
        %v1962 = vunpack.c.h.s8.bf16 %v1078
        %v1963 = vunpack.c.h.s8.bf16 %v1079
        %v1964 = vunpack.c.h.s8.bf16 %v1080
        %v1965 = vunpack.c.l.s8.bf16 %v1081
        %v1966 = vunpack.c.l.s8.bf16 %v1082
        %v1967 = vunpack.c.l.s8.bf16 %v1083
        %v1968 = vunpack.c.l.s8.bf16 %v1084
        %v1969 = vunpack.c.h.s8.bf16 %v1081
        %v1970 = vunpack.c.h.s8.bf16 %v1082
        %v1971 = vunpack.c.h.s8.bf16 %v1083
        %v1972 = vunpack.c.h.s8.bf16 %v1084
        %v1973 = vunpack.c.l.s8.bf16 %v1085
        %v1974 = vunpack.c.l.s8.bf16 %v1086
        %v1975 = vunpack.c.l.s8.bf16 %v1087
        %v1976 = vunpack.c.l.s8.bf16 %v1088
        %v1977 = vunpack.c.h.s8.bf16 %v1085
        %v1978 = vunpack.c.h.s8.bf16 %v1086
        %v1979 = vunpack.c.h.s8.bf16 %v1087
        %v1980 = vunpack.c.h.s8.bf16 %v1088
        %v1981 = vunpack.c.l.s8.bf16 %v1089
        %v1982 = vunpack.c.l.s8.bf16 %v1090
        %v1983 = vunpack.c.l.s8.bf16 %v1091
        %v1984 = vunpack.c.l.s8.bf16 %v1092
        %v1985 = vunpack.c.h.s8.bf16 %v1089
        %v1986 = vunpack.c.h.s8.bf16 %v1090
        %v1987 = vunpack.c.h.s8.bf16 %v1091
        %v1988 = vunpack.c.h.s8.bf16 %v1092
        %v1989 = vunpack.c.l.s8.bf16 %v1093
        %v1990 = vunpack.c.l.s8.bf16 %v1094
        %v1991 = vunpack.c.l.s8.bf16 %v1095
        %v1992 = vunpack.c.l.s8.bf16 %v1096
        %v1993 = vunpack.c.h.s8.bf16 %v1093
        %v1994 = vunpack.c.h.s8.bf16 %v1094
        %v1995 = vunpack.c.h.s8.bf16 %v1095
        %v1996 = vunpack.c.h.s8.bf16 %v1096
        %v1997 = vunpack.c.l.s8.bf16 %v1097
        %v1998 = vunpack.c.l.s8.bf16 %v1098
        %v1999 = vunpack.c.l.s8.bf16 %v1099
        %v2000 = vunpack.c.l.s8.bf16 %v1100
        %v2001 = vunpack.c.h.s8.bf16 %v1097
        %v2002 = vunpack.c.h.s8.bf16 %v1098
        %v2003 = vunpack.c.h.s8.bf16 %v1099
        %v2004 = vunpack.c.h.s8.bf16 %v1100
        %v2005 = vunpack.c.l.s8.bf16 %v1101
        %v2006 = vunpack.c.l.s8.bf16 %v1102
        %v2007 = vunpack.c.l.s8.bf16 %v1103
        %v2008 = vunpack.c.l.s8.bf16 %v1104
        %v2009 = vunpack.c.h.s8.bf16 %v1101
        %v2010 = vunpack.c.h.s8.bf16 %v1102
        %v2011 = vunpack.c.h.s8.bf16 %v1103
        %v2012 = vunpack.c.h.s8.bf16 %v1104
        %v2013 = vunpack.c.l.s8.bf16 %v1105
        %v2014 = vunpack.c.l.s8.bf16 %v1106
        %v2015 = vunpack.c.l.s8.bf16 %v1107
        %v2016 = vunpack.c.l.s8.bf16 %v1108
        %v2017 = vunpack.c.h.s8.bf16 %v1105
        %v2018 = vunpack.c.h.s8.bf16 %v1106
        %v2019 = vunpack.c.h.s8.bf16 %v1107
        %v2020 = vunpack.c.h.s8.bf16 %v1108
        %v2021 = vunpack.c.l.s8.bf16 %v1109
        %v2022 = vunpack.c.l.s8.bf16 %v1110
        %v2023 = vunpack.c.l.s8.bf16 %v1111
        %v2024 = vunpack.c.l.s8.bf16 %v1112
        %v2025 = vunpack.c.h.s8.bf16 %v1109
        %v2026 = vunpack.c.h.s8.bf16 %v1110
        %v2027 = vunpack.c.h.s8.bf16 %v1111
        %v2028 = vunpack.c.h.s8.bf16 %v1112
        %v2029 = vunpack.c.l.s8.bf16 %v1113
        %v2030 = vunpack.c.l.s8.bf16 %v1114
        %v2031 = vunpack.c.l.s8.bf16 %v1115
        %v2032 = vunpack.c.l.s8.bf16 %v1116
        %v2033 = vunpack.c.h.s8.bf16 %v1113
        %v2034 = vunpack.c.h.s8.bf16 %v1114
        %v2035 = vunpack.c.h.s8.bf16 %v1115
        %v2036 = vunpack.c.h.s8.bf16 %v1116
        %v2037 = vunpack.c.l.s8.bf16 %v1117
        %v2038 = vunpack.c.l.s8.bf16 %v1118
        %v2039 = vunpack.c.l.s8.bf16 %v1119
        %v2040 = vunpack.c.l.s8.bf16 %v1120
        %v2041 = vunpack.c.h.s8.bf16 %v1117
        %v2042 = vunpack.c.h.s8.bf16 %v1118
        %v2043 = vunpack.c.h.s8.bf16 %v1119
        %v2044 = vunpack.c.h.s8.bf16 %v1120
        %v2045 = vunpack.c.l.s8.bf16 %v1121
        %v2046 = vunpack.c.l.s8.bf16 %v1122
        %v2047 = vunpack.c.l.s8.bf16 %v1123
        %v2048 = vunpack.c.l.s8.bf16 %v1124
        %v2049 = vunpack.c.h.s8.bf16 %v1121
        %v2050 = vunpack.c.h.s8.bf16 %v1122
        %v2051 = vunpack.c.h.s8.bf16 %v1123
        %v2052 = vunpack.c.h.s8.bf16 %v1124
        %v2053 = vunpack.c.l.s8.bf16 %v1125
        %v2054 = vunpack.c.l.s8.bf16 %v1126
        %v2055 = vunpack.c.l.s8.bf16 %v1127
        %v2056 = vunpack.c.l.s8.bf16 %v1128
        %v2057 = vunpack.c.h.s8.bf16 %v1125
        %v2058 = vunpack.c.h.s8.bf16 %v1126
        %v2059 = vunpack.c.h.s8.bf16 %v1127
        %v2060 = vunpack.c.h.s8.bf16 %v1128
        %v2061 = vunpack.c.l.s8.bf16 %v1129
        %v2062 = vunpack.c.l.s8.bf16 %v1130
        %v2063 = vunpack.c.l.s8.bf16 %v1131
        %v2064 = vunpack.c.l.s8.bf16 %v1132
        %v2065 = vunpack.c.h.s8.bf16 %v1129
        %v2066 = vunpack.c.h.s8.bf16 %v1130
        %v2067 = vunpack.c.h.s8.bf16 %v1131
        %v2068 = vunpack.c.h.s8.bf16 %v1132
        %v2069 = vunpack.c.l.s8.bf16 %v1133
        %v2070 = vunpack.c.l.s8.bf16 %v1134
        %v2071 = vunpack.c.l.s8.bf16 %v1135
        %v2072 = vunpack.c.l.s8.bf16 %v1136
        %v2073 = vunpack.c.h.s8.bf16 %v1133
        %v2074 = vunpack.c.h.s8.bf16 %v1134
        %v2075 = vunpack.c.h.s8.bf16 %v1135
        %v2076 = vunpack.c.h.s8.bf16 %v1136
        %v2077 = vunpack.c.l.s8.bf16 %v1137
        %v2078 = vunpack.c.l.s8.bf16 %v1138
        %v2079 = vunpack.c.l.s8.bf16 %v1139
        %v2080 = vunpack.c.l.s8.bf16 %v1140
        %v2081 = vunpack.c.h.s8.bf16 %v1137
        %v2082 = vunpack.c.h.s8.bf16 %v1138
        %v2083 = vunpack.c.h.s8.bf16 %v1139
        %v2084 = vunpack.c.h.s8.bf16 %v1140
        %v2085 = vunpack.c.l.s8.bf16 %v1141
        %v2086 = vunpack.c.l.s8.bf16 %v1142
        %v2087 = vunpack.c.l.s8.bf16 %v1143
        %v2088 = vunpack.c.l.s8.bf16 %v1144
        %v2089 = vunpack.c.h.s8.bf16 %v1141
        %v2090 = vunpack.c.h.s8.bf16 %v1142
        %v2091 = vunpack.c.h.s8.bf16 %v1143
        %v2092 = vunpack.c.h.s8.bf16 %v1144
        %v2093 = vunpack.c.l.s8.bf16 %v1145
        %v2094 = vunpack.c.l.s8.bf16 %v1146
        %v2095 = vunpack.c.l.s8.bf16 %v1147
        %v2096 = vunpack.c.l.s8.bf16 %v1148
        %v2097 = vunpack.c.h.s8.bf16 %v1145
        %v2098 = vunpack.c.h.s8.bf16 %v1146
        %v2099 = vunpack.c.h.s8.bf16 %v1147
        %v2100 = vunpack.c.h.s8.bf16 %v1148
        %v2101 = vunpack.c.l.s8.bf16 %v1149
        %v2102 = vunpack.c.l.s8.bf16 %v1150
        %v2103 = vunpack.c.l.s8.bf16 %v1151
        %v2104 = vunpack.c.l.s8.bf16 %v1152
        %v2105 = vunpack.c.h.s8.bf16 %v1149
        %v2106 = vunpack.c.h.s8.bf16 %v1150
        %v2107 = vunpack.c.h.s8.bf16 %v1151
        %v2108 = vunpack.c.h.s8.bf16 %v1152
        %v2109 = vunpack.c.l.s8.bf16 %v1153
        %v2110 = vunpack.c.l.s8.bf16 %v1154
        %v2111 = vunpack.c.l.s8.bf16 %v1155
        %v2112 = vunpack.c.l.s8.bf16 %v1156
        %v2113 = vunpack.c.h.s8.bf16 %v1153
        %v2114 = vunpack.c.h.s8.bf16 %v1154
        %v2115 = vunpack.c.h.s8.bf16 %v1155
        %v2116 = vunpack.c.h.s8.bf16 %v1156
        %v2117 = vunpack.c.l.s8.bf16 %v1157
        %v2118 = vunpack.c.l.s8.bf16 %v1158
        %v2119 = vunpack.c.l.s8.bf16 %v1159
        %v2120 = vunpack.c.l.s8.bf16 %v1160
        %v2121 = vunpack.c.h.s8.bf16 %v1157
        %v2122 = vunpack.c.h.s8.bf16 %v1158
        %v2123 = vunpack.c.h.s8.bf16 %v1159
        %v2124 = vunpack.c.h.s8.bf16 %v1160
        %v2125 = vunpack.c.l.s8.bf16 %v1161
        %v2126 = vunpack.c.l.s8.bf16 %v1162
        %v2127 = vunpack.c.l.s8.bf16 %v1163
        %v2128 = vunpack.c.l.s8.bf16 %v1164
        %v2129 = vunpack.c.h.s8.bf16 %v1161
        %v2130 = vunpack.c.h.s8.bf16 %v1162
        %v2131 = vunpack.c.h.s8.bf16 %v1163
        %v2132 = vunpack.c.h.s8.bf16 %v1164
        %v2133 = vunpack.c.l.s8.bf16 %v1165
        %v2134 = vunpack.c.l.s8.bf16 %v1166
        %v2135 = vunpack.c.l.s8.bf16 %v1167
        %v2136 = vunpack.c.l.s8.bf16 %v1168
        %v2137 = vunpack.c.h.s8.bf16 %v1165
        %v2138 = vunpack.c.h.s8.bf16 %v1166
        %v2139 = vunpack.c.h.s8.bf16 %v1167
        %v2140 = vunpack.c.h.s8.bf16 %v1168
        %v2141 = vunpack.c.l.s8.bf16 %v1169
        %v2142 = vunpack.c.l.s8.bf16 %v1170
        %v2143 = vunpack.c.l.s8.bf16 %v1171
        %v2144 = vunpack.c.l.s8.bf16 %v1172
        %v2145 = vunpack.c.h.s8.bf16 %v1169
        %v2146 = vunpack.c.h.s8.bf16 %v1170
        %v2147 = vunpack.c.h.s8.bf16 %v1171
        %v2148 = vunpack.c.h.s8.bf16 %v1172
        %v2149 = vunpack.c.l.s8.bf16 %v1173
        %v2150 = vunpack.c.l.s8.bf16 %v1174
        %v2151 = vunpack.c.l.s8.bf16 %v1175
        %v2152 = vunpack.c.l.s8.bf16 %v1176
        %v2153 = vunpack.c.h.s8.bf16 %v1173
        %v2154 = vunpack.c.h.s8.bf16 %v1174
        %v2155 = vunpack.c.h.s8.bf16 %v1175
        %v2156 = vunpack.c.h.s8.bf16 %v1176
        %v2157 = vunpack.c.l.s8.bf16 %v1177
        %v2158 = vunpack.c.l.s8.bf16 %v1178
        %v2159 = vunpack.c.l.s8.bf16 %v1179
        %v2160 = vunpack.c.l.s8.bf16 %v1180
        %v2161 = vunpack.c.h.s8.bf16 %v1177
        %v2162 = vunpack.c.h.s8.bf16 %v1178
        %v2163 = vunpack.c.h.s8.bf16 %v1179
        %v2164 = vunpack.c.h.s8.bf16 %v1180
        %v2165 = vunpack.c.l.s8.bf16 %v1181
        %v2166 = vunpack.c.l.s8.bf16 %v1182
        %v2167 = vunpack.c.l.s8.bf16 %v1183
        %v2168 = vunpack.c.l.s8.bf16 %v1184
        %v2169 = vunpack.c.h.s8.bf16 %v1181
        %v2170 = vunpack.c.h.s8.bf16 %v1182
        %v2171 = vunpack.c.h.s8.bf16 %v1183
        %v2172 = vunpack.c.h.s8.bf16 %v1184
        %v2173 = vunpack.c.l.s8.bf16 %v1185
        %v2174 = vunpack.c.l.s8.bf16 %v1186
        %v2175 = vunpack.c.l.s8.bf16 %v1187
        %v2176 = vunpack.c.l.s8.bf16 %v1188
        %v2177 = vunpack.c.h.s8.bf16 %v1185
        %v2178 = vunpack.c.h.s8.bf16 %v1186
        %v2179 = vunpack.c.h.s8.bf16 %v1187
        %v2180 = vunpack.c.h.s8.bf16 %v1188
        %v2181 = vunpack.c.l.s8.bf16 %v1189
        %v2182 = vunpack.c.l.s8.bf16 %v1190
        %v2183 = vunpack.c.l.s8.bf16 %v1191
        %v2184 = vunpack.c.l.s8.bf16 %v1192
        %v2185 = vunpack.c.h.s8.bf16 %v1189
        %v2186 = vunpack.c.h.s8.bf16 %v1190
        %v2187 = vunpack.c.h.s8.bf16 %v1191
        %v2188 = vunpack.c.h.s8.bf16 %v1192
        %v2189 = vunpack.c.l.s8.bf16 %v1193
        %v2190 = vunpack.c.l.s8.bf16 %v1194
        %v2191 = vunpack.c.l.s8.bf16 %v1195
        %v2192 = vunpack.c.l.s8.bf16 %v1196
        %v2193 = vunpack.c.h.s8.bf16 %v1193
        %v2194 = vunpack.c.h.s8.bf16 %v1194
        %v2195 = vunpack.c.h.s8.bf16 %v1195
        %v2196 = vunpack.c.h.s8.bf16 %v1196
        %v2197 = vunpack.c.l.s8.bf16 %v1197
        %v2198 = vunpack.c.l.s8.bf16 %v1198
        %v2199 = vunpack.c.l.s8.bf16 %v1199
        %v2200 = vunpack.c.l.s8.bf16 %v1200
        %v2201 = vunpack.c.h.s8.bf16 %v1197
        %v2202 = vunpack.c.h.s8.bf16 %v1198
        %v2203 = vunpack.c.h.s8.bf16 %v1199
        %v2204 = vunpack.c.h.s8.bf16 %v1200
        %v2205 = vunpack.c.l.s8.bf16 %v1201
        %v2206 = vunpack.c.l.s8.bf16 %v1202
        %v2207 = vunpack.c.l.s8.bf16 %v1203
        %v2208 = vunpack.c.l.s8.bf16 %v1204
        %v2209 = vunpack.c.h.s8.bf16 %v1201
        %v2210 = vunpack.c.h.s8.bf16 %v1202
        %v2211 = vunpack.c.h.s8.bf16 %v1203
        %v2212 = vunpack.c.h.s8.bf16 %v1204
        %v2213 = vunpack.c.l.s8.bf16 %v1205
        %v2214 = vunpack.c.l.s8.bf16 %v1206
        %v2215 = vunpack.c.l.s8.bf16 %v1207
        %v2216 = vunpack.c.l.s8.bf16 %v1208
        %v2217 = vunpack.c.h.s8.bf16 %v1205
        %v2218 = vunpack.c.h.s8.bf16 %v1206
        %v2219 = vunpack.c.h.s8.bf16 %v1207
        %v2220 = vunpack.c.h.s8.bf16 %v1208
        %v2221 = vunpack.c.l.s8.bf16 %v1209
        %v2222 = vunpack.c.l.s8.bf16 %v1210
        %v2223 = vunpack.c.l.s8.bf16 %v1211
        %v2224 = vunpack.c.l.s8.bf16 %v1212
        %v2225 = vunpack.c.h.s8.bf16 %v1209
        %v2226 = vunpack.c.h.s8.bf16 %v1210
        %v2227 = vunpack.c.h.s8.bf16 %v1211
        %v2228 = vunpack.c.h.s8.bf16 %v1212
        %v2229 = vunpack.c.l.s8.bf16 %v1213
        %v2230 = vunpack.c.l.s8.bf16 %v1214
        %v2231 = vunpack.c.l.s8.bf16 %v1215
        %v2232 = vunpack.c.l.s8.bf16 %v1216
        %v2233 = vunpack.c.h.s8.bf16 %v1213
        %v2234 = vunpack.c.h.s8.bf16 %v1214
        %v2235 = vunpack.c.h.s8.bf16 %v1215
        %v2236 = vunpack.c.h.s8.bf16 %v1216
        %v2237 = vunpack.c.l.s8.bf16 %v1217
        %v2238 = vunpack.c.l.s8.bf16 %v1218
        %v2239 = vunpack.c.l.s8.bf16 %v1219
        %v2240 = vunpack.c.l.s8.bf16 %v1220
        %v2241 = vunpack.c.h.s8.bf16 %v1217
        %v2242 = vunpack.c.h.s8.bf16 %v1218
        %v2243 = vunpack.c.h.s8.bf16 %v1219
        %v2244 = vunpack.c.h.s8.bf16 %v1220
        %2245 = vmatprep.subr.bf16.mxu0 %v1222
        %2246 = vmatpush1.bf16.msra.mxu0 %v1221
        %2247 = vmatprep.subr.bf16.mxu0 %v1226
        %2248 = vmatpush1.bf16.msra.mxu0 %v1225
        %2249 = vmatprep.subr.bf16.mxu0 %v1230
        %2250 = vmatpush1.bf16.msra.mxu0 %v1229
        %2251 = vmatprep.subr.bf16.mxu0 %v1234
        %2252 = vmatpush1.bf16.msra.mxu0 %v1233
        %2253 = vmatprep.subr.bf16.mxu0 %v1238
        %2254 = vmatpush1.bf16.msra.mxu0 %v1237
        %2255 = vmatprep.subr.bf16.mxu0 %v1242
        %2256 = vmatpush1.bf16.msra.mxu0 %v1241
        %2257 = vmatprep.subr.bf16.mxu0 %v1246
        %2258 = vmatpush1.bf16.msra.mxu0 %v1245
        %2259 = vmatprep.subr.bf16.mxu0 %v1250
        %2260 = vmatpush1.bf16.msra.mxu0 %v1249
        %2261 = vmatprep.subr.bf16.mxu0 %v1254
        %2262 = vmatpush1.bf16.msra.mxu0 %v1253
        %2263 = vmatprep.subr.bf16.mxu0 %v1258
        %2264 = vmatpush1.bf16.msra.mxu0 %v1257
        %2265 = vmatprep.subr.bf16.mxu0 %v1262
        %2266 = vmatpush1.bf16.msra.mxu0 %v1261
        %2267 = vmatprep.subr.bf16.mxu0 %v1266
        %2268 = vmatpush1.bf16.msra.mxu0 %v1265
        %2269 = vmatprep.subr.bf16.mxu0 %v1270
        %2270 = vmatpush1.bf16.msra.mxu0 %v1269
        %2271 = vmatprep.subr.bf16.mxu0 %v1274
        %2272 = vmatpush1.bf16.msra.mxu0 %v1273
        %2273 = vmatprep.subr.bf16.mxu0 %v1278
        %2274 = vmatpush1.bf16.msra.mxu0 %v1277
        %2275 = vmatprep.subr.bf16.mxu0 %v1282
        %2276 = vmatpush1.bf16.msra.mxu0 %v1281
        %2277 = vmatprep.mubr.bf16.mxu0 %v678
        %2278 = vmatmul.mubr.bf16.gmra.mrb[0].mxu0 %v677
        %v2279 = vpop.f32.mrb[0].mxu0
        %v2280 = vadd.f32 0.0, %v2279
        %v2281 = vpop.f32.mrb[0].mxu0
        %v2282 = vadd.f32 0.0, %v2281
        %v2283 = vpop.f32.mrb[0].mxu0
        %v2284 = vpop.f32.mrb[0].mxu0
        %2285 = vdwg.mxu0
        %2286 = vmatprep.subr.bf16.mxu0 %v1286
        %2287 = vmatpush1.bf16.msra.mxu0 %v1285
        %2288 = vmatprep.subr.bf16.mxu0 %v1290
        %2289 = vmatpush1.bf16.msra.mxu0 %v1289
        %2290 = vmatprep.subr.bf16.mxu0 %v1294
        %2291 = vmatpush1.bf16.msra.mxu0 %v1293
        %2292 = vmatprep.subr.bf16.mxu0 %v1298
        %2293 = vmatpush1.bf16.msra.mxu0 %v1297
        %2294 = vmatprep.subr.bf16.mxu0 %v1302
        %2295 = vmatpush1.bf16.msra.mxu0 %v1301
        %2296 = vmatprep.subr.bf16.mxu0 %v1306
        %2297 = vmatpush1.bf16.msra.mxu0 %v1305
        %2298 = vmatprep.subr.bf16.mxu0 %v1310
        %2299 = vmatpush1.bf16.msra.mxu0 %v1309
        %2300 = vmatprep.subr.bf16.mxu0 %v1314
        %2301 = vmatpush1.bf16.msra.mxu0 %v1313
        %2302 = vmatprep.subr.bf16.mxu0 %v1318
        %2303 = vmatpush1.bf16.msra.mxu0 %v1317
        %2304 = vmatprep.subr.bf16.mxu0 %v1322
        %2305 = vmatpush1.bf16.msra.mxu0 %v1321
        %2306 = vmatprep.subr.bf16.mxu0 %v1326
        %2307 = vmatpush1.bf16.msra.mxu0 %v1325
        %2308 = vmatprep.subr.bf16.mxu0 %v1330
        %2309 = vmatpush1.bf16.msra.mxu0 %v1329
        %2310 = vmatprep.subr.bf16.mxu0 %v1334
        %2311 = vmatpush1.bf16.msra.mxu0 %v1333
        %2312 = vmatprep.subr.bf16.mxu0 %v1338
        %2313 = vmatpush1.bf16.msra.mxu0 %v1337
        %2314 = vmatprep.subr.bf16.mxu0 %v1342
        %2315 = vmatpush1.bf16.msra.mxu0 %v1341
        %2316 = vmatprep.subr.bf16.mxu0 %v1346
        %2317 = vmatpush1.bf16.msra.mxu0 %v1345
        %2318 = vmatprep.mubr.bf16.mxu0 %v680
        %2319 = vmatmul.mubr.bf16.gmra.mrb[0].mxu0 %v679
        %v2320 = vpop.f32.mrb[0].mxu0
        %v2321 = vadd.f32 %v2280, %v2320
        %v2322 = vpop.f32.mrb[0].mxu0
        %v2323 = vadd.f32 %v2282, %v2322
        %v2324 = vpop.f32.mrb[0].mxu0
        %v2325 = vpop.f32.mrb[0].mxu0
        %2326 = vdwg.mxu0
        %2327 = vmatprep.subr.bf16.mxu0 %v1350
        %2328 = vmatpush1.bf16.msra.mxu0 %v1349
        %2329 = vmatprep.subr.bf16.mxu0 %v1354
        %2330 = vmatpush1.bf16.msra.mxu0 %v1353
        %2331 = vmatprep.subr.bf16.mxu0 %v1358
        %2332 = vmatpush1.bf16.msra.mxu0 %v1357
        %2333 = vmatprep.subr.bf16.mxu0 %v1362
        %2334 = vmatpush1.bf16.msra.mxu0 %v1361
        %2335 = vmatprep.subr.bf16.mxu0 %v1366
        %2336 = vmatpush1.bf16.msra.mxu0 %v1365
        %2337 = vmatprep.subr.bf16.mxu0 %v1370
        %2338 = vmatpush1.bf16.msra.mxu0 %v1369
        %2339 = vmatprep.subr.bf16.mxu0 %v1374
        %2340 = vmatpush1.bf16.msra.mxu0 %v1373
        %2341 = vmatprep.subr.bf16.mxu0 %v1378
        %2342 = vmatpush1.bf16.msra.mxu0 %v1377
        %2343 = vmatprep.subr.bf16.mxu0 %v1382
        %2344 = vmatpush1.bf16.msra.mxu0 %v1381
        %2345 = vmatprep.subr.bf16.mxu0 %v1386
        %2346 = vmatpush1.bf16.msra.mxu0 %v1385
        %2347 = vmatprep.subr.bf16.mxu0 %v1390
        %2348 = vmatpush1.bf16.msra.mxu0 %v1389
        %2349 = vmatprep.subr.bf16.mxu0 %v1394
        %2350 = vmatpush1.bf16.msra.mxu0 %v1393
        %2351 = vmatprep.subr.bf16.mxu0 %v1398
        %2352 = vmatpush1.bf16.msra.mxu0 %v1397
        %2353 = vmatprep.subr.bf16.mxu0 %v1402
        %2354 = vmatpush1.bf16.msra.mxu0 %v1401
        %2355 = vmatprep.subr.bf16.mxu0 %v1406
        %2356 = vmatpush1.bf16.msra.mxu0 %v1405
        %2357 = vmatprep.subr.bf16.mxu0 %v1410
        %2358 = vmatpush1.bf16.msra.mxu0 %v1409
        %2359 = vmatprep.mubr.bf16.mxu0 %v682
        %2360 = vmatmul.mubr.bf16.gmra.mrb[0].mxu0 %v681
        %v2361 = vpop.f32.mrb[0].mxu0
        %v2362 = vadd.f32 %v2321, %v2361
        %v2363 = vpop.f32.mrb[0].mxu0
        %v2364 = vadd.f32 %v2323, %v2363
        %v2365 = vpop.f32.mrb[0].mxu0
        %v2366 = vpop.f32.mrb[0].mxu0
        %2367 = vdwg.mxu0
        %2368 = vmatprep.subr.bf16.mxu0 %v1414
        %2369 = vmatpush1.bf16.msra.mxu0 %v1413
        %2370 = vmatprep.subr.bf16.mxu0 %v1418
        %2371 = vmatpush1.bf16.msra.mxu0 %v1417
        %2372 = vmatprep.subr.bf16.mxu0 %v1422
        %2373 = vmatpush1.bf16.msra.mxu0 %v1421
        %2374 = vmatprep.subr.bf16.mxu0 %v1426
        %2375 = vmatpush1.bf16.msra.mxu0 %v1425
        %2376 = vmatprep.subr.bf16.mxu0 %v1430
        %2377 = vmatpush1.bf16.msra.mxu0 %v1429
        %2378 = vmatprep.subr.bf16.mxu0 %v1434
        %2379 = vmatpush1.bf16.msra.mxu0 %v1433
        %2380 = vmatprep.subr.bf16.mxu0 %v1438
        %2381 = vmatpush1.bf16.msra.mxu0 %v1437
        %2382 = vmatprep.subr.bf16.mxu0 %v1442
        %2383 = vmatpush1.bf16.msra.mxu0 %v1441
        %2384 = vmatprep.subr.bf16.mxu0 %v1446
        %2385 = vmatpush1.bf16.msra.mxu0 %v1445
        %2386 = vmatprep.subr.bf16.mxu0 %v1450
        %2387 = vmatpush1.bf16.msra.mxu0 %v1449
        %2388 = vmatprep.subr.bf16.mxu0 %v1454
        %2389 = vmatpush1.bf16.msra.mxu0 %v1453
        %2390 = vmatprep.subr.bf16.mxu0 %v1458
        %2391 = vmatpush1.bf16.msra.mxu0 %v1457
        %2392 = vmatprep.subr.bf16.mxu0 %v1462
        %2393 = vmatpush1.bf16.msra.mxu0 %v1461
        %2394 = vmatprep.subr.bf16.mxu0 %v1466
        %2395 = vmatpush1.bf16.msra.mxu0 %v1465
        %2396 = vmatprep.subr.bf16.mxu0 %v1470
        %2397 = vmatpush1.bf16.msra.mxu0 %v1469
        %2398 = vmatprep.subr.bf16.mxu0 %v1474
        %2399 = vmatpush1.bf16.msra.mxu0 %v1473
        %2400 = vmatprep.mubr.bf16.mxu0 %v684
        %2401 = vmatmul.mubr.bf16.gmra.mrb[0].mxu0 %v683
        %v2402 = vpop.f32.mrb[0].mxu0
        %v2403 = vadd.f32 %v2362, %v2402
        %v2404 = vpop.f32.mrb[0].mxu0
        %v2405 = vadd.f32 %v2364, %v2404
        %v2406 = vpop.f32.mrb[0].mxu0
        %v2407 = vpop.f32.mrb[0].mxu0
        %2408 = vdwg.mxu0
        %2409 = vmatprep.subr.bf16.mxu0 %v1478
        %2410 = vmatpush1.bf16.msra.mxu0 %v1477
        %2411 = vmatprep.subr.bf16.mxu0 %v1482
        %2412 = vmatpush1.bf16.msra.mxu0 %v1481
        %2413 = vmatprep.subr.bf16.mxu0 %v1486
        %2414 = vmatpush1.bf16.msra.mxu0 %v1485
        %2415 = vmatprep.subr.bf16.mxu0 %v1490
        %2416 = vmatpush1.bf16.msra.mxu0 %v1489
        %2417 = vmatprep.subr.bf16.mxu0 %v1494
        %2418 = vmatpush1.bf16.msra.mxu0 %v1493
        %2419 = vmatprep.subr.bf16.mxu0 %v1498
        %2420 = vmatpush1.bf16.msra.mxu0 %v1497
        %2421 = vmatprep.subr.bf16.mxu0 %v1502
        %2422 = vmatpush1.bf16.msra.mxu0 %v1501
        %2423 = vmatprep.subr.bf16.mxu0 %v1506
        %2424 = vmatpush1.bf16.msra.mxu0 %v1505
        %2425 = vmatprep.subr.bf16.mxu0 %v1510
        %2426 = vmatpush1.bf16.msra.mxu0 %v1509
        %2427 = vmatprep.subr.bf16.mxu0 %v1514
        %2428 = vmatpush1.bf16.msra.mxu0 %v1513
        %2429 = vmatprep.subr.bf16.mxu0 %v1518
        %2430 = vmatpush1.bf16.msra.mxu0 %v1517
        %2431 = vmatprep.subr.bf16.mxu0 %v1522
        %2432 = vmatpush1.bf16.msra.mxu0 %v1521
        %2433 = vmatprep.subr.bf16.mxu0 %v1526
        %2434 = vmatpush1.bf16.msra.mxu0 %v1525
        %2435 = vmatprep.subr.bf16.mxu0 %v1530
        %2436 = vmatpush1.bf16.msra.mxu0 %v1529
        %2437 = vmatprep.subr.bf16.mxu0 %v1534
        %2438 = vmatpush1.bf16.msra.mxu0 %v1533
        %2439 = vmatprep.subr.bf16.mxu0 %v1538
        %2440 = vmatpush1.bf16.msra.mxu0 %v1537
        %2441 = vmatprep.mubr.bf16.mxu0 %v686
        %2442 = vmatmul.mubr.bf16.gmra.mrb[0].mxu0 %v685
        %v2443 = vpop.f32.mrb[0].mxu0
        %v2444 = vadd.f32 %v2403, %v2443
        %v2445 = vpop.f32.mrb[0].mxu0
        %v2446 = vadd.f32 %v2405, %v2445
        %v2447 = vpop.f32.mrb[0].mxu0
        %v2448 = vpop.f32.mrb[0].mxu0
        %2449 = vdwg.mxu0
        %2450 = vmatprep.subr.bf16.mxu0 %v1542
        %2451 = vmatpush1.bf16.msra.mxu0 %v1541
        %2452 = vmatprep.subr.bf16.mxu0 %v1546
        %2453 = vmatpush1.bf16.msra.mxu0 %v1545
        %2454 = vmatprep.subr.bf16.mxu0 %v1550
        %2455 = vmatpush1.bf16.msra.mxu0 %v1549
        %2456 = vmatprep.subr.bf16.mxu0 %v1554
        %2457 = vmatpush1.bf16.msra.mxu0 %v1553
        %2458 = vmatprep.subr.bf16.mxu0 %v1558
        %2459 = vmatpush1.bf16.msra.mxu0 %v1557
        %2460 = vmatprep.subr.bf16.mxu0 %v1562
        %2461 = vmatpush1.bf16.msra.mxu0 %v1561
        %2462 = vmatprep.subr.bf16.mxu0 %v1566
        %2463 = vmatpush1.bf16.msra.mxu0 %v1565
        %2464 = vmatprep.subr.bf16.mxu0 %v1570
        %2465 = vmatpush1.bf16.msra.mxu0 %v1569
        %2466 = vmatprep.subr.bf16.mxu0 %v1574
        %2467 = vmatpush1.bf16.msra.mxu0 %v1573
        %2468 = vmatprep.subr.bf16.mxu0 %v1578
        %2469 = vmatpush1.bf16.msra.mxu0 %v1577
        %2470 = vmatprep.subr.bf16.mxu0 %v1582
        %2471 = vmatpush1.bf16.msra.mxu0 %v1581
        %2472 = vmatprep.subr.bf16.mxu0 %v1586
        %2473 = vmatpush1.bf16.msra.mxu0 %v1585
        %2474 = vmatprep.subr.bf16.mxu0 %v1590
        %2475 = vmatpush1.bf16.msra.mxu0 %v1589
        %2476 = vmatprep.subr.bf16.mxu0 %v1594
        %2477 = vmatpush1.bf16.msra.mxu0 %v1593
        %2478 = vmatprep.subr.bf16.mxu0 %v1598
        %2479 = vmatpush1.bf16.msra.mxu0 %v1597
        %2480 = vmatprep.subr.bf16.mxu0 %v1602
        %2481 = vmatpush1.bf16.msra.mxu0 %v1601
        %2482 = vmatprep.mubr.bf16.mxu0 %v688
        %2483 = vmatmul.mubr.bf16.gmra.mrb[0].mxu0 %v687
        %v2484 = vpop.f32.mrb[0].mxu0
        %v2485 = vadd.f32 %v2444, %v2484
        %v2486 = vpop.f32.mrb[0].mxu0
        %v2487 = vadd.f32 %v2446, %v2486
        %v2488 = vpop.f32.mrb[0].mxu0
        %v2489 = vpop.f32.mrb[0].mxu0
        %2490 = vdwg.mxu0
        %2491 = vmatprep.subr.bf16.mxu0 %v1606
        %2492 = vmatpush1.bf16.msra.mxu0 %v1605
        %2493 = vmatprep.subr.bf16.mxu0 %v1610
        %2494 = vmatpush1.bf16.msra.mxu0 %v1609
        %2495 = vmatprep.subr.bf16.mxu0 %v1614
        %2496 = vmatpush1.bf16.msra.mxu0 %v1613
        %2497 = vmatprep.subr.bf16.mxu0 %v1618
        %2498 = vmatpush1.bf16.msra.mxu0 %v1617
        %2499 = vmatprep.subr.bf16.mxu0 %v1622
        %2500 = vmatpush1.bf16.msra.mxu0 %v1621
        %2501 = vmatprep.subr.bf16.mxu0 %v1626
        %2502 = vmatpush1.bf16.msra.mxu0 %v1625
        %2503 = vmatprep.subr.bf16.mxu0 %v1630
        %2504 = vmatpush1.bf16.msra.mxu0 %v1629
        %2505 = vmatprep.subr.bf16.mxu0 %v1634
        %2506 = vmatpush1.bf16.msra.mxu0 %v1633
        %2507 = vmatprep.subr.bf16.mxu0 %v1638
        %2508 = vmatpush1.bf16.msra.mxu0 %v1637
        %2509 = vmatprep.subr.bf16.mxu0 %v1642
        %2510 = vmatpush1.bf16.msra.mxu0 %v1641
        %2511 = vmatprep.subr.bf16.mxu0 %v1646
        %2512 = vmatpush1.bf16.msra.mxu0 %v1645
        %2513 = vmatprep.subr.bf16.mxu0 %v1650
        %2514 = vmatpush1.bf16.msra.mxu0 %v1649
        %2515 = vmatprep.subr.bf16.mxu0 %v1654
        %2516 = vmatpush1.bf16.msra.mxu0 %v1653
        %2517 = vmatprep.subr.bf16.mxu0 %v1658
        %2518 = vmatpush1.bf16.msra.mxu0 %v1657
        %2519 = vmatprep.subr.bf16.mxu0 %v1662
        %2520 = vmatpush1.bf16.msra.mxu0 %v1661
        %2521 = vmatprep.subr.bf16.mxu0 %v1666
        %2522 = vmatpush1.bf16.msra.mxu0 %v1665
        %2523 = vmatprep.mubr.bf16.mxu0 %v690
        %2524 = vmatmul.mubr.bf16.gmra.mrb[0].mxu0 %v689
        %v2525 = vpop.f32.mrb[0].mxu0
        %v2526 = vadd.f32 %v2485, %v2525
        %v2527 = vpop.f32.mrb[0].mxu0
        %v2528 = vadd.f32 %v2487, %v2527
        %v2529 = vpop.f32.mrb[0].mxu0
        %v2530 = vpop.f32.mrb[0].mxu0
        %2531 = vdwg.mxu0
        %2532 = vmatprep.subr.bf16.mxu0 %v1670
        %2533 = vmatpush1.bf16.msra.mxu0 %v1669
        %2534 = vmatprep.subr.bf16.mxu0 %v1674
        %2535 = vmatpush1.bf16.msra.mxu0 %v1673
        %2536 = vmatprep.subr.bf16.mxu0 %v1678
        %2537 = vmatpush1.bf16.msra.mxu0 %v1677
        %2538 = vmatprep.subr.bf16.mxu0 %v1682
        %2539 = vmatpush1.bf16.msra.mxu0 %v1681
        %2540 = vmatprep.subr.bf16.mxu0 %v1686
        %2541 = vmatpush1.bf16.msra.mxu0 %v1685
        %2542 = vmatprep.subr.bf16.mxu0 %v1690
        %2543 = vmatpush1.bf16.msra.mxu0 %v1689
        %2544 = vmatprep.subr.bf16.mxu0 %v1694
        %2545 = vmatpush1.bf16.msra.mxu0 %v1693
        %2546 = vmatprep.subr.bf16.mxu0 %v1698
        %2547 = vmatpush1.bf16.msra.mxu0 %v1697
        %2548 = vmatprep.subr.bf16.mxu0 %v1702
        %2549 = vmatpush1.bf16.msra.mxu0 %v1701
        %2550 = vmatprep.subr.bf16.mxu0 %v1706
        %2551 = vmatpush1.bf16.msra.mxu0 %v1705
        %2552 = vmatprep.subr.bf16.mxu0 %v1710
        %2553 = vmatpush1.bf16.msra.mxu0 %v1709
        %2554 = vmatprep.subr.bf16.mxu0 %v1714
        %2555 = vmatpush1.bf16.msra.mxu0 %v1713
        %2556 = vmatprep.subr.bf16.mxu0 %v1718
        %2557 = vmatpush1.bf16.msra.mxu0 %v1717
        %2558 = vmatprep.subr.bf16.mxu0 %v1722
        %2559 = vmatpush1.bf16.msra.mxu0 %v1721
        %2560 = vmatprep.subr.bf16.mxu0 %v1726
        %2561 = vmatpush1.bf16.msra.mxu0 %v1725
        %2562 = vmatprep.subr.bf16.mxu0 %v1730
        %2563 = vmatpush1.bf16.msra.mxu0 %v1729
        %2564 = vmatprep.mubr.bf16.mxu0 %v692
        %2565 = vmatmul.mubr.bf16.gmra.mrb[0].mxu0 %v691
        %v2566 = vpop.f32.mrb[0].mxu0
        %v2567 = vadd.f32 %v2526, %v2566
        %v2568 = vpop.f32.mrb[0].mxu0
        %v2569 = vadd.f32 %v2528, %v2568
        %v2570 = vpop.f32.mrb[0].mxu0
        %v2571 = vpop.f32.mrb[0].mxu0
        %2572 = vdwg.mxu0
        %2573 = vmatprep.subr.bf16.mxu0 %v1734
        %2574 = vmatpush1.bf16.msra.mxu0 %v1733
        %2575 = vmatprep.subr.bf16.mxu0 %v1738
        %2576 = vmatpush1.bf16.msra.mxu0 %v1737
        %2577 = vmatprep.subr.bf16.mxu0 %v1742
        %2578 = vmatpush1.bf16.msra.mxu0 %v1741
        %2579 = vmatprep.subr.bf16.mxu0 %v1746
        %2580 = vmatpush1.bf16.msra.mxu0 %v1745
        %2581 = vmatprep.subr.bf16.mxu0 %v1750
        %2582 = vmatpush1.bf16.msra.mxu0 %v1749
        %2583 = vmatprep.subr.bf16.mxu0 %v1754
        %2584 = vmatpush1.bf16.msra.mxu0 %v1753
        %2585 = vmatprep.subr.bf16.mxu0 %v1758
        %2586 = vmatpush1.bf16.msra.mxu0 %v1757
        %2587 = vmatprep.subr.bf16.mxu0 %v1762
        %2588 = vmatpush1.bf16.msra.mxu0 %v1761
        %2589 = vmatprep.subr.bf16.mxu0 %v1766
        %2590 = vmatpush1.bf16.msra.mxu0 %v1765
        %2591 = vmatprep.subr.bf16.mxu0 %v1770
        %2592 = vmatpush1.bf16.msra.mxu0 %v1769
        %2593 = vmatprep.subr.bf16.mxu0 %v1774
        %2594 = vmatpush1.bf16.msra.mxu0 %v1773
        %2595 = vmatprep.subr.bf16.mxu0 %v1778
        %2596 = vmatpush1.bf16.msra.mxu0 %v1777
        %2597 = vmatprep.subr.bf16.mxu0 %v1782
        %2598 = vmatpush1.bf16.msra.mxu0 %v1781
        %2599 = vmatprep.subr.bf16.mxu0 %v1786
        %2600 = vmatpush1.bf16.msra.mxu0 %v1785
        %2601 = vmatprep.subr.bf16.mxu0 %v1790
        %2602 = vmatpush1.bf16.msra.mxu0 %v1789
        %2603 = vmatprep.subr.bf16.mxu0 %v1794
        %2604 = vmatpush1.bf16.msra.mxu0 %v1793
        %2605 = vmatprep.mubr.bf16.mxu0 %v694
        %2606 = vmatmul.mubr.bf16.gmra.mrb[0].mxu0 %v693
        %v2607 = vpop.f32.mrb[0].mxu0
        %v2608 = vadd.f32 %v2567, %v2607
        %v2609 = vpop.f32.mrb[0].mxu0
        %v2610 = vadd.f32 %v2569, %v2609
        %v2611 = vpop.f32.mrb[0].mxu0
        %v2612 = vpop.f32.mrb[0].mxu0
        %2613 = vdwg.mxu0
        %2614 = vmatprep.subr.bf16.mxu0 %v1798
        %2615 = vmatpush1.bf16.msra.mxu0 %v1797
        %2616 = vmatprep.subr.bf16.mxu0 %v1802
        %2617 = vmatpush1.bf16.msra.mxu0 %v1801
        %2618 = vmatprep.subr.bf16.mxu0 %v1806
        %2619 = vmatpush1.bf16.msra.mxu0 %v1805
        %2620 = vmatprep.subr.bf16.mxu0 %v1810
        %2621 = vmatpush1.bf16.msra.mxu0 %v1809
        %2622 = vmatprep.subr.bf16.mxu0 %v1814
        %2623 = vmatpush1.bf16.msra.mxu0 %v1813
        %2624 = vmatprep.subr.bf16.mxu0 %v1818
        %2625 = vmatpush1.bf16.msra.mxu0 %v1817
        %2626 = vmatprep.subr.bf16.mxu0 %v1822
        %2627 = vmatpush1.bf16.msra.mxu0 %v1821
        %2628 = vmatprep.subr.bf16.mxu0 %v1826
        %2629 = vmatpush1.bf16.msra.mxu0 %v1825
        %2630 = vmatprep.subr.bf16.mxu0 %v1830
        %2631 = vmatpush1.bf16.msra.mxu0 %v1829
        %2632 = vmatprep.subr.bf16.mxu0 %v1834
        %2633 = vmatpush1.bf16.msra.mxu0 %v1833
        %2634 = vmatprep.subr.bf16.mxu0 %v1838
        %2635 = vmatpush1.bf16.msra.mxu0 %v1837
        %2636 = vmatprep.subr.bf16.mxu0 %v1842
        %2637 = vmatpush1.bf16.msra.mxu0 %v1841
        %2638 = vmatprep.subr.bf16.mxu0 %v1846
        %2639 = vmatpush1.bf16.msra.mxu0 %v1845
        %2640 = vmatprep.subr.bf16.mxu0 %v1850
        %2641 = vmatpush1.bf16.msra.mxu0 %v1849
        %2642 = vmatprep.subr.bf16.mxu0 %v1854
        %2643 = vmatpush1.bf16.msra.mxu0 %v1853
        %2644 = vmatprep.subr.bf16.mxu0 %v1858
        %2645 = vmatpush1.bf16.msra.mxu0 %v1857
        %2646 = vmatprep.mubr.bf16.mxu0 %v696
        %2647 = vmatmul.mubr.bf16.gmra.mrb[0].mxu0 %v695
        %v2648 = vpop.f32.mrb[0].mxu0
        %v2649 = vadd.f32 %v2608, %v2648
        %v2650 = vpop.f32.mrb[0].mxu0
        %v2651 = vadd.f32 %v2610, %v2650
        %v2652 = vpop.f32.mrb[0].mxu0
        %v2653 = vpop.f32.mrb[0].mxu0
        %2654 = vdwg.mxu0
        %2655 = vmatprep.subr.bf16.mxu0 %v1862
        %2656 = vmatpush1.bf16.msra.mxu0 %v1861
        %2657 = vmatprep.subr.bf16.mxu0 %v1866
        %2658 = vmatpush1.bf16.msra.mxu0 %v1865
        %2659 = vmatprep.subr.bf16.mxu0 %v1870
        %2660 = vmatpush1.bf16.msra.mxu0 %v1869
        %2661 = vmatprep.subr.bf16.mxu0 %v1874
        %2662 = vmatpush1.bf16.msra.mxu0 %v1873
        %2663 = vmatprep.subr.bf16.mxu0 %v1878
        %2664 = vmatpush1.bf16.msra.mxu0 %v1877
        %2665 = vmatprep.subr.bf16.mxu0 %v1882
        %2666 = vmatpush1.bf16.msra.mxu0 %v1881
        %2667 = vmatprep.subr.bf16.mxu0 %v1886
        %2668 = vmatpush1.bf16.msra.mxu0 %v1885
        %2669 = vmatprep.subr.bf16.mxu0 %v1890
        %2670 = vmatpush1.bf16.msra.mxu0 %v1889
        %2671 = vmatprep.subr.bf16.mxu0 %v1894
        %2672 = vmatpush1.bf16.msra.mxu0 %v1893
        %2673 = vmatprep.subr.bf16.mxu0 %v1898
        %2674 = vmatpush1.bf16.msra.mxu0 %v1897
        %2675 = vmatprep.subr.bf16.mxu0 %v1902
        %2676 = vmatpush1.bf16.msra.mxu0 %v1901
        %2677 = vmatprep.subr.bf16.mxu0 %v1906
        %2678 = vmatpush1.bf16.msra.mxu0 %v1905
        %2679 = vmatprep.subr.bf16.mxu0 %v1910
        %2680 = vmatpush1.bf16.msra.mxu0 %v1909
        %2681 = vmatprep.subr.bf16.mxu0 %v1914
        %2682 = vmatpush1.bf16.msra.mxu0 %v1913
        %2683 = vmatprep.subr.bf16.mxu0 %v1918
        %2684 = vmatpush1.bf16.msra.mxu0 %v1917
        %2685 = vmatprep.subr.bf16.mxu0 %v1922
        %2686 = vmatpush1.bf16.msra.mxu0 %v1921
        %2687 = vmatprep.mubr.bf16.mxu0 %v698
        %2688 = vmatmul.mubr.bf16.gmra.mrb[0].mxu0 %v697
        %v2689 = vpop.f32.mrb[0].mxu0
        %v2690 = vadd.f32 %v2649, %v2689
        %v2691 = vpop.f32.mrb[0].mxu0
        %v2692 = vadd.f32 %v2651, %v2691
        %v2693 = vpop.f32.mrb[0].mxu0
        %v2694 = vpop.f32.mrb[0].mxu0
        %2695 = vdwg.mxu0
        %2696 = vmatprep.subr.bf16.mxu0 %v1926
        %2697 = vmatpush1.bf16.msra.mxu0 %v1925
        %2698 = vmatprep.subr.bf16.mxu0 %v1930
        %2699 = vmatpush1.bf16.msra.mxu0 %v1929
        %2700 = vmatprep.subr.bf16.mxu0 %v1934
        %2701 = vmatpush1.bf16.msra.mxu0 %v1933
        %2702 = vmatprep.subr.bf16.mxu0 %v1938
        %2703 = vmatpush1.bf16.msra.mxu0 %v1937
        %2704 = vmatprep.subr.bf16.mxu0 %v1942
        %2705 = vmatpush1.bf16.msra.mxu0 %v1941
        %2706 = vmatprep.subr.bf16.mxu0 %v1946
        %2707 = vmatpush1.bf16.msra.mxu0 %v1945
        %2708 = vmatprep.subr.bf16.mxu0 %v1950
        %2709 = vmatpush1.bf16.msra.mxu0 %v1949
        %2710 = vmatprep.subr.bf16.mxu0 %v1954
        %2711 = vmatpush1.bf16.msra.mxu0 %v1953
        %2712 = vmatprep.subr.bf16.mxu0 %v1958
        %2713 = vmatpush1.bf16.msra.mxu0 %v1957
        %2714 = vmatprep.subr.bf16.mxu0 %v1962
        %2715 = vmatpush1.bf16.msra.mxu0 %v1961
        %2716 = vmatprep.subr.bf16.mxu0 %v1966
        %2717 = vmatpush1.bf16.msra.mxu0 %v1965
        %2718 = vmatprep.subr.bf16.mxu0 %v1970
        %2719 = vmatpush1.bf16.msra.mxu0 %v1969
        %2720 = vmatprep.subr.bf16.mxu0 %v1974
        %2721 = vmatpush1.bf16.msra.mxu0 %v1973
        %2722 = vmatprep.subr.bf16.mxu0 %v1978
        %2723 = vmatpush1.bf16.msra.mxu0 %v1977
        %2724 = vmatprep.subr.bf16.mxu0 %v1982
        %2725 = vmatpush1.bf16.msra.mxu0 %v1981
        %2726 = vmatprep.subr.bf16.mxu0 %v1986
        %2727 = vmatpush1.bf16.msra.mxu0 %v1985
        %2728 = vmatprep.mubr.bf16.mxu0 %v700
        %2729 = vmatmul.mubr.bf16.gmra.mrb[0].mxu0 %v699
        %v2730 = vpop.f32.mrb[0].mxu0
        %v2731 = vadd.f32 %v2690, %v2730
        %v2732 = vpop.f32.mrb[0].mxu0
        %v2733 = vadd.f32 %v2692, %v2732
        %v2734 = vpop.f32.mrb[0].mxu0
        %v2735 = vpop.f32.mrb[0].mxu0
        %2736 = vdwg.mxu0
        %2737 = vmatprep.subr.bf16.mxu0 %v1990
        %2738 = vmatpush1.bf16.msra.mxu0 %v1989
        %2739 = vmatprep.subr.bf16.mxu0 %v1994
        %2740 = vmatpush1.bf16.msra.mxu0 %v1993
        %2741 = vmatprep.subr.bf16.mxu0 %v1998
        %2742 = vmatpush1.bf16.msra.mxu0 %v1997
        %2743 = vmatprep.subr.bf16.mxu0 %v2002
        %2744 = vmatpush1.bf16.msra.mxu0 %v2001
        %2745 = vmatprep.subr.bf16.mxu0 %v2006
        %2746 = vmatpush1.bf16.msra.mxu0 %v2005
        %2747 = vmatprep.subr.bf16.mxu0 %v2010
        %2748 = vmatpush1.bf16.msra.mxu0 %v2009
        %2749 = vmatprep.subr.bf16.mxu0 %v2014
        %2750 = vmatpush1.bf16.msra.mxu0 %v2013
        %2751 = vmatprep.subr.bf16.mxu0 %v2018
        %2752 = vmatpush1.bf16.msra.mxu0 %v2017
        %2753 = vmatprep.subr.bf16.mxu0 %v2022
        %2754 = vmatpush1.bf16.msra.mxu0 %v2021
        %2755 = vmatprep.subr.bf16.mxu0 %v2026
        %2756 = vmatpush1.bf16.msra.mxu0 %v2025
        %2757 = vmatprep.subr.bf16.mxu0 %v2030
        %2758 = vmatpush1.bf16.msra.mxu0 %v2029
        %2759 = vmatprep.subr.bf16.mxu0 %v2034
        %2760 = vmatpush1.bf16.msra.mxu0 %v2033
        %2761 = vmatprep.subr.bf16.mxu0 %v2038
        %2762 = vmatpush1.bf16.msra.mxu0 %v2037
        %2763 = vmatprep.subr.bf16.mxu0 %v2042
        %2764 = vmatpush1.bf16.msra.mxu0 %v2041
        %2765 = vmatprep.subr.bf16.mxu0 %v2046
        %2766 = vmatpush1.bf16.msra.mxu0 %v2045
        %2767 = vmatprep.subr.bf16.mxu0 %v2050
        %2768 = vmatpush1.bf16.msra.mxu0 %v2049
        %2769 = vmatprep.mubr.bf16.mxu0 %v702
        %2770 = vmatmul.mubr.bf16.gmra.mrb[0].mxu0 %v701
        %v2771 = vpop.f32.mrb[0].mxu0
        %v2772 = vadd.f32 %v2731, %v2771
        %v2773 = vpop.f32.mrb[0].mxu0
        %v2774 = vadd.f32 %v2733, %v2773
        %v2775 = vpop.f32.mrb[0].mxu0
        %v2776 = vpop.f32.mrb[0].mxu0
        %2777 = vdwg.mxu0
        %2778 = vmatprep.subr.bf16.mxu0 %v2054
        %2779 = vmatpush1.bf16.msra.mxu0 %v2053
        %2780 = vmatprep.subr.bf16.mxu0 %v2058
        %2781 = vmatpush1.bf16.msra.mxu0 %v2057
        %2782 = vmatprep.subr.bf16.mxu0 %v2062
        %2783 = vmatpush1.bf16.msra.mxu0 %v2061
        %2784 = vmatprep.subr.bf16.mxu0 %v2066
        %2785 = vmatpush1.bf16.msra.mxu0 %v2065
        %2786 = vmatprep.subr.bf16.mxu0 %v2070
        %2787 = vmatpush1.bf16.msra.mxu0 %v2069
        %2788 = vmatprep.subr.bf16.mxu0 %v2074
        %2789 = vmatpush1.bf16.msra.mxu0 %v2073
        %2790 = vmatprep.subr.bf16.mxu0 %v2078
        %2791 = vmatpush1.bf16.msra.mxu0 %v2077
        %2792 = vmatprep.subr.bf16.mxu0 %v2082
        %2793 = vmatpush1.bf16.msra.mxu0 %v2081
        %2794 = vmatprep.subr.bf16.mxu0 %v2086
        %2795 = vmatpush1.bf16.msra.mxu0 %v2085
        %2796 = vmatprep.subr.bf16.mxu0 %v2090
        %2797 = vmatpush1.bf16.msra.mxu0 %v2089
        %2798 = vmatprep.subr.bf16.mxu0 %v2094
        %2799 = vmatpush1.bf16.msra.mxu0 %v2093
        %2800 = vmatprep.subr.bf16.mxu0 %v2098
        %2801 = vmatpush1.bf16.msra.mxu0 %v2097
        %2802 = vmatprep.subr.bf16.mxu0 %v2102
        %2803 = vmatpush1.bf16.msra.mxu0 %v2101
        %2804 = vmatprep.subr.bf16.mxu0 %v2106
        %2805 = vmatpush1.bf16.msra.mxu0 %v2105
        %2806 = vmatprep.subr.bf16.mxu0 %v2110
        %2807 = vmatpush1.bf16.msra.mxu0 %v2109
        %2808 = vmatprep.subr.bf16.mxu0 %v2114
        %2809 = vmatpush1.bf16.msra.mxu0 %v2113
        %2810 = vmatprep.mubr.bf16.mxu0 %v704
        %2811 = vmatmul.mubr.bf16.gmra.mrb[0].mxu0 %v703
        %v2812 = vpop.f32.mrb[0].mxu0
        %v2813 = vadd.f32 %v2772, %v2812
        %v2814 = vpop.f32.mrb[0].mxu0
        %v2815 = vadd.f32 %v2774, %v2814
        %v2816 = vpop.f32.mrb[0].mxu0
        %v2817 = vpop.f32.mrb[0].mxu0
        %2818 = vdwg.mxu0
        %2819 = vmatprep.subr.bf16.mxu0 %v2118
        %2820 = vmatpush1.bf16.msra.mxu0 %v2117
        %2821 = vmatprep.subr.bf16.mxu0 %v2122
        %2822 = vmatpush1.bf16.msra.mxu0 %v2121
        %2823 = vmatprep.subr.bf16.mxu0 %v2126
        %2824 = vmatpush1.bf16.msra.mxu0 %v2125
        %2825 = vmatprep.subr.bf16.mxu0 %v2130
        %2826 = vmatpush1.bf16.msra.mxu0 %v2129
        %2827 = vmatprep.subr.bf16.mxu0 %v2134
        %2828 = vmatpush1.bf16.msra.mxu0 %v2133
        %2829 = vmatprep.subr.bf16.mxu0 %v2138
        %2830 = vmatpush1.bf16.msra.mxu0 %v2137
        %2831 = vmatprep.subr.bf16.mxu0 %v2142
        %2832 = vmatpush1.bf16.msra.mxu0 %v2141
        %2833 = vmatprep.subr.bf16.mxu0 %v2146
        %2834 = vmatpush1.bf16.msra.mxu0 %v2145
        %2835 = vmatprep.subr.bf16.mxu0 %v2150
        %2836 = vmatpush1.bf16.msra.mxu0 %v2149
        %2837 = vmatprep.subr.bf16.mxu0 %v2154
        %2838 = vmatpush1.bf16.msra.mxu0 %v2153
        %2839 = vmatprep.subr.bf16.mxu0 %v2158
        %2840 = vmatpush1.bf16.msra.mxu0 %v2157
        %2841 = vmatprep.subr.bf16.mxu0 %v2162
        %2842 = vmatpush1.bf16.msra.mxu0 %v2161
        %2843 = vmatprep.subr.bf16.mxu0 %v2166
        %2844 = vmatpush1.bf16.msra.mxu0 %v2165
        %2845 = vmatprep.subr.bf16.mxu0 %v2170
        %2846 = vmatpush1.bf16.msra.mxu0 %v2169
        %2847 = vmatprep.subr.bf16.mxu0 %v2174
        %2848 = vmatpush1.bf16.msra.mxu0 %v2173
        %2849 = vmatprep.subr.bf16.mxu0 %v2178
        %2850 = vmatpush1.bf16.msra.mxu0 %v2177
        %2851 = vmatprep.mubr.bf16.mxu0 %v706
        %2852 = vmatmul.mubr.bf16.gmra.mrb[0].mxu0 %v705
        %v2853 = vpop.f32.mrb[0].mxu0
        %v2854 = vadd.f32 %v2813, %v2853
        %v2855 = vpop.f32.mrb[0].mxu0
        %v2856 = vadd.f32 %v2815, %v2855
        %v2857 = vpop.f32.mrb[0].mxu0
        %v2858 = vpop.f32.mrb[0].mxu0
        %2859 = vdwg.mxu0
        %2860 = vmatprep.subr.bf16.mxu0 %v2182
        %2861 = vmatpush1.bf16.msra.mxu0 %v2181
        %2862 = vmatprep.subr.bf16.mxu0 %v2186
        %2863 = vmatpush1.bf16.msra.mxu0 %v2185
        %2864 = vmatprep.subr.bf16.mxu0 %v2190
        %2865 = vmatpush1.bf16.msra.mxu0 %v2189
        %2866 = vmatprep.subr.bf16.mxu0 %v2194
        %2867 = vmatpush1.bf16.msra.mxu0 %v2193
        %2868 = vmatprep.subr.bf16.mxu0 %v2198
        %2869 = vmatpush1.bf16.msra.mxu0 %v2197
        %2870 = vmatprep.subr.bf16.mxu0 %v2202
        %2871 = vmatpush1.bf16.msra.mxu0 %v2201
        %2872 = vmatprep.subr.bf16.mxu0 %v2206
        %2873 = vmatpush1.bf16.msra.mxu0 %v2205
        %2874 = vmatprep.subr.bf16.mxu0 %v2210
        %2875 = vmatpush1.bf16.msra.mxu0 %v2209
        %2876 = vmatprep.subr.bf16.mxu0 %v2214
        %2877 = vmatpush1.bf16.msra.mxu0 %v2213
        %2878 = vmatprep.subr.bf16.mxu0 %v2218
        %2879 = vmatpush1.bf16.msra.mxu0 %v2217
        %2880 = vmatprep.subr.bf16.mxu0 %v2222
        %2881 = vmatpush1.bf16.msra.mxu0 %v2221
        %2882 = vmatprep.subr.bf16.mxu0 %v2226
        %2883 = vmatpush1.bf16.msra.mxu0 %v2225
        %2884 = vmatprep.subr.bf16.mxu0 %v2230
        %2885 = vmatpush1.bf16.msra.mxu0 %v2229
        %2886 = vmatprep.subr.bf16.mxu0 %v2234
        %2887 = vmatpush1.bf16.msra.mxu0 %v2233
        %2888 = vmatprep.subr.bf16.mxu0 %v2238
        %2889 = vmatpush1.bf16.msra.mxu0 %v2237
        %2890 = vmatprep.subr.bf16.mxu0 %v2242
        %2891 = vmatpush1.bf16.msra.mxu0 %v2241
        %2892 = vmatprep.mubr.bf16.mxu0 %v708
        %2893 = vmatmul.mubr.bf16.gmra.mrb[0].mxu0 %v707
        %v2894 = vpop.f32.mrb[0].mxu0
        %v2895 = vadd.f32 %v2854, %v2894
        %v2896 = vpop.f32.mrb[0].mxu0
        %v2897 = vadd.f32 %v2856, %v2896
        %v2898 = vpop.f32.mrb[0].mxu0
        %v2899 = vpop.f32.mrb[0].mxu0
        %2900 = vdwg.mxu0
        %2901 = vmatprep.subr.bf16.mxu0 %v1224
        %2902 = vmatpush1.bf16.msra.mxu0 %v1223
        %2903 = vmatprep.subr.bf16.mxu0 %v1228
        %2904 = vmatpush1.bf16.msra.mxu0 %v1227
        %2905 = vmatprep.subr.bf16.mxu0 %v1232
        %2906 = vmatpush1.bf16.msra.mxu0 %v1231
        %2907 = vmatprep.subr.bf16.mxu0 %v1236
        %2908 = vmatpush1.bf16.msra.mxu0 %v1235
        %2909 = vmatprep.subr.bf16.mxu0 %v1240
        %2910 = vmatpush1.bf16.msra.mxu0 %v1239
        %2911 = vmatprep.subr.bf16.mxu0 %v1244
        %2912 = vmatpush1.bf16.msra.mxu0 %v1243
        %2913 = vmatprep.subr.bf16.mxu0 %v1248
        %2914 = vmatpush1.bf16.msra.mxu0 %v1247
        %2915 = vmatprep.subr.bf16.mxu0 %v1252
        %2916 = vmatpush1.bf16.msra.mxu0 %v1251
        %2917 = vmatprep.subr.bf16.mxu0 %v1256
        %2918 = vmatpush1.bf16.msra.mxu0 %v1255
        %2919 = vmatprep.subr.bf16.mxu0 %v1260
        %2920 = vmatpush1.bf16.msra.mxu0 %v1259
        %2921 = vmatprep.subr.bf16.mxu0 %v1264
        %2922 = vmatpush1.bf16.msra.mxu0 %v1263
        %2923 = vmatprep.subr.bf16.mxu0 %v1268
        %2924 = vmatpush1.bf16.msra.mxu0 %v1267
        %2925 = vmatprep.subr.bf16.mxu0 %v1272
        %2926 = vmatpush1.bf16.msra.mxu0 %v1271
        %2927 = vmatprep.subr.bf16.mxu0 %v1276
        %2928 = vmatpush1.bf16.msra.mxu0 %v1275
        %2929 = vmatprep.subr.bf16.mxu0 %v1280
        %2930 = vmatpush1.bf16.msra.mxu0 %v1279
        %2931 = vmatprep.subr.bf16.mxu0 %v1284
        %2932 = vmatpush1.bf16.msra.mxu0 %v1283
        %2933 = vmatprep.mubr.bf16.mxu0 %v678
        %2934 = vmatmul.mubr.bf16.gmra.mrb[0].mxu0 %v677
        %v2935 = vpop.f32.mrb[0].mxu0
        %v2936 = vadd.f32 0.0, %v2935
        %v2937 = vpop.f32.mrb[0].mxu0
        %v2938 = vadd.f32 0.0, %v2937
        %v2939 = vpop.f32.mrb[0].mxu0
        %v2940 = vpop.f32.mrb[0].mxu0
        %2941 = vdwg.mxu0
        %2942 = vmatprep.subr.bf16.mxu0 %v1288
        %2943 = vmatpush1.bf16.msra.mxu0 %v1287
        %2944 = vmatprep.subr.bf16.mxu0 %v1292
        %2945 = vmatpush1.bf16.msra.mxu0 %v1291
        %2946 = vmatprep.subr.bf16.mxu0 %v1296
        %2947 = vmatpush1.bf16.msra.mxu0 %v1295
        %2948 = vmatprep.subr.bf16.mxu0 %v1300
        %2949 = vmatpush1.bf16.msra.mxu0 %v1299
        %2950 = vmatprep.subr.bf16.mxu0 %v1304
        %2951 = vmatpush1.bf16.msra.mxu0 %v1303
        %2952 = vmatprep.subr.bf16.mxu0 %v1308
        %2953 = vmatpush1.bf16.msra.mxu0 %v1307
        %2954 = vmatprep.subr.bf16.mxu0 %v1312
        %2955 = vmatpush1.bf16.msra.mxu0 %v1311
        %2956 = vmatprep.subr.bf16.mxu0 %v1316
        %2957 = vmatpush1.bf16.msra.mxu0 %v1315
        %2958 = vmatprep.subr.bf16.mxu0 %v1320
        %2959 = vmatpush1.bf16.msra.mxu0 %v1319
        %2960 = vmatprep.subr.bf16.mxu0 %v1324
        %2961 = vmatpush1.bf16.msra.mxu0 %v1323
        %2962 = vmatprep.subr.bf16.mxu0 %v1328
        %2963 = vmatpush1.bf16.msra.mxu0 %v1327
        %2964 = vmatprep.subr.bf16.mxu0 %v1332
        %2965 = vmatpush1.bf16.msra.mxu0 %v1331
        %2966 = vmatprep.subr.bf16.mxu0 %v1336
        %2967 = vmatpush1.bf16.msra.mxu0 %v1335
        %2968 = vmatprep.subr.bf16.mxu0 %v1340
        %2969 = vmatpush1.bf16.msra.mxu0 %v1339
        %2970 = vmatprep.subr.bf16.mxu0 %v1344
        %2971 = vmatpush1.bf16.msra.mxu0 %v1343
        %2972 = vmatprep.subr.bf16.mxu0 %v1348
        %2973 = vmatpush1.bf16.msra.mxu0 %v1347
        %2974 = vmatprep.mubr.bf16.mxu0 %v680
        %2975 = vmatmul.mubr.bf16.gmra.mrb[0].mxu0 %v679
        %v2976 = vpop.f32.mrb[0].mxu0
        %v2977 = vadd.f32 %v2936, %v2976
        %v2978 = vpop.f32.mrb[0].mxu0
        %v2979 = vadd.f32 %v2938, %v2978
        %v2980 = vpop.f32.mrb[0].mxu0
        %v2981 = vpop.f32.mrb[0].mxu0
        %2982 = vdwg.mxu0
        %2983 = vmatprep.subr.bf16.mxu0 %v1352
        %2984 = vmatpush1.bf16.msra.mxu0 %v1351
        %2985 = vmatprep.subr.bf16.mxu0 %v1356
        %2986 = vmatpush1.bf16.msra.mxu0 %v1355
        %2987 = vmatprep.subr.bf16.mxu0 %v1360
        %2988 = vmatpush1.bf16.msra.mxu0 %v1359
        %2989 = vmatprep.subr.bf16.mxu0 %v1364
        %2990 = vmatpush1.bf16.msra.mxu0 %v1363
        %2991 = vmatprep.subr.bf16.mxu0 %v1368
        %2992 = vmatpush1.bf16.msra.mxu0 %v1367
        %2993 = vmatprep.subr.bf16.mxu0 %v1372
        %2994 = vmatpush1.bf16.msra.mxu0 %v1371
        %2995 = vmatprep.subr.bf16.mxu0 %v1376
        %2996 = vmatpush1.bf16.msra.mxu0 %v1375
        %2997 = vmatprep.subr.bf16.mxu0 %v1380
        %2998 = vmatpush1.bf16.msra.mxu0 %v1379
        %2999 = vmatprep.subr.bf16.mxu0 %v1384
        %3000 = vmatpush1.bf16.msra.mxu0 %v1383
        %3001 = vmatprep.subr.bf16.mxu0 %v1388
        %3002 = vmatpush1.bf16.msra.mxu0 %v1387
        %3003 = vmatprep.subr.bf16.mxu0 %v1392
        %3004 = vmatpush1.bf16.msra.mxu0 %v1391
        %3005 = vmatprep.subr.bf16.mxu0 %v1396
        %3006 = vmatpush1.bf16.msra.mxu0 %v1395
        %3007 = vmatprep.subr.bf16.mxu0 %v1400
        %3008 = vmatpush1.bf16.msra.mxu0 %v1399
        %3009 = vmatprep.subr.bf16.mxu0 %v1404
        %3010 = vmatpush1.bf16.msra.mxu0 %v1403
        %3011 = vmatprep.subr.bf16.mxu0 %v1408
        %3012 = vmatpush1.bf16.msra.mxu0 %v1407
        %3013 = vmatprep.subr.bf16.mxu0 %v1412
        %3014 = vmatpush1.bf16.msra.mxu0 %v1411
        %3015 = vmatprep.mubr.bf16.mxu0 %v682
        %3016 = vmatmul.mubr.bf16.gmra.mrb[0].mxu0 %v681
        %v3017 = vpop.f32.mrb[0].mxu0
        %v3018 = vadd.f32 %v2977, %v3017
        %v3019 = vpop.f32.mrb[0].mxu0
        %v3020 = vadd.f32 %v2979, %v3019
        %v3021 = vpop.f32.mrb[0].mxu0
        %v3022 = vpop.f32.mrb[0].mxu0
        %3023 = vdwg.mxu0
        %3024 = vmatprep.subr.bf16.mxu0 %v1416
        %3025 = vmatpush1.bf16.msra.mxu0 %v1415
        %3026 = vmatprep.subr.bf16.mxu0 %v1420
        %3027 = vmatpush1.bf16.msra.mxu0 %v1419
        %3028 = vmatprep.subr.bf16.mxu0 %v1424
        %3029 = vmatpush1.bf16.msra.mxu0 %v1423
        %3030 = vmatprep.subr.bf16.mxu0 %v1428
        %3031 = vmatpush1.bf16.msra.mxu0 %v1427
        %3032 = vmatprep.subr.bf16.mxu0 %v1432
        %3033 = vmatpush1.bf16.msra.mxu0 %v1431
        %3034 = vmatprep.subr.bf16.mxu0 %v1436
        %3035 = vmatpush1.bf16.msra.mxu0 %v1435
        %3036 = vmatprep.subr.bf16.mxu0 %v1440
        %3037 = vmatpush1.bf16.msra.mxu0 %v1439
        %3038 = vmatprep.subr.bf16.mxu0 %v1444
        %3039 = vmatpush1.bf16.msra.mxu0 %v1443
        %3040 = vmatprep.subr.bf16.mxu0 %v1448
        %3041 = vmatpush1.bf16.msra.mxu0 %v1447
        %3042 = vmatprep.subr.bf16.mxu0 %v1452
        %3043 = vmatpush1.bf16.msra.mxu0 %v1451
        %3044 = vmatprep.subr.bf16.mxu0 %v1456
        %3045 = vmatpush1.bf16.msra.mxu0 %v1455
        %3046 = vmatprep.subr.bf16.mxu0 %v1460
        %3047 = vmatpush1.bf16.msra.mxu0 %v1459
        %3048 = vmatprep.subr.bf16.mxu0 %v1464
        %3049 = vmatpush1.bf16.msra.mxu0 %v1463
        %3050 = vmatprep.subr.bf16.mxu0 %v1468
        %3051 = vmatpush1.bf16.msra.mxu0 %v1467
        %3052 = vmatprep.subr.bf16.mxu0 %v1472
        %3053 = vmatpush1.bf16.msra.mxu0 %v1471
        %3054 = vmatprep.subr.bf16.mxu0 %v1476
        %3055 = vmatpush1.bf16.msra.mxu0 %v1475
        %3056 = vmatprep.mubr.bf16.mxu0 %v684
        %3057 = vmatmul.mubr.bf16.gmra.mrb[0].mxu0 %v683
        %v3058 = vpop.f32.mrb[0].mxu0
        %v3059 = vadd.f32 %v3018, %v3058
        %v3060 = vpop.f32.mrb[0].mxu0
        %v3061 = vadd.f32 %v3020, %v3060
        %v3062 = vpop.f32.mrb[0].mxu0
        %v3063 = vpop.f32.mrb[0].mxu0
        %3064 = vdwg.mxu0
        %3065 = vmatprep.subr.bf16.mxu0 %v1480
        %3066 = vmatpush1.bf16.msra.mxu0 %v1479
        %3067 = vmatprep.subr.bf16.mxu0 %v1484
        %3068 = vmatpush1.bf16.msra.mxu0 %v1483
        %3069 = vmatprep.subr.bf16.mxu0 %v1488
        %3070 = vmatpush1.bf16.msra.mxu0 %v1487
        %3071 = vmatprep.subr.bf16.mxu0 %v1492
        %3072 = vmatpush1.bf16.msra.mxu0 %v1491
        %3073 = vmatprep.subr.bf16.mxu0 %v1496
        %3074 = vmatpush1.bf16.msra.mxu0 %v1495
        %3075 = vmatprep.subr.bf16.mxu0 %v1500
        %3076 = vmatpush1.bf16.msra.mxu0 %v1499
        %3077 = vmatprep.subr.bf16.mxu0 %v1504
        %3078 = vmatpush1.bf16.msra.mxu0 %v1503
        %3079 = vmatprep.subr.bf16.mxu0 %v1508
        %3080 = vmatpush1.bf16.msra.mxu0 %v1507
        %3081 = vmatprep.subr.bf16.mxu0 %v1512
        %3082 = vmatpush1.bf16.msra.mxu0 %v1511
        %3083 = vmatprep.subr.bf16.mxu0 %v1516
        %3084 = vmatpush1.bf16.msra.mxu0 %v1515
        %3085 = vmatprep.subr.bf16.mxu0 %v1520
        %3086 = vmatpush1.bf16.msra.mxu0 %v1519
        %3087 = vmatprep.subr.bf16.mxu0 %v1524
        %3088 = vmatpush1.bf16.msra.mxu0 %v1523
        %3089 = vmatprep.subr.bf16.mxu0 %v1528
        %3090 = vmatpush1.bf16.msra.mxu0 %v1527
        %3091 = vmatprep.subr.bf16.mxu0 %v1532
        %3092 = vmatpush1.bf16.msra.mxu0 %v1531
        %3093 = vmatprep.subr.bf16.mxu0 %v1536
        %3094 = vmatpush1.bf16.msra.mxu0 %v1535
        %3095 = vmatprep.subr.bf16.mxu0 %v1540
        %3096 = vmatpush1.bf16.msra.mxu0 %v1539
        %3097 = vmatprep.mubr.bf16.mxu0 %v686
        %3098 = vmatmul.mubr.bf16.gmra.mrb[0].mxu0 %v685
        %v3099 = vpop.f32.mrb[0].mxu0
        %v3100 = vadd.f32 %v3059, %v3099
        %v3101 = vpop.f32.mrb[0].mxu0
        %v3102 = vadd.f32 %v3061, %v3101
        %v3103 = vpop.f32.mrb[0].mxu0
        %v3104 = vpop.f32.mrb[0].mxu0
        %3105 = vdwg.mxu0
        %3106 = vmatprep.subr.bf16.mxu0 %v1544
        %3107 = vmatpush1.bf16.msra.mxu0 %v1543
        %3108 = vmatprep.subr.bf16.mxu0 %v1548
        %3109 = vmatpush1.bf16.msra.mxu0 %v1547
        %3110 = vmatprep.subr.bf16.mxu0 %v1552
        %3111 = vmatpush1.bf16.msra.mxu0 %v1551
        %3112 = vmatprep.subr.bf16.mxu0 %v1556
        %3113 = vmatpush1.bf16.msra.mxu0 %v1555
        %3114 = vmatprep.subr.bf16.mxu0 %v1560
        %3115 = vmatpush1.bf16.msra.mxu0 %v1559
        %3116 = vmatprep.subr.bf16.mxu0 %v1564
        %3117 = vmatpush1.bf16.msra.mxu0 %v1563
        %3118 = vmatprep.subr.bf16.mxu0 %v1568
        %3119 = vmatpush1.bf16.msra.mxu0 %v1567
        %3120 = vmatprep.subr.bf16.mxu0 %v1572
        %3121 = vmatpush1.bf16.msra.mxu0 %v1571
        %3122 = vmatprep.subr.bf16.mxu0 %v1576
        %3123 = vmatpush1.bf16.msra.mxu0 %v1575
        %3124 = vmatprep.subr.bf16.mxu0 %v1580
        %3125 = vmatpush1.bf16.msra.mxu0 %v1579
        %3126 = vmatprep.subr.bf16.mxu0 %v1584
        %3127 = vmatpush1.bf16.msra.mxu0 %v1583
        %3128 = vmatprep.subr.bf16.mxu0 %v1588
        %3129 = vmatpush1.bf16.msra.mxu0 %v1587
        %3130 = vmatprep.subr.bf16.mxu0 %v1592
        %3131 = vmatpush1.bf16.msra.mxu0 %v1591
        %3132 = vmatprep.subr.bf16.mxu0 %v1596
        %3133 = vmatpush1.bf16.msra.mxu0 %v1595
        %3134 = vmatprep.subr.bf16.mxu0 %v1600
        %3135 = vmatpush1.bf16.msra.mxu0 %v1599
        %3136 = vmatprep.subr.bf16.mxu0 %v1604
        %3137 = vmatpush1.bf16.msra.mxu0 %v1603
        %3138 = vmatprep.mubr.bf16.mxu0 %v688
        %3139 = vmatmul.mubr.bf16.gmra.mrb[0].mxu0 %v687
        %v3140 = vpop.f32.mrb[0].mxu0
        %v3141 = vadd.f32 %v3100, %v3140
        %v3142 = vpop.f32.mrb[0].mxu0
        %v3143 = vadd.f32 %v3102, %v3142
        %v3144 = vpop.f32.mrb[0].mxu0
        %v3145 = vpop.f32.mrb[0].mxu0
        %3146 = vdwg.mxu0
        %3147 = vmatprep.subr.bf16.mxu0 %v1608
        %3148 = vmatpush1.bf16.msra.mxu0 %v1607
        %3149 = vmatprep.subr.bf16.mxu0 %v1612
        %3150 = vmatpush1.bf16.msra.mxu0 %v1611
        %3151 = vmatprep.subr.bf16.mxu0 %v1616
        %3152 = vmatpush1.bf16.msra.mxu0 %v1615
        %3153 = vmatprep.subr.bf16.mxu0 %v1620
        %3154 = vmatpush1.bf16.msra.mxu0 %v1619
        %3155 = vmatprep.subr.bf16.mxu0 %v1624
        %3156 = vmatpush1.bf16.msra.mxu0 %v1623
        %3157 = vmatprep.subr.bf16.mxu0 %v1628
        %3158 = vmatpush1.bf16.msra.mxu0 %v1627
        %3159 = vmatprep.subr.bf16.mxu0 %v1632
        %3160 = vmatpush1.bf16.msra.mxu0 %v1631
        %3161 = vmatprep.subr.bf16.mxu0 %v1636
        %3162 = vmatpush1.bf16.msra.mxu0 %v1635
        %3163 = vmatprep.subr.bf16.mxu0 %v1640
        %3164 = vmatpush1.bf16.msra.mxu0 %v1639
        %3165 = vmatprep.subr.bf16.mxu0 %v1644
        %3166 = vmatpush1.bf16.msra.mxu0 %v1643
        %3167 = vmatprep.subr.bf16.mxu0 %v1648
        %3168 = vmatpush1.bf16.msra.mxu0 %v1647
        %3169 = vmatprep.subr.bf16.mxu0 %v1652
        %3170 = vmatpush1.bf16.msra.mxu0 %v1651
        %3171 = vmatprep.subr.bf16.mxu0 %v1656
        %3172 = vmatpush1.bf16.msra.mxu0 %v1655
        %3173 = vmatprep.subr.bf16.mxu0 %v1660
        %3174 = vmatpush1.bf16.msra.mxu0 %v1659
        %3175 = vmatprep.subr.bf16.mxu0 %v1664
        %3176 = vmatpush1.bf16.msra.mxu0 %v1663
        %3177 = vmatprep.subr.bf16.mxu0 %v1668
        %3178 = vmatpush1.bf16.msra.mxu0 %v1667
        %3179 = vmatprep.mubr.bf16.mxu0 %v690
        %3180 = vmatmul.mubr.bf16.gmra.mrb[0].mxu0 %v689
        %v3181 = vpop.f32.mrb[0].mxu0
        %v3182 = vadd.f32 %v3141, %v3181
        %v3183 = vpop.f32.mrb[0].mxu0
        %v3184 = vadd.f32 %v3143, %v3183
        %v3185 = vpop.f32.mrb[0].mxu0
        %v3186 = vpop.f32.mrb[0].mxu0
        %3187 = vdwg.mxu0
        %3188 = vmatprep.subr.bf16.mxu0 %v1672
        %3189 = vmatpush1.bf16.msra.mxu0 %v1671
        %3190 = vmatprep.subr.bf16.mxu0 %v1676
        %3191 = vmatpush1.bf16.msra.mxu0 %v1675
        %3192 = vmatprep.subr.bf16.mxu0 %v1680
        %3193 = vmatpush1.bf16.msra.mxu0 %v1679
        %3194 = vmatprep.subr.bf16.mxu0 %v1684
        %3195 = vmatpush1.bf16.msra.mxu0 %v1683
        %3196 = vmatprep.subr.bf16.mxu0 %v1688
        %3197 = vmatpush1.bf16.msra.mxu0 %v1687
        %3198 = vmatprep.subr.bf16.mxu0 %v1692
        %3199 = vmatpush1.bf16.msra.mxu0 %v1691
        %3200 = vmatprep.subr.bf16.mxu0 %v1696
        %3201 = vmatpush1.bf16.msra.mxu0 %v1695
        %3202 = vmatprep.subr.bf16.mxu0 %v1700
        %3203 = vmatpush1.bf16.msra.mxu0 %v1699
        %3204 = vmatprep.subr.bf16.mxu0 %v1704
        %3205 = vmatpush1.bf16.msra.mxu0 %v1703
        %3206 = vmatprep.subr.bf16.mxu0 %v1708
        %3207 = vmatpush1.bf16.msra.mxu0 %v1707
        %3208 = vmatprep.subr.bf16.mxu0 %v1712
        %3209 = vmatpush1.bf16.msra.mxu0 %v1711
        %3210 = vmatprep.subr.bf16.mxu0 %v1716
        %3211 = vmatpush1.bf16.msra.mxu0 %v1715
        %3212 = vmatprep.subr.bf16.mxu0 %v1720
        %3213 = vmatpush1.bf16.msra.mxu0 %v1719
        %3214 = vmatprep.subr.bf16.mxu0 %v1724
        %3215 = vmatpush1.bf16.msra.mxu0 %v1723
        %3216 = vmatprep.subr.bf16.mxu0 %v1728
        %3217 = vmatpush1.bf16.msra.mxu0 %v1727
        %3218 = vmatprep.subr.bf16.mxu0 %v1732
        %3219 = vmatpush1.bf16.msra.mxu0 %v1731
        %3220 = vmatprep.mubr.bf16.mxu0 %v692
        %3221 = vmatmul.mubr.bf16.gmra.mrb[0].mxu0 %v691
        %v3222 = vpop.f32.mrb[0].mxu0
        %v3223 = vadd.f32 %v3182, %v3222
        %v3224 = vpop.f32.mrb[0].mxu0
        %v3225 = vadd.f32 %v3184, %v3224
        %v3226 = vpop.f32.mrb[0].mxu0
        %v3227 = vpop.f32.mrb[0].mxu0
        %3228 = vdwg.mxu0
        %3229 = vmatprep.subr.bf16.mxu0 %v1736
        %3230 = vmatpush1.bf16.msra.mxu0 %v1735
        %3231 = vmatprep.subr.bf16.mxu0 %v1740
        %3232 = vmatpush1.bf16.msra.mxu0 %v1739
        %3233 = vmatprep.subr.bf16.mxu0 %v1744
        %3234 = vmatpush1.bf16.msra.mxu0 %v1743
        %3235 = vmatprep.subr.bf16.mxu0 %v1748
        %3236 = vmatpush1.bf16.msra.mxu0 %v1747
        %3237 = vmatprep.subr.bf16.mxu0 %v1752
        %3238 = vmatpush1.bf16.msra.mxu0 %v1751
        %3239 = vmatprep.subr.bf16.mxu0 %v1756
        %3240 = vmatpush1.bf16.msra.mxu0 %v1755
        %3241 = vmatprep.subr.bf16.mxu0 %v1760
        %3242 = vmatpush1.bf16.msra.mxu0 %v1759
        %3243 = vmatprep.subr.bf16.mxu0 %v1764
        %3244 = vmatpush1.bf16.msra.mxu0 %v1763
        %3245 = vmatprep.subr.bf16.mxu0 %v1768
        %3246 = vmatpush1.bf16.msra.mxu0 %v1767
        %3247 = vmatprep.subr.bf16.mxu0 %v1772
        %3248 = vmatpush1.bf16.msra.mxu0 %v1771
        %3249 = vmatprep.subr.bf16.mxu0 %v1776
        %3250 = vmatpush1.bf16.msra.mxu0 %v1775
        %3251 = vmatprep.subr.bf16.mxu0 %v1780
        %3252 = vmatpush1.bf16.msra.mxu0 %v1779
        %3253 = vmatprep.subr.bf16.mxu0 %v1784
        %3254 = vmatpush1.bf16.msra.mxu0 %v1783
        %3255 = vmatprep.subr.bf16.mxu0 %v1788
        %3256 = vmatpush1.bf16.msra.mxu0 %v1787
        %3257 = vmatprep.subr.bf16.mxu0 %v1792
        %3258 = vmatpush1.bf16.msra.mxu0 %v1791
        %3259 = vmatprep.subr.bf16.mxu0 %v1796
        %3260 = vmatpush1.bf16.msra.mxu0 %v1795
        %3261 = vmatprep.mubr.bf16.mxu0 %v694
        %3262 = vmatmul.mubr.bf16.gmra.mrb[0].mxu0 %v693
        %v3263 = vpop.f32.mrb[0].mxu0
        %v3264 = vadd.f32 %v3223, %v3263
        %v3265 = vpop.f32.mrb[0].mxu0
        %v3266 = vadd.f32 %v3225, %v3265
        %v3267 = vpop.f32.mrb[0].mxu0
        %v3268 = vpop.f32.mrb[0].mxu0
        %3269 = vdwg.mxu0
        %3270 = vmatprep.subr.bf16.mxu0 %v1800
        %3271 = vmatpush1.bf16.msra.mxu0 %v1799
        %3272 = vmatprep.subr.bf16.mxu0 %v1804
        %3273 = vmatpush1.bf16.msra.mxu0 %v1803
        %3274 = vmatprep.subr.bf16.mxu0 %v1808
        %3275 = vmatpush1.bf16.msra.mxu0 %v1807
        %3276 = vmatprep.subr.bf16.mxu0 %v1812
        %3277 = vmatpush1.bf16.msra.mxu0 %v1811
        %3278 = vmatprep.subr.bf16.mxu0 %v1816
        %3279 = vmatpush1.bf16.msra.mxu0 %v1815
        %3280 = vmatprep.subr.bf16.mxu0 %v1820
        %3281 = vmatpush1.bf16.msra.mxu0 %v1819
        %3282 = vmatprep.subr.bf16.mxu0 %v1824
        %3283 = vmatpush1.bf16.msra.mxu0 %v1823
        %3284 = vmatprep.subr.bf16.mxu0 %v1828
        %3285 = vmatpush1.bf16.msra.mxu0 %v1827
        %3286 = vmatprep.subr.bf16.mxu0 %v1832
        %3287 = vmatpush1.bf16.msra.mxu0 %v1831
        %3288 = vmatprep.subr.bf16.mxu0 %v1836
        %3289 = vmatpush1.bf16.msra.mxu0 %v1835
        %3290 = vmatprep.subr.bf16.mxu0 %v1840
        %3291 = vmatpush1.bf16.msra.mxu0 %v1839
        %3292 = vmatprep.subr.bf16.mxu0 %v1844
        %3293 = vmatpush1.bf16.msra.mxu0 %v1843
        %3294 = vmatprep.subr.bf16.mxu0 %v1848
        %3295 = vmatpush1.bf16.msra.mxu0 %v1847
        %3296 = vmatprep.subr.bf16.mxu0 %v1852
        %3297 = vmatpush1.bf16.msra.mxu0 %v1851
        %3298 = vmatprep.subr.bf16.mxu0 %v1856
        %3299 = vmatpush1.bf16.msra.mxu0 %v1855
        %3300 = vmatprep.subr.bf16.mxu0 %v1860
        %3301 = vmatpush1.bf16.msra.mxu0 %v1859
        %3302 = vmatprep.mubr.bf16.mxu0 %v696
        %3303 = vmatmul.mubr.bf16.gmra.mrb[0].mxu0 %v695
        %v3304 = vpop.f32.mrb[0].mxu0
        %v3305 = vadd.f32 %v3264, %v3304
        %v3306 = vpop.f32.mrb[0].mxu0
        %v3307 = vadd.f32 %v3266, %v3306
        %v3308 = vpop.f32.mrb[0].mxu0
        %v3309 = vpop.f32.mrb[0].mxu0
        %3310 = vdwg.mxu0
        %3311 = vmatprep.subr.bf16.mxu0 %v1864
        %3312 = vmatpush1.bf16.msra.mxu0 %v1863
        %3313 = vmatprep.subr.bf16.mxu0 %v1868
        %3314 = vmatpush1.bf16.msra.mxu0 %v1867
        %3315 = vmatprep.subr.bf16.mxu0 %v1872
        %3316 = vmatpush1.bf16.msra.mxu0 %v1871
        %3317 = vmatprep.subr.bf16.mxu0 %v1876
        %3318 = vmatpush1.bf16.msra.mxu0 %v1875
        %3319 = vmatprep.subr.bf16.mxu0 %v1880
        %3320 = vmatpush1.bf16.msra.mxu0 %v1879
        %3321 = vmatprep.subr.bf16.mxu0 %v1884
        %3322 = vmatpush1.bf16.msra.mxu0 %v1883
        %3323 = vmatprep.subr.bf16.mxu0 %v1888
        %3324 = vmatpush1.bf16.msra.mxu0 %v1887
        %3325 = vmatprep.subr.bf16.mxu0 %v1892
        %3326 = vmatpush1.bf16.msra.mxu0 %v1891
        %3327 = vmatprep.subr.bf16.mxu0 %v1896
        %3328 = vmatpush1.bf16.msra.mxu0 %v1895
        %3329 = vmatprep.subr.bf16.mxu0 %v1900
        %3330 = vmatpush1.bf16.msra.mxu0 %v1899
        %3331 = vmatprep.subr.bf16.mxu0 %v1904
        %3332 = vmatpush1.bf16.msra.mxu0 %v1903
        %3333 = vmatprep.subr.bf16.mxu0 %v1908
        %3334 = vmatpush1.bf16.msra.mxu0 %v1907
        %3335 = vmatprep.subr.bf16.mxu0 %v1912
        %3336 = vmatpush1.bf16.msra.mxu0 %v1911
        %3337 = vmatprep.subr.bf16.mxu0 %v1916
        %3338 = vmatpush1.bf16.msra.mxu0 %v1915
        %3339 = vmatprep.subr.bf16.mxu0 %v1920
        %3340 = vmatpush1.bf16.msra.mxu0 %v1919
        %3341 = vmatprep.subr.bf16.mxu0 %v1924
        %3342 = vmatpush1.bf16.msra.mxu0 %v1923
        %3343 = vmatprep.mubr.bf16.mxu0 %v698
        %3344 = vmatmul.mubr.bf16.gmra.mrb[0].mxu0 %v697
        %v3345 = vpop.f32.mrb[0].mxu0
        %v3346 = vadd.f32 %v3305, %v3345
        %v3347 = vpop.f32.mrb[0].mxu0
        %v3348 = vadd.f32 %v3307, %v3347
        %v3349 = vpop.f32.mrb[0].mxu0
        %v3350 = vpop.f32.mrb[0].mxu0
        %3351 = vdwg.mxu0
        %3352 = vmatprep.subr.bf16.mxu0 %v1928
        %3353 = vmatpush1.bf16.msra.mxu0 %v1927
        %3354 = vmatprep.subr.bf16.mxu0 %v1932
        %3355 = vmatpush1.bf16.msra.mxu0 %v1931
        %3356 = vmatprep.subr.bf16.mxu0 %v1936
        %3357 = vmatpush1.bf16.msra.mxu0 %v1935
        %3358 = vmatprep.subr.bf16.mxu0 %v1940
        %3359 = vmatpush1.bf16.msra.mxu0 %v1939
        %3360 = vmatprep.subr.bf16.mxu0 %v1944
        %3361 = vmatpush1.bf16.msra.mxu0 %v1943
        %3362 = vmatprep.subr.bf16.mxu0 %v1948
        %3363 = vmatpush1.bf16.msra.mxu0 %v1947
        %3364 = vmatprep.subr.bf16.mxu0 %v1952
        %3365 = vmatpush1.bf16.msra.mxu0 %v1951
        %3366 = vmatprep.subr.bf16.mxu0 %v1956
        %3367 = vmatpush1.bf16.msra.mxu0 %v1955
        %3368 = vmatprep.subr.bf16.mxu0 %v1960
        %3369 = vmatpush1.bf16.msra.mxu0 %v1959
        %3370 = vmatprep.subr.bf16.mxu0 %v1964
        %3371 = vmatpush1.bf16.msra.mxu0 %v1963
        %3372 = vmatprep.subr.bf16.mxu0 %v1968
        %3373 = vmatpush1.bf16.msra.mxu0 %v1967
        %3374 = vmatprep.subr.bf16.mxu0 %v1972
        %3375 = vmatpush1.bf16.msra.mxu0 %v1971
        %3376 = vmatprep.subr.bf16.mxu0 %v1976
        %3377 = vmatpush1.bf16.msra.mxu0 %v1975
        %3378 = vmatprep.subr.bf16.mxu0 %v1980
        %3379 = vmatpush1.bf16.msra.mxu0 %v1979
        %3380 = vmatprep.subr.bf16.mxu0 %v1984
        %3381 = vmatpush1.bf16.msra.mxu0 %v1983
        %3382 = vmatprep.subr.bf16.mxu0 %v1988
        %3383 = vmatpush1.bf16.msra.mxu0 %v1987
        %3384 = vmatprep.mubr.bf16.mxu0 %v700
        %3385 = vmatmul.mubr.bf16.gmra.mrb[0].mxu0 %v699
        %v3386 = vpop.f32.mrb[0].mxu0
        %v3387 = vadd.f32 %v3346, %v3386
        %v3388 = vpop.f32.mrb[0].mxu0
        %v3389 = vadd.f32 %v3348, %v3388
        %v3390 = vpop.f32.mrb[0].mxu0
        %v3391 = vpop.f32.mrb[0].mxu0
        %3392 = vdwg.mxu0
        %3393 = vmatprep.subr.bf16.mxu0 %v1992
        %3394 = vmatpush1.bf16.msra.mxu0 %v1991
        %3395 = vmatprep.subr.bf16.mxu0 %v1996
        %3396 = vmatpush1.bf16.msra.mxu0 %v1995
        %3397 = vmatprep.subr.bf16.mxu0 %v2000
        %3398 = vmatpush1.bf16.msra.mxu0 %v1999
        %3399 = vmatprep.subr.bf16.mxu0 %v2004
        %3400 = vmatpush1.bf16.msra.mxu0 %v2003
        %3401 = vmatprep.subr.bf16.mxu0 %v2008
        %3402 = vmatpush1.bf16.msra.mxu0 %v2007
        %3403 = vmatprep.subr.bf16.mxu0 %v2012
        %3404 = vmatpush1.bf16.msra.mxu0 %v2011
        %3405 = vmatprep.subr.bf16.mxu0 %v2016
        %3406 = vmatpush1.bf16.msra.mxu0 %v2015
        %3407 = vmatprep.subr.bf16.mxu0 %v2020
        %3408 = vmatpush1.bf16.msra.mxu0 %v2019
        %3409 = vmatprep.subr.bf16.mxu0 %v2024
        %3410 = vmatpush1.bf16.msra.mxu0 %v2023
        %3411 = vmatprep.subr.bf16.mxu0 %v2028
        %3412 = vmatpush1.bf16.msra.mxu0 %v2027
        %3413 = vmatprep.subr.bf16.mxu0 %v2032
        %3414 = vmatpush1.bf16.msra.mxu0 %v2031
        %3415 = vmatprep.subr.bf16.mxu0 %v2036
        %3416 = vmatpush1.bf16.msra.mxu0 %v2035
        %3417 = vmatprep.subr.bf16.mxu0 %v2040
        %3418 = vmatpush1.bf16.msra.mxu0 %v2039
        %3419 = vmatprep.subr.bf16.mxu0 %v2044
        %3420 = vmatpush1.bf16.msra.mxu0 %v2043
        %3421 = vmatprep.subr.bf16.mxu0 %v2048
        %3422 = vmatpush1.bf16.msra.mxu0 %v2047
        %3423 = vmatprep.subr.bf16.mxu0 %v2052
        %3424 = vmatpush1.bf16.msra.mxu0 %v2051
        %3425 = vmatprep.mubr.bf16.mxu0 %v702
        %3426 = vmatmul.mubr.bf16.gmra.mrb[0].mxu0 %v701
        %v3427 = vpop.f32.mrb[0].mxu0
        %v3428 = vadd.f32 %v3387, %v3427
        %v3429 = vpop.f32.mrb[0].mxu0
        %v3430 = vadd.f32 %v3389, %v3429
        %v3431 = vpop.f32.mrb[0].mxu0
        %v3432 = vpop.f32.mrb[0].mxu0
        %3433 = vdwg.mxu0
        %3434 = vmatprep.subr.bf16.mxu0 %v2056
        %3435 = vmatpush1.bf16.msra.mxu0 %v2055
        %3436 = vmatprep.subr.bf16.mxu0 %v2060
        %3437 = vmatpush1.bf16.msra.mxu0 %v2059
        %3438 = vmatprep.subr.bf16.mxu0 %v2064
        %3439 = vmatpush1.bf16.msra.mxu0 %v2063
        %3440 = vmatprep.subr.bf16.mxu0 %v2068
        %3441 = vmatpush1.bf16.msra.mxu0 %v2067
        %3442 = vmatprep.subr.bf16.mxu0 %v2072
        %3443 = vmatpush1.bf16.msra.mxu0 %v2071
        %3444 = vmatprep.subr.bf16.mxu0 %v2076
        %3445 = vmatpush1.bf16.msra.mxu0 %v2075
        %3446 = vmatprep.subr.bf16.mxu0 %v2080
        %3447 = vmatpush1.bf16.msra.mxu0 %v2079
        %3448 = vmatprep.subr.bf16.mxu0 %v2084
        %3449 = vmatpush1.bf16.msra.mxu0 %v2083
        %3450 = vmatprep.subr.bf16.mxu0 %v2088
        %3451 = vmatpush1.bf16.msra.mxu0 %v2087
        %3452 = vmatprep.subr.bf16.mxu0 %v2092
        %3453 = vmatpush1.bf16.msra.mxu0 %v2091
        %3454 = vmatprep.subr.bf16.mxu0 %v2096
        %3455 = vmatpush1.bf16.msra.mxu0 %v2095
        %3456 = vmatprep.subr.bf16.mxu0 %v2100
        %3457 = vmatpush1.bf16.msra.mxu0 %v2099
        %3458 = vmatprep.subr.bf16.mxu0 %v2104
        %3459 = vmatpush1.bf16.msra.mxu0 %v2103
        %3460 = vmatprep.subr.bf16.mxu0 %v2108
        %3461 = vmatpush1.bf16.msra.mxu0 %v2107
        %3462 = vmatprep.subr.bf16.mxu0 %v2112
        %3463 = vmatpush1.bf16.msra.mxu0 %v2111
        %3464 = vmatprep.subr.bf16.mxu0 %v2116
        %3465 = vmatpush1.bf16.msra.mxu0 %v2115
        %3466 = vmatprep.mubr.bf16.mxu0 %v704
        %3467 = vmatmul.mubr.bf16.gmra.mrb[0].mxu0 %v703
        %v3468 = vpop.f32.mrb[0].mxu0
        %v3469 = vadd.f32 %v3428, %v3468
        %v3470 = vpop.f32.mrb[0].mxu0
        %v3471 = vadd.f32 %v3430, %v3470
        %v3472 = vpop.f32.mrb[0].mxu0
        %v3473 = vpop.f32.mrb[0].mxu0
        %3474 = vdwg.mxu0
        %3475 = vmatprep.subr.bf16.mxu0 %v2120
        %3476 = vmatpush1.bf16.msra.mxu0 %v2119
        %3477 = vmatprep.subr.bf16.mxu0 %v2124
        %3478 = vmatpush1.bf16.msra.mxu0 %v2123
        %3479 = vmatprep.subr.bf16.mxu0 %v2128
        %3480 = vmatpush1.bf16.msra.mxu0 %v2127
        %3481 = vmatprep.subr.bf16.mxu0 %v2132
        %3482 = vmatpush1.bf16.msra.mxu0 %v2131
        %3483 = vmatprep.subr.bf16.mxu0 %v2136
        %3484 = vmatpush1.bf16.msra.mxu0 %v2135
        %3485 = vmatprep.subr.bf16.mxu0 %v2140
        %3486 = vmatpush1.bf16.msra.mxu0 %v2139
        %3487 = vmatprep.subr.bf16.mxu0 %v2144
        %3488 = vmatpush1.bf16.msra.mxu0 %v2143
        %3489 = vmatprep.subr.bf16.mxu0 %v2148
        %3490 = vmatpush1.bf16.msra.mxu0 %v2147
        %3491 = vmatprep.subr.bf16.mxu0 %v2152
        %3492 = vmatpush1.bf16.msra.mxu0 %v2151
        %3493 = vmatprep.subr.bf16.mxu0 %v2156
        %3494 = vmatpush1.bf16.msra.mxu0 %v2155
        %3495 = vmatprep.subr.bf16.mxu0 %v2160
        %3496 = vmatpush1.bf16.msra.mxu0 %v2159
        %3497 = vmatprep.subr.bf16.mxu0 %v2164
        %3498 = vmatpush1.bf16.msra.mxu0 %v2163
        %3499 = vmatprep.subr.bf16.mxu0 %v2168
        %3500 = vmatpush1.bf16.msra.mxu0 %v2167
        %3501 = vmatprep.subr.bf16.mxu0 %v2172
        %3502 = vmatpush1.bf16.msra.mxu0 %v2171
        %3503 = vmatprep.subr.bf16.mxu0 %v2176
        %3504 = vmatpush1.bf16.msra.mxu0 %v2175
        %3505 = vmatprep.subr.bf16.mxu0 %v2180
        %3506 = vmatpush1.bf16.msra.mxu0 %v2179
        %3507 = vmatprep.mubr.bf16.mxu0 %v706
        %3508 = vmatmul.mubr.bf16.gmra.mrb[0].mxu0 %v705
        %v3509 = vpop.f32.mrb[0].mxu0
        %v3510 = vadd.f32 %v3469, %v3509
        %v3511 = vpop.f32.mrb[0].mxu0
        %v3512 = vadd.f32 %v3471, %v3511
        %v3513 = vpop.f32.mrb[0].mxu0
        %v3514 = vpop.f32.mrb[0].mxu0
        %3515 = vdwg.mxu0
        %3516 = vmatprep.subr.bf16.mxu0 %v2184
        %3517 = vmatpush1.bf16.msra.mxu0 %v2183
        %3518 = vmatprep.subr.bf16.mxu0 %v2188
        %3519 = vmatpush1.bf16.msra.mxu0 %v2187
        %3520 = vmatprep.subr.bf16.mxu0 %v2192
        %3521 = vmatpush1.bf16.msra.mxu0 %v2191
        %3522 = vmatprep.subr.bf16.mxu0 %v2196
        %3523 = vmatpush1.bf16.msra.mxu0 %v2195
        %3524 = vmatprep.subr.bf16.mxu0 %v2200
        %3525 = vmatpush1.bf16.msra.mxu0 %v2199
        %3526 = vmatprep.subr.bf16.mxu0 %v2204
        %3527 = vmatpush1.bf16.msra.mxu0 %v2203
        %3528 = vmatprep.subr.bf16.mxu0 %v2208
        %3529 = vmatpush1.bf16.msra.mxu0 %v2207
        %3530 = vmatprep.subr.bf16.mxu0 %v2212
        %3531 = vmatpush1.bf16.msra.mxu0 %v2211
        %3532 = vmatprep.subr.bf16.mxu0 %v2216
        %3533 = vmatpush1.bf16.msra.mxu0 %v2215
        %3534 = vmatprep.subr.bf16.mxu0 %v2220
        %3535 = vmatpush1.bf16.msra.mxu0 %v2219
        %3536 = vmatprep.subr.bf16.mxu0 %v2224
        %3537 = vmatpush1.bf16.msra.mxu0 %v2223
        %3538 = vmatprep.subr.bf16.mxu0 %v2228
        %3539 = vmatpush1.bf16.msra.mxu0 %v2227
        %3540 = vmatprep.subr.bf16.mxu0 %v2232
        %3541 = vmatpush1.bf16.msra.mxu0 %v2231
        %3542 = vmatprep.subr.bf16.mxu0 %v2236
        %3543 = vmatpush1.bf16.msra.mxu0 %v2235
        %3544 = vmatprep.subr.bf16.mxu0 %v2240
        %3545 = vmatpush1.bf16.msra.mxu0 %v2239
        %3546 = vmatprep.subr.bf16.mxu0 %v2244
        %3547 = vmatpush1.bf16.msra.mxu0 %v2243
        %3548 = vmatprep.mubr.bf16.mxu0 %v708
        %3549 = vmatmul.mubr.bf16.gmra.mrb[0].mxu0 %v707
        %v3550 = vpop.f32.mrb[0].mxu0
        %v3551 = vadd.f32 %v3510, %v3550
        %v3552 = vpop.f32.mrb[0].mxu0
        %v3553 = vadd.f32 %v3512, %v3552
        %v3554 = vpop.f32.mrb[0].mxu0
        %v3555 = vpop.f32.mrb[0].mxu0
        %3556 = vdwg.mxu0
        %v3557 = vld [vmem:[%s533] sm:$0xf]
        %v3559 = vlaneseq
        %v3560 = vshrl.u32 %v3559, 7
        %v3561 = vsub.s32 0, %v3560
        %v3562 = vrot.slane %v3557, %v3561
        %v3563 = vlaneseq
        %v3564 = vshrl.u32 %v3563, 7
        %v3565 = vsub.s32 1, %v3564
        %v3566 = vrot.slane %v3557, %v3565
        %v3567 = vlaneseq
        %v3568 = vshrl.u32 %v3567, 7
        %v3569 = vsub.s32 2, %v3568
        %v3570 = vrot.slane %v3557, %v3569
        %v3571 = vlaneseq
        %v3572 = vshrl.u32 %v3571, 7
        %v3573 = vsub.s32 3, %v3572
        %v3574 = vrot.slane %v3557, %v3573
        %v3579 = vmul.f32 %v2895, %v3562
        %v3580 = vmul.f32 %v2897, %v3566
        %v3581 = vmul.f32 %v3551, %v3570
        %v3582 = vmul.f32 %v3553, %v3574
        %v3583 = vld [vmem:[%s542] sm:$0xf]
        %v3584 = vld [vmem:[%s551] sm:$0xf]
        %v3585 = vrot.slane %v3579, 4
        %v3586 = vadd.f32 %v3579, %v3585
        %v3587 = vrot.slane %v3586, 2
        %v3588 = vadd.f32 %v3586, %v3587
        %v3589 = vrot.slane %v3588, 1
        %v3590 = vadd.f32 %v3588, %v3589
        %v3591 = vrot.slane %v3580, 4
        %v3592 = vadd.f32 %v3580, %v3591
        %v3593 = vrot.slane %v3592, 2
        %v3594 = vadd.f32 %v3592, %v3593
        %v3595 = vrot.slane %v3594, 1
        %v3596 = vadd.f32 %v3594, %v3595
        %v3597 = vrot.slane %v3581, 4
        %v3598 = vadd.f32 %v3581, %v3597
        %v3599 = vrot.slane %v3598, 2
        %v3600 = vadd.f32 %v3598, %v3599
        %v3601 = vrot.slane %v3600, 1
        %v3602 = vadd.f32 %v3600, %v3601
        %v3603 = vrot.slane %v3582, 4
        %v3604 = vadd.f32 %v3582, %v3603
        %v3605 = vrot.slane %v3604, 2
        %v3606 = vadd.f32 %v3604, %v3605
        %v3607 = vrot.slane %v3606, 1
        %v3608 = vadd.f32 %v3606, %v3607
        %v3609 = vrcp.pop 8.0
        %v3610 = vmul.f32 %v3590, %v3609
        %v3611 = vmul.f32 %v3596, %v3609
        %v3612 = vmul.f32 %v3602, %v3609
        %v3613 = vmul.f32 %v3608, %v3609
        %v3614 = vsub.f32 %v3579, %v3610
        %v3615 = vsub.f32 %v3580, %v3611
        %v3616 = vsub.f32 %v3581, %v3612
        %v3617 = vsub.f32 %v3582, %v3613
        %v3618 = vmul.f32 %v3614, %v3614
        %v3619 = vmul.f32 %v3615, %v3615
        %v3620 = vmul.f32 %v3616, %v3616
        %v3621 = vmul.f32 %v3617, %v3617
        %v3622 = vrot.slane %v3618, 4
        %v3623 = vadd.f32 %v3618, %v3622
        %v3624 = vrot.slane %v3623, 2
        %v3625 = vadd.f32 %v3623, %v3624
        %v3626 = vrot.slane %v3625, 1
        %v3627 = vadd.f32 %v3625, %v3626
        %v3628 = vrot.slane %v3619, 4
        %v3629 = vadd.f32 %v3619, %v3628
        %v3630 = vrot.slane %v3629, 2
        %v3631 = vadd.f32 %v3629, %v3630
        %v3632 = vrot.slane %v3631, 1
        %v3633 = vadd.f32 %v3631, %v3632
        %v3634 = vrot.slane %v3620, 4
        %v3635 = vadd.f32 %v3620, %v3634
        %v3636 = vrot.slane %v3635, 2
        %v3637 = vadd.f32 %v3635, %v3636
        %v3638 = vrot.slane %v3637, 1
        %v3639 = vadd.f32 %v3637, %v3638
        %v3640 = vrot.slane %v3621, 4
        %v3641 = vadd.f32 %v3621, %v3640
        %v3642 = vrot.slane %v3641, 2
        %v3643 = vadd.f32 %v3641, %v3642
        %v3644 = vrot.slane %v3643, 1
        %v3645 = vadd.f32 %v3643, %v3644
        %v3646 = vmul.f32 %v3627, %v3609
        %v3647 = vmul.f32 %v3633, %v3609
        %v3648 = vmul.f32 %v3639, %v3609
        %v3649 = vmul.f32 %v3645, %v3609
        %v3650 = vadd.f32 %v3646, 1e-05
        %v3651 = vadd.f32 %v3647, 1e-05
        %v3652 = vadd.f32 %v3648, 1e-05
        %v3653 = vadd.f32 %v3649, 1e-05
        %v3654 = vrsqrt.pop %v3650
        %v3655 = vrsqrt.pop %v3651
        %v3656 = vrsqrt.pop %v3652
        %v3657 = vrsqrt.pop %v3653
        %v3658 = vmul.f32 %v3614, %v3654
        %v3659 = vmul.f32 %v3615, %v3655
        %v3660 = vmul.f32 %v3616, %v3656
        %v3661 = vmul.f32 %v3617, %v3657
        %v3663 = vlaneseq
        %v3664 = vshrl.u32 %v3663, 7
        %v3665 = vsub.s32 0, %v3664
        %v3666 = vrot.slane %v3583, %v3665
        %v3667 = vlaneseq
        %v3668 = vshrl.u32 %v3667, 7
        %v3669 = vsub.s32 1, %v3668
        %v3670 = vrot.slane %v3583, %v3669
        %v3671 = vlaneseq
        %v3672 = vshrl.u32 %v3671, 7
        %v3673 = vsub.s32 2, %v3672
        %v3674 = vrot.slane %v3583, %v3673
        %v3675 = vlaneseq
        %v3676 = vshrl.u32 %v3675, 7
        %v3677 = vsub.s32 3, %v3676
        %v3678 = vrot.slane %v3583, %v3677
        %v3683 = vmul.f32 %v3658, %v3666
        %v3684 = vmul.f32 %v3659, %v3670
        %v3685 = vmul.f32 %v3660, %v3674
        %v3686 = vmul.f32 %v3661, %v3678
        %v3688 = vlaneseq
        %v3689 = vshrl.u32 %v3688, 7
        %v3690 = vsub.s32 0, %v3689
        %v3691 = vrot.slane %v3584, %v3690
        %v3692 = vlaneseq
        %v3693 = vshrl.u32 %v3692, 7
        %v3694 = vsub.s32 1, %v3693
        %v3695 = vrot.slane %v3584, %v3694
        %v3696 = vlaneseq
        %v3697 = vshrl.u32 %v3696, 7
        %v3698 = vsub.s32 2, %v3697
        %v3699 = vrot.slane %v3584, %v3698
        %v3700 = vlaneseq
        %v3701 = vshrl.u32 %v3700, 7
        %v3702 = vsub.s32 3, %v3701
        %v3703 = vrot.slane %v3584, %v3702
        %v3708 = vadd.f32 %v3683, %v3691
        %v3709 = vadd.f32 %v3684, %v3695
        %v3710 = vadd.f32 %v3685, %v3699
        %v3711 = vadd.f32 %v3686, %v3703
        %v3712 = vmax.f32 %v3708, 0.0
        %v3713 = vmax.f32 %v3709, 0.0
        %v3714 = vmax.f32 %v3710, 0.0
        %v3715 = vmax.f32 %v3711, 0.0
        %v3716 = vld [vmem:[#allocation2] sm:$0xff]
        %v3717 = vld [vmem:[#allocation2 + $0x8] sm:$0xff]
        %v3718 = vld [vmem:[#allocation2 + $0x10] sm:$0xff]
        %v3719 = vld [vmem:[#allocation2 + $0x18] sm:$0xff]
        %v3720 = vpack.c.bf16 %v3712, %v3712
        %v3721 = vpack.c.bf16 %v3713, %v3713
        %v3722 = vpack.c.bf16 %v3714, %v3714
        %v3723 = vpack.c.bf16 %v3715, %v3715
        %v3724 = vld [vmem:[%s560] sm:$0xff]
        %v3725 = vld [vmem:[%s560 + $0x8] sm:$0xff]
        %v3726 = vld [vmem:[%s560 + $0x10] sm:$0xff]
        %v3727 = vld [vmem:[%s560 + $0x18] sm:$0xff]
        %v3728 = vld [vmem:[%s560 + $0x20] sm:$0xff]
        %v3729 = vld [vmem:[%s560 + $0x28] sm:$0xff]
        %v3730 = vld [vmem:[%s560 + $0x30] sm:$0xff]
        %v3731 = vld [vmem:[%s560 + $0x38] sm:$0xff]
        %v3732 = vld [vmem:[%s560 + $0x40] sm:$0xff]
        %v3733 = vld [vmem:[%s560 + $0x48] sm:$0xff]
        %v3734 = vld [vmem:[%s560 + $0x50] sm:$0xff]
        %v3735 = vld [vmem:[%s560 + $0x58] sm:$0xff]
        %v3736 = vld [vmem:[%s560 + $0x60] sm:$0xff]
        %v3737 = vld [vmem:[%s560 + $0x68] sm:$0xff]
        %v3738 = vld [vmem:[%s560 + $0x70] sm:$0xff]
        %v3739 = vld [vmem:[%s560 + $0x78] sm:$0xff]
        %v3740 = vld [vmem:[%s560 + $0x80] sm:$0xff]
        %v3741 = vld [vmem:[%s560 + $0x88] sm:$0xff]
        %v3742 = vld [vmem:[%s560 + $0x90] sm:$0xff]
        %v3743 = vld [vmem:[%s560 + $0x98] sm:$0xff]
        %v3744 = vld [vmem:[%s560 + $0xa0] sm:$0xff]
        %v3745 = vld [vmem:[%s560 + $0xa8] sm:$0xff]
        %v3746 = vld [vmem:[%s560 + $0xb0] sm:$0xff]
        %v3747 = vld [vmem:[%s560 + $0xb8] sm:$0xff]
        %v3748 = vld [vmem:[%s560 + $0xc0] sm:$0xff]
        %v3749 = vld [vmem:[%s560 + $0xc8] sm:$0xff]
        %v3750 = vld [vmem:[%s560 + $0xd0] sm:$0xff]
        %v3751 = vld [vmem:[%s560 + $0xd8] sm:$0xff]
        %v3752 = vld [vmem:[%s560 + $0xe0] sm:$0xff]
        %v3753 = vld [vmem:[%s560 + $0xe8] sm:$0xff]
        %v3754 = vld [vmem:[%s560 + $0xf0] sm:$0xff]
        %v3755 = vld [vmem:[%s560 + $0xf8] sm:$0xff]
        %v3756 = vld [vmem:[%s560 + $0x100] sm:$0xff]
        %v3757 = vld [vmem:[%s560 + $0x108] sm:$0xff]
        %v3758 = vld [vmem:[%s560 + $0x110] sm:$0xff]
        %v3759 = vld [vmem:[%s560 + $0x118] sm:$0xff]
        %v3760 = vld [vmem:[%s560 + $0x120] sm:$0xff]
        %v3761 = vld [vmem:[%s560 + $0x128] sm:$0xff]
        %v3762 = vld [vmem:[%s560 + $0x130] sm:$0xff]
        %v3763 = vld [vmem:[%s560 + $0x138] sm:$0xff]
        %v3764 = vld [vmem:[%s560 + $0x140] sm:$0xff]
        %v3765 = vld [vmem:[%s560 + $0x148] sm:$0xff]
        %v3766 = vld [vmem:[%s560 + $0x150] sm:$0xff]
        %v3767 = vld [vmem:[%s560 + $0x158] sm:$0xff]
        %v3768 = vld [vmem:[%s560 + $0x160] sm:$0xff]
        %v3769 = vld [vmem:[%s560 + $0x168] sm:$0xff]
        %v3770 = vld [vmem:[%s560 + $0x170] sm:$0xff]
        %v3771 = vld [vmem:[%s560 + $0x178] sm:$0xff]
        %v3772 = vld [vmem:[%s560 + $0x180] sm:$0xff]
        %v3773 = vld [vmem:[%s560 + $0x188] sm:$0xff]
        %v3774 = vld [vmem:[%s560 + $0x190] sm:$0xff]
        %v3775 = vld [vmem:[%s560 + $0x198] sm:$0xff]
        %v3776 = vld [vmem:[%s560 + $0x1a0] sm:$0xff]
        %v3777 = vld [vmem:[%s560 + $0x1a8] sm:$0xff]
        %v3778 = vld [vmem:[%s560 + $0x1b0] sm:$0xff]
        %v3779 = vld [vmem:[%s560 + $0x1b8] sm:$0xff]
        %v3780 = vld [vmem:[%s560 + $0x1c0] sm:$0xff]
        %v3781 = vld [vmem:[%s560 + $0x1c8] sm:$0xff]
        %v3782 = vld [vmem:[%s560 + $0x1d0] sm:$0xff]
        %v3783 = vld [vmem:[%s560 + $0x1d8] sm:$0xff]
        %v3784 = vld [vmem:[%s560 + $0x1e0] sm:$0xff]
        %v3785 = vld [vmem:[%s560 + $0x1e8] sm:$0xff]
        %v3786 = vld [vmem:[%s560 + $0x1f0] sm:$0xff]
        %v3787 = vld [vmem:[%s560 + $0x1f8] sm:$0xff]
        %v3788 = vunpack.c.l.s8.bf16 %v3724
        %v3789 = vunpack.c.l.s8.bf16 %v3725
        %v3790 = vunpack.c.l.s8.bf16 %v3726
        %v3791 = vunpack.c.l.s8.bf16 %v3727
        %v3792 = vunpack.c.h.s8.bf16 %v3724
        %v3793 = vunpack.c.h.s8.bf16 %v3725
        %v3794 = vunpack.c.h.s8.bf16 %v3726
        %v3795 = vunpack.c.h.s8.bf16 %v3727
        %v3796 = vunpack.c.l.s8.bf16 %v3728
        %v3797 = vunpack.c.l.s8.bf16 %v3729
        %v3798 = vunpack.c.l.s8.bf16 %v3730
        %v3799 = vunpack.c.l.s8.bf16 %v3731
        %v3800 = vunpack.c.h.s8.bf16 %v3728
        %v3801 = vunpack.c.h.s8.bf16 %v3729
        %v3802 = vunpack.c.h.s8.bf16 %v3730
        %v3803 = vunpack.c.h.s8.bf16 %v3731
        %v3804 = vunpack.c.l.s8.bf16 %v3732
        %v3805 = vunpack.c.l.s8.bf16 %v3733
        %v3806 = vunpack.c.l.s8.bf16 %v3734
        %v3807 = vunpack.c.l.s8.bf16 %v3735
        %v3808 = vunpack.c.h.s8.bf16 %v3732
        %v3809 = vunpack.c.h.s8.bf16 %v3733
        %v3810 = vunpack.c.h.s8.bf16 %v3734
        %v3811 = vunpack.c.h.s8.bf16 %v3735
        %v3812 = vunpack.c.l.s8.bf16 %v3736
        %v3813 = vunpack.c.l.s8.bf16 %v3737
        %v3814 = vunpack.c.l.s8.bf16 %v3738
        %v3815 = vunpack.c.l.s8.bf16 %v3739
        %v3816 = vunpack.c.h.s8.bf16 %v3736
        %v3817 = vunpack.c.h.s8.bf16 %v3737
        %v3818 = vunpack.c.h.s8.bf16 %v3738
        %v3819 = vunpack.c.h.s8.bf16 %v3739
        %v3820 = vunpack.c.l.s8.bf16 %v3740
        %v3821 = vunpack.c.l.s8.bf16 %v3741
        %v3822 = vunpack.c.l.s8.bf16 %v3742
        %v3823 = vunpack.c.l.s8.bf16 %v3743
        %v3824 = vunpack.c.h.s8.bf16 %v3740
        %v3825 = vunpack.c.h.s8.bf16 %v3741
        %v3826 = vunpack.c.h.s8.bf16 %v3742
        %v3827 = vunpack.c.h.s8.bf16 %v3743
        %v3828 = vunpack.c.l.s8.bf16 %v3744
        %v3829 = vunpack.c.l.s8.bf16 %v3745
        %v3830 = vunpack.c.l.s8.bf16 %v3746
        %v3831 = vunpack.c.l.s8.bf16 %v3747
        %v3832 = vunpack.c.h.s8.bf16 %v3744
        %v3833 = vunpack.c.h.s8.bf16 %v3745
        %v3834 = vunpack.c.h.s8.bf16 %v3746
        %v3835 = vunpack.c.h.s8.bf16 %v3747
        %v3836 = vunpack.c.l.s8.bf16 %v3748
        %v3837 = vunpack.c.l.s8.bf16 %v3749
        %v3838 = vunpack.c.l.s8.bf16 %v3750
        %v3839 = vunpack.c.l.s8.bf16 %v3751
        %v3840 = vunpack.c.h.s8.bf16 %v3748
        %v3841 = vunpack.c.h.s8.bf16 %v3749
        %v3842 = vunpack.c.h.s8.bf16 %v3750
        %v3843 = vunpack.c.h.s8.bf16 %v3751
        %v3844 = vunpack.c.l.s8.bf16 %v3752
        %v3845 = vunpack.c.l.s8.bf16 %v3753
        %v3846 = vunpack.c.l.s8.bf16 %v3754
        %v3847 = vunpack.c.l.s8.bf16 %v3755
        %v3848 = vunpack.c.h.s8.bf16 %v3752
        %v3849 = vunpack.c.h.s8.bf16 %v3753
        %v3850 = vunpack.c.h.s8.bf16 %v3754
        %v3851 = vunpack.c.h.s8.bf16 %v3755
        %v3852 = vunpack.c.l.s8.bf16 %v3756
        %v3853 = vunpack.c.l.s8.bf16 %v3757
        %v3854 = vunpack.c.l.s8.bf16 %v3758
        %v3855 = vunpack.c.l.s8.bf16 %v3759
        %v3856 = vunpack.c.h.s8.bf16 %v3756
        %v3857 = vunpack.c.h.s8.bf16 %v3757
        %v3858 = vunpack.c.h.s8.bf16 %v3758
        %v3859 = vunpack.c.h.s8.bf16 %v3759
        %v3860 = vunpack.c.l.s8.bf16 %v3760
        %v3861 = vunpack.c.l.s8.bf16 %v3761
        %v3862 = vunpack.c.l.s8.bf16 %v3762
        %v3863 = vunpack.c.l.s8.bf16 %v3763
        %v3864 = vunpack.c.h.s8.bf16 %v3760
        %v3865 = vunpack.c.h.s8.bf16 %v3761
        %v3866 = vunpack.c.h.s8.bf16 %v3762
        %v3867 = vunpack.c.h.s8.bf16 %v3763
        %v3868 = vunpack.c.l.s8.bf16 %v3764
        %v3869 = vunpack.c.l.s8.bf16 %v3765
        %v3870 = vunpack.c.l.s8.bf16 %v3766
        %v3871 = vunpack.c.l.s8.bf16 %v3767
        %v3872 = vunpack.c.h.s8.bf16 %v3764
        %v3873 = vunpack.c.h.s8.bf16 %v3765
        %v3874 = vunpack.c.h.s8.bf16 %v3766
        %v3875 = vunpack.c.h.s8.bf16 %v3767
        %v3876 = vunpack.c.l.s8.bf16 %v3768
        %v3877 = vunpack.c.l.s8.bf16 %v3769
        %v3878 = vunpack.c.l.s8.bf16 %v3770
        %v3879 = vunpack.c.l.s8.bf16 %v3771
        %v3880 = vunpack.c.h.s8.bf16 %v3768
        %v3881 = vunpack.c.h.s8.bf16 %v3769
        %v3882 = vunpack.c.h.s8.bf16 %v3770
        %v3883 = vunpack.c.h.s8.bf16 %v3771
        %v3884 = vunpack.c.l.s8.bf16 %v3772
        %v3885 = vunpack.c.l.s8.bf16 %v3773
        %v3886 = vunpack.c.l.s8.bf16 %v3774
        %v3887 = vunpack.c.l.s8.bf16 %v3775
        %v3888 = vunpack.c.h.s8.bf16 %v3772
        %v3889 = vunpack.c.h.s8.bf16 %v3773
        %v3890 = vunpack.c.h.s8.bf16 %v3774
        %v3891 = vunpack.c.h.s8.bf16 %v3775
        %v3892 = vunpack.c.l.s8.bf16 %v3776
        %v3893 = vunpack.c.l.s8.bf16 %v3777
        %v3894 = vunpack.c.l.s8.bf16 %v3778
        %v3895 = vunpack.c.l.s8.bf16 %v3779
        %v3896 = vunpack.c.h.s8.bf16 %v3776
        %v3897 = vunpack.c.h.s8.bf16 %v3777
        %v3898 = vunpack.c.h.s8.bf16 %v3778
        %v3899 = vunpack.c.h.s8.bf16 %v3779
        %v3900 = vunpack.c.l.s8.bf16 %v3780
        %v3901 = vunpack.c.l.s8.bf16 %v3781
        %v3902 = vunpack.c.l.s8.bf16 %v3782
        %v3903 = vunpack.c.l.s8.bf16 %v3783
        %v3904 = vunpack.c.h.s8.bf16 %v3780
        %v3905 = vunpack.c.h.s8.bf16 %v3781
        %v3906 = vunpack.c.h.s8.bf16 %v3782
        %v3907 = vunpack.c.h.s8.bf16 %v3783
        %v3908 = vunpack.c.l.s8.bf16 %v3784
        %v3909 = vunpack.c.l.s8.bf16 %v3785
        %v3910 = vunpack.c.l.s8.bf16 %v3786
        %v3911 = vunpack.c.l.s8.bf16 %v3787
        %v3912 = vunpack.c.h.s8.bf16 %v3784
        %v3913 = vunpack.c.h.s8.bf16 %v3785
        %v3914 = vunpack.c.h.s8.bf16 %v3786
        %v3915 = vunpack.c.h.s8.bf16 %v3787
        %3916 = vmatprep.subr.bf16.mxu0 %v3789
        %3917 = vmatpush1.bf16.msra.mxu0 %v3788
        %3918 = vmatprep.subr.bf16.mxu0 %v3793
        %3919 = vmatpush1.bf16.msra.mxu0 %v3792
        %3920 = vmatprep.subr.bf16.mxu0 %v3797
        %3921 = vmatpush1.bf16.msra.mxu0 %v3796
        %3922 = vmatprep.subr.bf16.mxu0 %v3801
        %3923 = vmatpush1.bf16.msra.mxu0 %v3800
        %3924 = vmatprep.subr.bf16.mxu0 %v3805
        %3925 = vmatpush1.bf16.msra.mxu0 %v3804
        %3926 = vmatprep.subr.bf16.mxu0 %v3809
        %3927 = vmatpush1.bf16.msra.mxu0 %v3808
        %3928 = vmatprep.subr.bf16.mxu0 %v3813
        %3929 = vmatpush1.bf16.msra.mxu0 %v3812
        %3930 = vmatprep.subr.bf16.mxu0 %v3817
        %3931 = vmatpush1.bf16.msra.mxu0 %v3816
        %3932 = vmatprep.subr.bf16.mxu0 %v3821
        %3933 = vmatpush1.bf16.msra.mxu0 %v3820
        %3934 = vmatprep.subr.bf16.mxu0 %v3825
        %3935 = vmatpush1.bf16.msra.mxu0 %v3824
        %3936 = vmatprep.subr.bf16.mxu0 %v3829
        %3937 = vmatpush1.bf16.msra.mxu0 %v3828
        %3938 = vmatprep.subr.bf16.mxu0 %v3833
        %3939 = vmatpush1.bf16.msra.mxu0 %v3832
        %3940 = vmatprep.subr.bf16.mxu0 %v3837
        %3941 = vmatpush1.bf16.msra.mxu0 %v3836
        %3942 = vmatprep.subr.bf16.mxu0 %v3841
        %3943 = vmatpush1.bf16.msra.mxu0 %v3840
        %3944 = vmatprep.subr.bf16.mxu0 %v3845
        %3945 = vmatpush1.bf16.msra.mxu0 %v3844
        %3946 = vmatprep.subr.bf16.mxu0 %v3849
        %3947 = vmatpush1.bf16.msra.mxu0 %v3848
        %3948 = vmatprep.mubr.bf16.mxu0 %v3721
        %3949 = vmatmul.mubr.bf16.gmra.mrb[0].mxu0 %v3720
        %v3950 = vpop.f32.mrb[0].mxu0
        %v3951 = vadd.f32 0.0, %v3950
        %v3952 = vpop.f32.mrb[0].mxu0
        %v3953 = vadd.f32 0.0, %v3952
        %v3954 = vpop.f32.mrb[0].mxu0
        %v3955 = vpop.f32.mrb[0].mxu0
        %3956 = vdwg.mxu0
        %3957 = vmatprep.subr.bf16.mxu0 %v3853
        %3958 = vmatpush1.bf16.msra.mxu0 %v3852
        %3959 = vmatprep.subr.bf16.mxu0 %v3857
        %3960 = vmatpush1.bf16.msra.mxu0 %v3856
        %3961 = vmatprep.subr.bf16.mxu0 %v3861
        %3962 = vmatpush1.bf16.msra.mxu0 %v3860
        %3963 = vmatprep.subr.bf16.mxu0 %v3865
        %3964 = vmatpush1.bf16.msra.mxu0 %v3864
        %3965 = vmatprep.subr.bf16.mxu0 %v3869
        %3966 = vmatpush1.bf16.msra.mxu0 %v3868
        %3967 = vmatprep.subr.bf16.mxu0 %v3873
        %3968 = vmatpush1.bf16.msra.mxu0 %v3872
        %3969 = vmatprep.subr.bf16.mxu0 %v3877
        %3970 = vmatpush1.bf16.msra.mxu0 %v3876
        %3971 = vmatprep.subr.bf16.mxu0 %v3881
        %3972 = vmatpush1.bf16.msra.mxu0 %v3880
        %3973 = vmatprep.subr.bf16.mxu0 %v3885
        %3974 = vmatpush1.bf16.msra.mxu0 %v3884
        %3975 = vmatprep.subr.bf16.mxu0 %v3889
        %3976 = vmatpush1.bf16.msra.mxu0 %v3888
        %3977 = vmatprep.subr.bf16.mxu0 %v3893
        %3978 = vmatpush1.bf16.msra.mxu0 %v3892
        %3979 = vmatprep.subr.bf16.mxu0 %v3897
        %3980 = vmatpush1.bf16.msra.mxu0 %v3896
        %3981 = vmatprep.subr.bf16.mxu0 %v3901
        %3982 = vmatpush1.bf16.msra.mxu0 %v3900
        %3983 = vmatprep.subr.bf16.mxu0 %v3905
        %3984 = vmatpush1.bf16.msra.mxu0 %v3904
        %3985 = vmatprep.subr.bf16.mxu0 %v3909
        %3986 = vmatpush1.bf16.msra.mxu0 %v3908
        %3987 = vmatprep.subr.bf16.mxu0 %v3913
        %3988 = vmatpush1.bf16.msra.mxu0 %v3912
        %3989 = vmatprep.mubr.bf16.mxu0 %v3723
        %3990 = vmatmul.mubr.bf16.gmra.mrb[0].mxu0 %v3722
        %v3991 = vpop.f32.mrb[0].mxu0
        %v3992 = vadd.f32 %v3951, %v3991
        %v3993 = vpop.f32.mrb[0].mxu0
        %v3994 = vadd.f32 %v3953, %v3993
        %v3995 = vpop.f32.mrb[0].mxu0
        %v3996 = vpop.f32.mrb[0].mxu0
        %3997 = vdwg.mxu0
        %3998 = vmatprep.subr.bf16.mxu0 %v3791
        %3999 = vmatpush1.bf16.msra.mxu0 %v3790
        %4000 = vmatprep.subr.bf16.mxu0 %v3795
        %4001 = vmatpush1.bf16.msra.mxu0 %v3794
        %4002 = vmatprep.subr.bf16.mxu0 %v3799
        %4003 = vmatpush1.bf16.msra.mxu0 %v3798
        %4004 = vmatprep.subr.bf16.mxu0 %v3803
        %4005 = vmatpush1.bf16.msra.mxu0 %v3802
        %4006 = vmatprep.subr.bf16.mxu0 %v3807
        %4007 = vmatpush1.bf16.msra.mxu0 %v3806
        %4008 = vmatprep.subr.bf16.mxu0 %v3811
        %4009 = vmatpush1.bf16.msra.mxu0 %v3810
        %4010 = vmatprep.subr.bf16.mxu0 %v3815
        %4011 = vmatpush1.bf16.msra.mxu0 %v3814
        %4012 = vmatprep.subr.bf16.mxu0 %v3819
        %4013 = vmatpush1.bf16.msra.mxu0 %v3818
        %4014 = vmatprep.subr.bf16.mxu0 %v3823
        %4015 = vmatpush1.bf16.msra.mxu0 %v3822
        %4016 = vmatprep.subr.bf16.mxu0 %v3827
        %4017 = vmatpush1.bf16.msra.mxu0 %v3826
        %4018 = vmatprep.subr.bf16.mxu0 %v3831
        %4019 = vmatpush1.bf16.msra.mxu0 %v3830
        %4020 = vmatprep.subr.bf16.mxu0 %v3835
        %4021 = vmatpush1.bf16.msra.mxu0 %v3834
        %4022 = vmatprep.subr.bf16.mxu0 %v3839
        %4023 = vmatpush1.bf16.msra.mxu0 %v3838
        %4024 = vmatprep.subr.bf16.mxu0 %v3843
        %4025 = vmatpush1.bf16.msra.mxu0 %v3842
        %4026 = vmatprep.subr.bf16.mxu0 %v3847
        %4027 = vmatpush1.bf16.msra.mxu0 %v3846
        %4028 = vmatprep.subr.bf16.mxu0 %v3851
        %4029 = vmatpush1.bf16.msra.mxu0 %v3850
        %4030 = vmatprep.mubr.bf16.mxu0 %v3721
        %4031 = vmatmul.mubr.bf16.gmra.mrb[0].mxu0 %v3720
        %v4032 = vpop.f32.mrb[0].mxu0
        %v4033 = vadd.f32 0.0, %v4032
        %v4034 = vpop.f32.mrb[0].mxu0
        %v4035 = vadd.f32 0.0, %v4034
        %v4036 = vpop.f32.mrb[0].mxu0
        %v4037 = vpop.f32.mrb[0].mxu0
        %4038 = vdwg.mxu0
        %4039 = vmatprep.subr.bf16.mxu0 %v3855
        %4040 = vmatpush1.bf16.msra.mxu0 %v3854
        %4041 = vmatprep.subr.bf16.mxu0 %v3859
        %4042 = vmatpush1.bf16.msra.mxu0 %v3858
        %4043 = vmatprep.subr.bf16.mxu0 %v3863
        %4044 = vmatpush1.bf16.msra.mxu0 %v3862
        %4045 = vmatprep.subr.bf16.mxu0 %v3867
        %4046 = vmatpush1.bf16.msra.mxu0 %v3866
        %4047 = vmatprep.subr.bf16.mxu0 %v3871
        %4048 = vmatpush1.bf16.msra.mxu0 %v3870
        %4049 = vmatprep.subr.bf16.mxu0 %v3875
        %4050 = vmatpush1.bf16.msra.mxu0 %v3874
        %4051 = vmatprep.subr.bf16.mxu0 %v3879
        %4052 = vmatpush1.bf16.msra.mxu0 %v3878
        %4053 = vmatprep.subr.bf16.mxu0 %v3883
        %4054 = vmatpush1.bf16.msra.mxu0 %v3882
        %4055 = vmatprep.subr.bf16.mxu0 %v3887
        %4056 = vmatpush1.bf16.msra.mxu0 %v3886
        %4057 = vmatprep.subr.bf16.mxu0 %v3891
        %4058 = vmatpush1.bf16.msra.mxu0 %v3890
        %4059 = vmatprep.subr.bf16.mxu0 %v3895
        %4060 = vmatpush1.bf16.msra.mxu0 %v3894
        %4061 = vmatprep.subr.bf16.mxu0 %v3899
        %4062 = vmatpush1.bf16.msra.mxu0 %v3898
        %4063 = vmatprep.subr.bf16.mxu0 %v3903
        %4064 = vmatpush1.bf16.msra.mxu0 %v3902
        %4065 = vmatprep.subr.bf16.mxu0 %v3907
        %4066 = vmatpush1.bf16.msra.mxu0 %v3906
        %4067 = vmatprep.subr.bf16.mxu0 %v3911
        %4068 = vmatpush1.bf16.msra.mxu0 %v3910
        %4069 = vmatprep.subr.bf16.mxu0 %v3915
        %4070 = vmatpush1.bf16.msra.mxu0 %v3914
        %4071 = vmatprep.mubr.bf16.mxu0 %v3723
        %4072 = vmatmul.mubr.bf16.gmra.mrb[0].mxu0 %v3722
        %v4073 = vpop.f32.mrb[0].mxu0
        %v4074 = vadd.f32 %v4033, %v4073
        %v4075 = vpop.f32.mrb[0].mxu0
        %v4076 = vadd.f32 %v4035, %v4075
        %v4077 = vpop.f32.mrb[0].mxu0
        %v4078 = vpop.f32.mrb[0].mxu0
        %4079 = vdwg.mxu0
        %v4080 = vadd.f32 %v3716, %v3992
        %v4081 = vadd.f32 %v3717, %v3994
        %v4082 = vadd.f32 %v3718, %v4074
        %v4083 = vadd.f32 %v3719, %v4076
        %4084 = vst [vmem:[#allocation2] sm:$0xff] %v4080
        %4085 = vst [vmem:[#allocation2 + $0x8] sm:$0xff] %v4081
        %4086 = vst [vmem:[#allocation2 + $0x10] sm:$0xff] %v4082
        %4087 = vst [vmem:[#allocation2 + $0x18] sm:$0xff] %v4083
        %p4088 = scmp.eq.s32.totalorder %s39, 3
        // Predicated region
        $region109: #{tpu_custom_call.1} parent=63 // pred_check
          %p4089 = pneg %p4088
        $region110: #{tpu_custom_call.1} parent=63 // pred_check_branch
          %4091 = sbr.rel (%p4089) target = $region112
        $region111: #{tpu_custom_call.1} parent=63 // pred_region
          %v4092 = vld [vmem:[#allocation2] sm:$0xff]
          %v4093 = vld [vmem:[#allocation2 + $0x8] sm:$0xff]
          %v4094 = vld [vmem:[#allocation2 + $0x10] sm:$0xff]
          %v4095 = vld [vmem:[#allocation2 + $0x18] sm:$0xff]
          %v4096 = vld [vmem:[#allocation15] sm:$0xf]
          %v4098 = vlaneseq
          %v4099 = vshrl.u32 %v4098, 7
          %v4100 = vsub.s32 0, %v4099
          %v4101 = vrot.slane %v4096, %v4100
          %v4102 = vlaneseq
          %v4103 = vshrl.u32 %v4102, 7
          %v4104 = vsub.s32 1, %v4103
          %v4105 = vrot.slane %v4096, %v4104
          %v4106 = vlaneseq
          %v4107 = vshrl.u32 %v4106, 7
          %v4108 = vsub.s32 2, %v4107
          %v4109 = vrot.slane %v4096, %v4108
          %v4110 = vlaneseq
          %v4111 = vshrl.u32 %v4110, 7
          %v4112 = vsub.s32 3, %v4111
          %v4113 = vrot.slane %v4096, %v4112
          %v4118 = vmul.f32 %v4092, %v4101
          %v4119 = vmul.f32 %v4093, %v4105
          %v4120 = vmul.f32 %v4094, %v4109
          %v4121 = vmul.f32 %v4095, %v4113
          %v4122 = vld [vmem:[#allocation16] sm:$0xf]
          %v4123 = vld [vmem:[#allocation18] sm:$0xf]
          %v4124 = vrot.slane %v4118, 4
          %v4125 = vadd.f32 %v4118, %v4124
          %v4126 = vrot.slane %v4125, 2
          %v4127 = vadd.f32 %v4125, %v4126
          %v4128 = vrot.slane %v4127, 1
          %v4129 = vadd.f32 %v4127, %v4128
          %v4130 = vrot.slane %v4119, 4
          %v4131 = vadd.f32 %v4119, %v4130
          %v4132 = vrot.slane %v4131, 2
          %v4133 = vadd.f32 %v4131, %v4132
          %v4134 = vrot.slane %v4133, 1
          %v4135 = vadd.f32 %v4133, %v4134
          %v4136 = vrot.slane %v4120, 4
          %v4137 = vadd.f32 %v4120, %v4136
          %v4138 = vrot.slane %v4137, 2
          %v4139 = vadd.f32 %v4137, %v4138
          %v4140 = vrot.slane %v4139, 1
          %v4141 = vadd.f32 %v4139, %v4140
          %v4142 = vrot.slane %v4121, 4
          %v4143 = vadd.f32 %v4121, %v4142
          %v4144 = vrot.slane %v4143, 2
          %v4145 = vadd.f32 %v4143, %v4144
          %v4146 = vrot.slane %v4145, 1
          %v4147 = vadd.f32 %v4145, %v4146
          %v4148 = vmul.f32 %v4129, %v3609
          %v4149 = vmul.f32 %v4135, %v3609
          %v4150 = vmul.f32 %v4141, %v3609
          %v4151 = vmul.f32 %v4147, %v3609
          %v4152 = vsub.f32 %v4118, %v4148
          %v4153 = vsub.f32 %v4119, %v4149
          %v4154 = vsub.f32 %v4120, %v4150
          %v4155 = vsub.f32 %v4121, %v4151
          %v4156 = vmul.f32 %v4152, %v4152
          %v4157 = vmul.f32 %v4153, %v4153
          %v4158 = vmul.f32 %v4154, %v4154
          %v4159 = vmul.f32 %v4155, %v4155
          %v4160 = vrot.slane %v4156, 4
          %v4161 = vadd.f32 %v4156, %v4160
          %v4162 = vrot.slane %v4161, 2
          %v4163 = vadd.f32 %v4161, %v4162
          %v4164 = vrot.slane %v4163, 1
          %v4165 = vadd.f32 %v4163, %v4164
          %v4166 = vrot.slane %v4157, 4
          %v4167 = vadd.f32 %v4157, %v4166
          %v4168 = vrot.slane %v4167, 2
          %v4169 = vadd.f32 %v4167, %v4168
          %v4170 = vrot.slane %v4169, 1
          %v4171 = vadd.f32 %v4169, %v4170
          %v4172 = vrot.slane %v4158, 4
          %v4173 = vadd.f32 %v4158, %v4172
          %v4174 = vrot.slane %v4173, 2
          %v4175 = vadd.f32 %v4173, %v4174
          %v4176 = vrot.slane %v4175, 1
          %v4177 = vadd.f32 %v4175, %v4176
          %v4178 = vrot.slane %v4159, 4
          %v4179 = vadd.f32 %v4159, %v4178
          %v4180 = vrot.slane %v4179, 2
          %v4181 = vadd.f32 %v4179, %v4180
          %v4182 = vrot.slane %v4181, 1
          %v4183 = vadd.f32 %v4181, %v4182
          %v4184 = vmul.f32 %v4165, %v3609
          %v4185 = vmul.f32 %v4171, %v3609
          %v4186 = vmul.f32 %v4177, %v3609
          %v4187 = vmul.f32 %v4183, %v3609
          %v4188 = vadd.f32 %v4184, 1e-05
          %v4189 = vadd.f32 %v4185, 1e-05
          %v4190 = vadd.f32 %v4186, 1e-05
          %v4191 = vadd.f32 %v4187, 1e-05
          %v4192 = vrsqrt.pop %v4188
          %v4193 = vrsqrt.pop %v4189
          %v4194 = vrsqrt.pop %v4190
          %v4195 = vrsqrt.pop %v4191
          %v4196 = vmul.f32 %v4152, %v4192
          %v4197 = vmul.f32 %v4153, %v4193
          %v4198 = vmul.f32 %v4154, %v4194
          %v4199 = vmul.f32 %v4155, %v4195
          %v4201 = vlaneseq
          %v4202 = vshrl.u32 %v4201, 7
          %v4203 = vsub.s32 0, %v4202
          %v4204 = vrot.slane %v4122, %v4203
          %v4205 = vlaneseq
          %v4206 = vshrl.u32 %v4205, 7
          %v4207 = vsub.s32 1, %v4206
          %v4208 = vrot.slane %v4122, %v4207
          %v4209 = vlaneseq
          %v4210 = vshrl.u32 %v4209, 7
          %v4211 = vsub.s32 2, %v4210
          %v4212 = vrot.slane %v4122, %v4211
          %v4213 = vlaneseq
          %v4214 = vshrl.u32 %v4213, 7
          %v4215 = vsub.s32 3, %v4214
          %v4216 = vrot.slane %v4122, %v4215
          %v4221 = vmul.f32 %v4196, %v4204
          %v4222 = vmul.f32 %v4197, %v4208
          %v4223 = vmul.f32 %v4198, %v4212
          %v4224 = vmul.f32 %v4199, %v4216
          %v4226 = vlaneseq
          %v4227 = vshrl.u32 %v4226, 7
          %v4228 = vsub.s32 0, %v4227
          %v4229 = vrot.slane %v4123, %v4228
          %v4230 = vlaneseq
          %v4231 = vshrl.u32 %v4230, 7
          %v4232 = vsub.s32 1, %v4231
          %v4233 = vrot.slane %v4123, %v4232
          %v4234 = vlaneseq
          %v4235 = vshrl.u32 %v4234, 7
          %v4236 = vsub.s32 2, %v4235
          %v4237 = vrot.slane %v4123, %v4236
          %v4238 = vlaneseq
          %v4239 = vshrl.u32 %v4238, 7
          %v4240 = vsub.s32 3, %v4239
          %v4241 = vrot.slane %v4123, %v4240
          %v4246 = vadd.f32 %v4221, %v4229
          %v4247 = vadd.f32 %v4222, %v4233
          %v4248 = vadd.f32 %v4223, %v4237
          %v4249 = vadd.f32 %v4224, %v4241
          %v4250 = vmax.f32 %v4246, 0.0
          %v4251 = vmax.f32 %v4247, 0.0
          %v4252 = vmax.f32 %v4248, 0.0
          %v4253 = vmax.f32 %v4249, 0.0
          %4254 = vst [vmem:[#allocation21] sm:$0xff] %v4250
          %4255 = vst [vmem:[#allocation21 + $0x8] sm:$0xff] %v4251
          %4256 = vst [vmem:[#allocation21 + $0x10] sm:$0xff] %v4252
          %4257 = vst [vmem:[#allocation21 + $0x18] sm:$0xff] %v4253
          %v4258 = vld [vmem:[#allocation19] sm:$0xf]
          %v4260 = vlaneseq
          %v4261 = vshrl.u32 %v4260, 7
          %v4262 = vsub.s32 0, %v4261
          %v4263 = vrot.slane %v4258, %v4262
          %v4264 = vlaneseq
          %v4265 = vshrl.u32 %v4264, 7
          %v4266 = vsub.s32 1, %v4265
          %v4267 = vrot.slane %v4258, %v4266
          %v4268 = vlaneseq
          %v4269 = vshrl.u32 %v4268, 7
          %v4270 = vsub.s32 2, %v4269
          %v4271 = vrot.slane %v4258, %v4270
          %v4272 = vlaneseq
          %v4273 = vshrl.u32 %v4272, 7
          %v4274 = vsub.s32 3, %v4273
          %v4275 = vrot.slane %v4258, %v4274
          %v4280 = vmul.f32 %v4250, %v4263
          %v4281 = vmul.f32 %v4251, %v4267
          %v4282 = vmul.f32 %v4252, %v4271
          %v4283 = vmul.f32 %v4253, %v4275
          %v4284 = vadd.f32 %v4280, %v4281
          %v4285 = vadd.f32 %v4284, %v4282
          %v4286 = vadd.f32 %v4285, %v4283
          %4287 = vadd.xlane.f32.xlu0 %v4286
          %v4288 = vpop.xlane.xlu0 %4287
          %v4289 = vld [vmem:[#allocation3] sm:$0x1]
          %v4291 = vlaneseq
          %v4292 = vshrl.u32 %v4291, 7
          %v4293 = vsub.s32 0, %v4292
          %v4294 = vrot.slane %v4289, %v4293
          %v4296 = vadd.f32 %v4288, %v4294
          %vm4297 = vcmask 7168
          %4298 = vst.msk [vmem:[%s11] sm:$0xff] %vm4297, %v4296
        $region112: #{tpu_custom_call.1} parent=63 // pred_fallthru
          _
        // Predicated region
        $region113: #{tpu_custom_call.1} parent=63 // pred_check
          %p4299 = pneg %p308
        $region114: #{tpu_custom_call.1} parent=63 // pred_check_branch
          %4301 = sbr.rel (%p4299) target = $region116
        $region115: #{tpu_custom_call.1} parent=63 // pred_region
          _
        $region116: #{tpu_custom_call.1} parent=63 // pred_fallthru
          _
        // Predicated region
        $region117: #{tpu_custom_call.1} parent=63 // pred_check
          %p4302 = pneg %p329
        $region118: #{tpu_custom_call.1} parent=63 // pred_check_branch
          %4304 = sbr.rel (%p4302) target = $region120
        $region119: #{tpu_custom_call.1} parent=63 // pred_region
          %s4306 = ssub.s32 512, 512
          %4307 = vsyncadd [#allocation6], %s4306
          %s4309 = sshll.u32 [#allocation21], 4
          %s4310 = int_to_ptr.vmem [resolvable:$true] %s4309
          %4312 = dma.vmem_to_hbm [thread:$0]  %s4310, 512, %s12, [#allocation6]
        $region120: #{tpu_custom_call.1} parent=63 // pred_fallthru
          _
        // Predicated region
        $region121: #{tpu_custom_call.1} parent=63 // pred_check
          %p4313 = pneg %p308
        $region122: #{tpu_custom_call.1} parent=63 // pred_check_branch
          %4315 = sbr.rel (%p4313) target = $region124
        $region123: #{tpu_custom_call.1} parent=63 // pred_region
          _
        $region124: #{tpu_custom_call.1} parent=63 // pred_fallthru
          _
        // Predicated region
        $region125: #{tpu_custom_call.1} parent=63 // pred_check
          %p4316 = pneg %p329
        $region126: #{tpu_custom_call.1} parent=63 // pred_check_branch
          %4318 = sbr.rel (%p4316) target = $region128
        $region127: #{tpu_custom_call.1} parent=63 // pred_region
          %4319 = dma.done [#allocation6], 512
        $region128: #{tpu_custom_call.1} parent=63 // pred_fallthru
          _
      $region64: #{tpu_custom_call.1} parent=5 // pred_fallthru
        _
      %p4320 = scmp.le.s32.totalorder 2, %s34
      // Predicated region
      $region129: #{tpu_custom_call.1} parent=5 // pred_check
        %p4321 = pneg %p4320
      $region130: #{tpu_custom_call.1} parent=5 // pred_check_branch
        %4323 = sbr.rel (%p4321) target = $region132
      $region131: #{tpu_custom_call.1} parent=5 // pred_region
        %s4324 = ssub.s32 %s34, 2
      $region132: #{tpu_custom_call.1} parent=5 // pred_fallthru
        _
    $region6: #{tpu_custom_call.1} parent=1 // loop_footer
      %s38 = sadd.s32 1, %s34
    $region7: #{tpu_custom_call.1} parent=1 // loop_footer_branch
      %33 = sbr.rel target = $region3
    $region8: #{tpu_custom_call.1} parent=1 // loop_exit
      _
    %4325 = vsyncpa [#allocation5], 1
    %s4326 = scalar_lea.sflag [#allocation5], 1
    %4327 = vsyncpa %s4326, 1
    %4328 = vsyncpa [#allocation8], 1
    %s4329 = scalar_lea.sflag [#allocation8], 1
    %4330 = vsyncpa %s4329, 1
    %4331 = vsyncpa [#allocation11], 1
    %s4332 = scalar_lea.sflag [#allocation11], 1
    %4333 = vsyncpa %s4332, 1
    %4334 = vsyncpa [#allocation14], 1
    %s4335 = scalar_lea.sflag [#allocation14], 1
    %4336 = vsyncpa %s4335, 1
    %4337 = vsyncpa [#allocation17], 1
    %4338 = vsyncpa [#allocation20], 1
    %4339 = vsyncpa [#allocation6], 1
    %s4340 = scalar_lea.sflag [#allocation6], 1
    %4341 = vsyncpa %s4340, 1

</llo_original>
